<compile_context>
chip_gen: v7x
topology: tpu7x:2x2x1
jax: 0.10.0
libtpu: 0.0.40
codegen_flags: <defaults>
</compile_context>

<pallas_src>
import jax
import jax.numpy as jnp
from jax.experimental import pallas as pl
from jax.experimental.pallas import tpu as pltpu

# ---- model sizes (small, deterministic, consistent with the module) ----
INPUT_DIM = 20      # src vocab size
EMB = 32            # emb_dim
ENC_HID = 32        # enc_hid_dim (per direction)
DEC_HID = 32        # dec_hid_dim
SRC_LEN = 8
BATCH = 2

_G3 = 3 * ENC_HID   # 96  : concatenated r|z|n gate width
_G3P = 128          # lane-padded gate width (one full vreg lane set)


def _full_spec(shape):
    # whole-array block (legal: block dims equal the full array dims)
    return pl.BlockSpec(shape, lambda i: (0,) * len(shape))


# ---------------- fused encoder kernel ----------------

def _gru_step(x, h, w_i, w_h, b_i, b_h):
    """One PyTorch-semantics GRUCell step with 2 fused matmuls.

    w_i: (in_dim, 128), w_h: (H, 128); columns 0:96 hold gates r|z|n
    (PyTorch gate order), columns 96:128 are zero padding.
      r  = sigmoid(x Wir + b_ir + h Whr + b_hr)
      z  = sigmoid(x Wiz + b_iz + h Whz + b_hz)
      n  = tanh  (x Win + b_in + r * (h Whn + b_hn))
      h' = (1 - z) * n + z * h
    """
    H = ENC_HID
    gi = jnp.dot(x, w_i, preferred_element_type=jnp.float32) + b_i
    gh = jnp.dot(h, w_h, preferred_element_type=jnp.float32) + b_h
    r = jax.nn.sigmoid(gi[:, 0:H] + gh[:, 0:H])
    z = jax.nn.sigmoid(gi[:, H:2 * H] + gh[:, H:2 * H])
    n = jnp.tanh(gi[:, 2 * H:3 * H] + r * gh[:, 2 * H:3 * H])
    return (1.0 - z) * n + z * h


def _encoder_kernel(emb_ref, wif_ref, whf_ref, wib_ref, whb_ref, bias_ref,
                    wfc_ref, bfc_ref, out_ref, hid_ref):
    emb = emb_ref[...]                           # (S, B, E)
    S, B, _ = emb.shape
    H = ENC_HID

    wif = wif_ref[...]
    whf = whf_ref[...]
    wib = wib_ref[...]
    whb = whb_ref[...]
    biases = bias_ref[...]                       # (4, 128): b_ih_f,b_hh_f,b_ih_b,b_hh_b
    b_if, b_hf = biases[0:1, :], biases[1:2, :]
    b_ib, b_hb = biases[2:3, :], biases[3:4, :]

    h_f = jnp.zeros((B, H), jnp.float32)
    h_b = jnp.zeros((B, H), jnp.float32)
    outs_f = []
    outs_b = []

    # Static unroll: S is a small compile-time constant, so the whole
    # recurrence is visible to the scheduler inside this single kernel.
    for t in range(S):                           # forward direction
        h_f = _gru_step(emb[t], h_f, wif, whf, b_if, b_hf)
        outs_f.append(h_f)
    for t in range(S - 1, -1, -1):               # backward direction
        h_b = _gru_step(emb[t], h_b, wib, whb, b_ib, b_hb)
        outs_b.append(h_b)
    outs_b = outs_b[::-1]                        # align backward state with pos t

    # outputs[t] = [h_fwd_t ; h_bwd_t]  (PyTorch bidirectional GRU layout)
    out_ref[...] = jnp.concatenate(
        [jnp.stack(outs_f, axis=0), jnp.stack(outs_b, axis=0)], axis=-1)

    # hidden = tanh(fc(cat(h_fwd_final, h_bwd_final)))
    cat = jnp.concatenate([h_f, h_b], axis=1)    # (B, 2H)
    hid_ref[...] = jnp.tanh(
        jnp.dot(cat, wfc_ref[...], preferred_element_type=jnp.float32)
        + bfc_ref[...])


# ---------------- wrapper ----------------

def encoder_forward(params, src):
    """src: (S, B) int32 token ids -> (outputs (S,B,2H) f32, hidden (B,DEC_HID) f32)."""
    S, B = src.shape
    # Embedding lookup: one XLA gather inside the same jit.
    # nn.Dropout treated as identity (eval-mode forward).
    emb = jnp.take(params["embedding"], src, axis=0)          # (S, B, EMB)

    args = (emb, params["w_if"], params["w_hf"], params["w_ib"], params["w_hb"],
            params["b_gru"], params["w_fc"], params["b_fc"])
    return pl.pallas_call(
        _encoder_kernel,
        out_shape=(jax.ShapeDtypeStruct((S, B, 2 * ENC_HID), jnp.float32),
                   jax.ShapeDtypeStruct((B, DEC_HID), jnp.float32)),
        grid=(1,),
        in_specs=[_full_spec(a.shape) for a in args],
        out_specs=(_full_spec((S, B, 2 * ENC_HID)),
                   _full_spec((B, DEC_HID))),
        compiler_params=pltpu.CompilerParams(
            dimension_semantics=("arbitrary",)),
    )(*args)


encoder_forward_jit = jax.jit(encoder_forward)


# ---------------- params ----------------

def init_params(key):
    def nrm(k, shape, scale=0.1):
        return scale * jax.random.normal(k, shape, dtype=jnp.float32)

    keys = iter(jax.random.split(key, 16))
    H = ENC_HID

    def gru_dir(in_dim):
        # Store weight_ih / weight_hh transposed, gate order r|z|n, and
        # lane-pad 3H=96 -> 128 so each step's two matmuls hit unmasked tiles.
        w_ih = nrm(next(keys), (in_dim, 3 * H))
        w_hh = nrm(next(keys), (H, 3 * H))
        b_ih = nrm(next(keys), (1, 3 * H))
        b_hh = nrm(next(keys), (1, 3 * H))
        pad = lambda a: jnp.pad(a, ((0, 0), (0, _G3P - 3 * H)))
        return pad(w_ih), pad(w_hh), pad(b_ih), pad(b_hh)

    w_if, w_hf, b_if, b_hf = gru_dir(EMB)   # forward direction
    w_ib, w_hb, b_ib, b_hb = gru_dir(EMB)   # backward direction

    return {
        "embedding": nrm(next(keys), (INPUT_DIM, EMB)),
        "w_if": w_if, "w_hf": w_hf,
        "w_ib": w_ib, "w_hb": w_hb,
        # all four GRU bias rows packed into a single tensor (one DMA)
        "b_gru": jnp.concatenate([b_if, b_hf, b_ib, b_hb], axis=0),  # (4, 128)
        "w_fc": nrm(next(keys), (2 * H, DEC_HID)),
        "b_fc": nrm(next(keys), (1, DEC_HID)),
    }


if __name__ == "__main__":
    key = jax.random.PRNGKey(0)
    kp, ks = jax.random.split(key)

    params = init_params(kp)
    src = jax.random.randint(ks, (SRC_LEN, BATCH), 0, INPUT_DIM, dtype=jnp.int32)

    outputs, hidden = encoder_forward_jit(params, src)
    outputs = jax.block_until_ready(outputs)
    hidden = jax.block_until_ready(hidden)

    assert outputs.shape == (SRC_LEN, BATCH, 2 * ENC_HID), outputs.shape
    assert hidden.shape == (BATCH, DEC_HID), hidden.shape
    assert outputs.dtype == jnp.float32 and hidden.dtype == jnp.float32
    assert bool(jnp.all(jnp.isfinite(outputs))) and bool(jnp.all(jnp.isfinite(hidden)))
    print("KERNEL_OK")
</pallas_src>

<mosaic_0001>
module attributes {stable_mosaic.version = 11 : i64} {
  func.func @_encoder_kernel(%arg0: i32, %arg1: memref<8x2x32xf32, #tpu.memory_space<vmem>>, %arg2: memref<32x128xf32, #tpu.memory_space<vmem>>, %arg3: memref<32x128xf32, #tpu.memory_space<vmem>>, %arg4: memref<32x128xf32, #tpu.memory_space<vmem>>, %arg5: memref<32x128xf32, #tpu.memory_space<vmem>>, %arg6: memref<4x128xf32, #tpu.memory_space<vmem>>, %arg7: memref<64x32xf32, #tpu.memory_space<vmem>>, %arg8: memref<1x32xf32, #tpu.memory_space<vmem>>, %arg9: memref<8x2x64xf32, #tpu.memory_space<vmem>>, %arg10: memref<2x32xf32, #tpu.memory_space<vmem>>) attributes {dimension_semantics = [#tpu.dimension_semantics<arbitrary>], iteration_bounds = array<i64: 1>, scalar_prefetch = 0 : i64, scratch_operands = 0 : i64, tpu.core_type = #tpu.core_type<tc>, window_params = [{pipeline_mode = #tpu.pipeline_mode<synchronous>, transform_indices = @transform_0, window_bounds = array<i64: 8, 2, 32>}, {pipeline_mode = #tpu.pipeline_mode<synchronous>, transform_indices = @transform_1, window_bounds = array<i64: 32, 128>}, {pipeline_mode = #tpu.pipeline_mode<synchronous>, transform_indices = @transform_2, window_bounds = array<i64: 32, 128>}, {pipeline_mode = #tpu.pipeline_mode<synchronous>, transform_indices = @transform_3, window_bounds = array<i64: 32, 128>}, {pipeline_mode = #tpu.pipeline_mode<synchronous>, transform_indices = @transform_4, window_bounds = array<i64: 32, 128>}, {pipeline_mode = #tpu.pipeline_mode<synchronous>, transform_indices = @transform_5, window_bounds = array<i64: 4, 128>}, {pipeline_mode = #tpu.pipeline_mode<synchronous>, transform_indices = @transform_6, window_bounds = array<i64: 64, 32>}, {pipeline_mode = #tpu.pipeline_mode<synchronous>, transform_indices = @transform_7, window_bounds = array<i64: 1, 32>}, {pipeline_mode = #tpu.pipeline_mode<synchronous>, transform_indices = @transform_8, window_bounds = array<i64: 8, 2, 64>}, {pipeline_mode = #tpu.pipeline_mode<synchronous>, transform_indices = @transform_9, window_bounds = array<i64: 2, 32>}]} {
    %c0 = arith.constant 0 : index
    %c0_0 = arith.constant 0 : index
    %c0_1 = arith.constant 0 : index
    %0 = vector.load %arg1[%c0, %c0_0, %c0_1] : memref<8x2x32xf32, #tpu.memory_space<vmem>>, vector<8x2x32xf32>
    %c0_2 = arith.constant 0 : index
    %c0_3 = arith.constant 0 : index
    %1 = vector.load %arg2[%c0_2, %c0_3] : memref<32x128xf32, #tpu.memory_space<vmem>>, vector<32x128xf32>
    %c0_4 = arith.constant 0 : index
    %c0_5 = arith.constant 0 : index
    %2 = vector.load %arg3[%c0_4, %c0_5] : memref<32x128xf32, #tpu.memory_space<vmem>>, vector<32x128xf32>
    %c0_6 = arith.constant 0 : index
    %c0_7 = arith.constant 0 : index
    %3 = vector.load %arg4[%c0_6, %c0_7] : memref<32x128xf32, #tpu.memory_space<vmem>>, vector<32x128xf32>
    %c0_8 = arith.constant 0 : index
    %c0_9 = arith.constant 0 : index
    %4 = vector.load %arg5[%c0_8, %c0_9] : memref<32x128xf32, #tpu.memory_space<vmem>>, vector<32x128xf32>
    %c0_10 = arith.constant 0 : index
    %c0_11 = arith.constant 0 : index
    %5 = vector.load %arg6[%c0_10, %c0_11] : memref<4x128xf32, #tpu.memory_space<vmem>>, vector<4x128xf32>
    %6 = vector.extract_strided_slice %5 {offsets = [0, 0], sizes = [1, 128], strides = [1, 1]} : vector<4x128xf32> to vector<1x128xf32>
    %7 = vector.extract_strided_slice %5 {offsets = [1, 0], sizes = [1, 128], strides = [1, 1]} : vector<4x128xf32> to vector<1x128xf32>
    %8 = vector.extract_strided_slice %5 {offsets = [2, 0], sizes = [1, 128], strides = [1, 1]} : vector<4x128xf32> to vector<1x128xf32>
    %9 = vector.extract_strided_slice %5 {offsets = [3, 0], sizes = [1, 128], strides = [1, 1]} : vector<4x128xf32> to vector<1x128xf32>
    %cst = arith.constant 0.000000e+00 : f32
    %10 = vector.broadcast %cst : f32 to vector<2x32xf32>
    %cst_12 = arith.constant 0.000000e+00 : f32
    %11 = vector.broadcast %cst_12 : f32 to vector<2x32xf32>
    %12 = vector.extract_strided_slice %0 {offsets = [0, 0, 0], sizes = [1, 2, 32], strides = [1, 1, 1]} : vector<8x2x32xf32> to vector<1x2x32xf32>
    %13 = vector.shape_cast %12 : vector<1x2x32xf32> to vector<2x32xf32>
    %cst_13 = arith.constant dense<0.000000e+00> : vector<2x128xf32>
    %14 = tpu.matmul %13, %1, %cst_13 {dimension_numbers = #tpu.dot_dimension_numbers<[1], [0], [0], [1], [0, 0, 1, 1], [], []>} : vector<2x32xf32>, vector<32x128xf32>, vector<2x128xf32> -> vector<2x128xf32>
    %15 = vector.broadcast %6 : vector<1x128xf32> to vector<2x128xf32>
    %16 = arith.addf %14, %15 : vector<2x128xf32>
    %cst_14 = arith.constant dense<0.000000e+00> : vector<2x128xf32>
    %17 = tpu.matmul %10, %2, %cst_14 {dimension_numbers = #tpu.dot_dimension_numbers<[1], [0], [0], [1], [0, 0, 1, 1], [], []>} : vector<2x32xf32>, vector<32x128xf32>, vector<2x128xf32> -> vector<2x128xf32>
    %18 = vector.broadcast %7 : vector<1x128xf32> to vector<2x128xf32>
    %19 = arith.addf %17, %18 : vector<2x128xf32>
    %20 = vector.extract_strided_slice %16 {offsets = [0, 0], sizes = [2, 32], strides = [1, 1]} : vector<2x128xf32> to vector<2x32xf32>
    %21 = vector.extract_strided_slice %19 {offsets = [0, 0], sizes = [2, 32], strides = [1, 1]} : vector<2x128xf32> to vector<2x32xf32>
    %22 = arith.addf %20, %21 : vector<2x32xf32>
    %23 = arith.negf %22 : vector<2x32xf32>
    %24 = math.exp %23 : vector<2x32xf32>
    %cst_15 = arith.constant 1.000000e+00 : f32
    %25 = vector.broadcast %cst_15 : f32 to vector<2x32xf32>
    %26 = arith.addf %25, %24 : vector<2x32xf32>
    %27 = arith.divf %25, %26 : vector<2x32xf32>
    %28 = vector.extract_strided_slice %16 {offsets = [0, 32], sizes = [2, 32], strides = [1, 1]} : vector<2x128xf32> to vector<2x32xf32>
    %29 = vector.extract_strided_slice %19 {offsets = [0, 32], sizes = [2, 32], strides = [1, 1]} : vector<2x128xf32> to vector<2x32xf32>
    %30 = arith.addf %28, %29 : vector<2x32xf32>
    %31 = arith.negf %30 : vector<2x32xf32>
    %32 = math.exp %31 : vector<2x32xf32>
    %cst_16 = arith.constant 1.000000e+00 : f32
    %33 = vector.broadcast %cst_16 : f32 to vector<2x32xf32>
    %34 = arith.addf %33, %32 : vector<2x32xf32>
    %35 = arith.divf %33, %34 : vector<2x32xf32>
    %36 = vector.extract_strided_slice %16 {offsets = [0, 64], sizes = [2, 32], strides = [1, 1]} : vector<2x128xf32> to vector<2x32xf32>
    %37 = vector.extract_strided_slice %19 {offsets = [0, 64], sizes = [2, 32], strides = [1, 1]} : vector<2x128xf32> to vector<2x32xf32>
    %38 = arith.mulf %27, %37 : vector<2x32xf32>
    %39 = arith.addf %36, %38 : vector<2x32xf32>
    %40 = math.tanh %39 : vector<2x32xf32>
    %cst_17 = arith.constant 1.000000e+00 : f32
    %41 = vector.broadcast %cst_17 : f32 to vector<2x32xf32>
    %42 = arith.subf %41, %35 : vector<2x32xf32>
    %43 = arith.mulf %42, %40 : vector<2x32xf32>
    %44 = arith.mulf %35, %10 : vector<2x32xf32>
    %45 = arith.addf %43, %44 : vector<2x32xf32>
    %46 = vector.extract_strided_slice %0 {offsets = [1, 0, 0], sizes = [1, 2, 32], strides = [1, 1, 1]} : vector<8x2x32xf32> to vector<1x2x32xf32>
    %47 = vector.shape_cast %46 : vector<1x2x32xf32> to vector<2x32xf32>
    %cst_18 = arith.constant dense<0.000000e+00> : vector<2x128xf32>
    %48 = tpu.matmul %47, %1, %cst_18 {dimension_numbers = #tpu.dot_dimension_numbers<[1], [0], [0], [1], [0, 0, 1, 1], [], []>} : vector<2x32xf32>, vector<32x128xf32>, vector<2x128xf32> -> vector<2x128xf32>
    %49 = vector.broadcast %6 : vector<1x128xf32> to vector<2x128xf32>
    %50 = arith.addf %48, %49 : vector<2x128xf32>
    %cst_19 = arith.constant dense<0.000000e+00> : vector<2x128xf32>
    %51 = tpu.matmul %45, %2, %cst_19 {dimension_numbers = #tpu.dot_dimension_numbers<[1], [0], [0], [1], [0, 0, 1, 1], [], []>} : vector<2x32xf32>, vector<32x128xf32>, vector<2x128xf32> -> vector<2x128xf32>
    %52 = vector.broadcast %7 : vector<1x128xf32> to vector<2x128xf32>
    %53 = arith.addf %51, %52 : vector<2x128xf32>
    %54 = vector.extract_strided_slice %50 {offsets = [0, 0], sizes = [2, 32], strides = [1, 1]} : vector<2x128xf32> to vector<2x32xf32>
    %55 = vector.extract_strided_slice %53 {offsets = [0, 0], sizes = [2, 32], strides = [1, 1]} : vector<2x128xf32> to vector<2x32xf32>
    %56 = arith.addf %54, %55 : vector<2x32xf32>
    %57 = arith.negf %56 : vector<2x32xf32>
    %58 = math.exp %57 : vector<2x32xf32>
    %cst_20 = arith.constant 1.000000e+00 : f32
    %59 = vector.broadcast %cst_20 : f32 to vector<2x32xf32>
    %60 = arith.addf %59, %58 : vector<2x32xf32>
    %61 = arith.divf %59, %60 : vector<2x32xf32>
    %62 = vector.extract_strided_slice %50 {offsets = [0, 32], sizes = [2, 32], strides = [1, 1]} : vector<2x128xf32> to vector<2x32xf32>
    %63 = vector.extract_strided_slice %53 {offsets = [0, 32], sizes = [2, 32], strides = [1, 1]} : vector<2x128xf32> to vector<2x32xf32>
    %64 = arith.addf %62, %63 : vector<2x32xf32>
    %65 = arith.negf %64 : vector<2x32xf32>
    %66 = math.exp %65 : vector<2x32xf32>
    %cst_21 = arith.constant 1.000000e+00 : f32
    %67 = vector.broadcast %cst_21 : f32 to vector<2x32xf32>
    %68 = arith.addf %67, %66 : vector<2x32xf32>
    %69 = arith.divf %67, %68 : vector<2x32xf32>
    %70 = vector.extract_strided_slice %50 {offsets = [0, 64], sizes = [2, 32], strides = [1, 1]} : vector<2x128xf32> to vector<2x32xf32>
    %71 = vector.extract_strided_slice %53 {offsets = [0, 64], sizes = [2, 32], strides = [1, 1]} : vector<2x128xf32> to vector<2x32xf32>
    %72 = arith.mulf %61, %71 : vector<2x32xf32>
    %73 = arith.addf %70, %72 : vector<2x32xf32>
    %74 = math.tanh %73 : vector<2x32xf32>
    %cst_22 = arith.constant 1.000000e+00 : f32
    %75 = vector.broadcast %cst_22 : f32 to vector<2x32xf32>
    %76 = arith.subf %75, %69 : vector<2x32xf32>
    %77 = arith.mulf %76, %74 : vector<2x32xf32>
    %78 = arith.mulf %69, %45 : vector<2x32xf32>
    %79 = arith.addf %77, %78 : vector<2x32xf32>
    %80 = vector.extract_strided_slice %0 {offsets = [2, 0, 0], sizes = [1, 2, 32], strides = [1, 1, 1]} : vector<8x2x32xf32> to vector<1x2x32xf32>
    %81 = vector.shape_cast %80 : vector<1x2x32xf32> to vector<2x32xf32>
    %cst_23 = arith.constant dense<0.000000e+00> : vector<2x128xf32>
    %82 = tpu.matmul %81, %1, %cst_23 {dimension_numbers = #tpu.dot_dimension_numbers<[1], [0], [0], [1], [0, 0, 1, 1], [], []>} : vector<2x32xf32>, vector<32x128xf32>, vector<2x128xf32> -> vector<2x128xf32>
    %83 = vector.broadcast %6 : vector<1x128xf32> to vector<2x128xf32>
    %84 = arith.addf %82, %83 : vector<2x128xf32>
    %cst_24 = arith.constant dense<0.000000e+00> : vector<2x128xf32>
    %85 = tpu.matmul %79, %2, %cst_24 {dimension_numbers = #tpu.dot_dimension_numbers<[1], [0], [0], [1], [0, 0, 1, 1], [], []>} : vector<2x32xf32>, vector<32x128xf32>, vector<2x128xf32> -> vector<2x128xf32>
    %86 = vector.broadcast %7 : vector<1x128xf32> to vector<2x128xf32>
    %87 = arith.addf %85, %86 : vector<2x128xf32>
    %88 = vector.extract_strided_slice %84 {offsets = [0, 0], sizes = [2, 32], strides = [1, 1]} : vector<2x128xf32> to vector<2x32xf32>
    %89 = vector.extract_strided_slice %87 {offsets = [0, 0], sizes = [2, 32], strides = [1, 1]} : vector<2x128xf32> to vector<2x32xf32>
    %90 = arith.addf %88, %89 : vector<2x32xf32>
    %91 = arith.negf %90 : vector<2x32xf32>
    %92 = math.exp %91 : vector<2x32xf32>
    %cst_25 = arith.constant 1.000000e+00 : f32
    %93 = vector.broadcast %cst_25 : f32 to vector<2x32xf32>
    %94 = arith.addf %93, %92 : vector<2x32xf32>
    %95 = arith.divf %93, %94 : vector<2x32xf32>
    %96 = vector.extract_strided_slice %84 {offsets = [0, 32], sizes = [2, 32], strides = [1, 1]} : vector<2x128xf32> to vector<2x32xf32>
    %97 = vector.extract_strided_slice %87 {offsets = [0, 32], sizes = [2, 32], strides = [1, 1]} : vector<2x128xf32> to vector<2x32xf32>
    %98 = arith.addf %96, %97 : vector<2x32xf32>
    %99 = arith.negf %98 : vector<2x32xf32>
    %100 = math.exp %99 : vector<2x32xf32>
    %cst_26 = arith.constant 1.000000e+00 : f32
    %101 = vector.broadcast %cst_26 : f32 to vector<2x32xf32>
    %102 = arith.addf %101, %100 : vector<2x32xf32>
    %103 = arith.divf %101, %102 : vector<2x32xf32>
    %104 = vector.extract_strided_slice %84 {offsets = [0, 64], sizes = [2, 32], strides = [1, 1]} : vector<2x128xf32> to vector<2x32xf32>
    %105 = vector.extract_strided_slice %87 {offsets = [0, 64], sizes = [2, 32], strides = [1, 1]} : vector<2x128xf32> to vector<2x32xf32>
    %106 = arith.mulf %95, %105 : vector<2x32xf32>
    %107 = arith.addf %104, %106 : vector<2x32xf32>
    %108 = math.tanh %107 : vector<2x32xf32>
    %cst_27 = arith.constant 1.000000e+00 : f32
    %109 = vector.broadcast %cst_27 : f32 to vector<2x32xf32>
    %110 = arith.subf %109, %103 : vector<2x32xf32>
    %111 = arith.mulf %110, %108 : vector<2x32xf32>
    %112 = arith.mulf %103, %79 : vector<2x32xf32>
    %113 = arith.addf %111, %112 : vector<2x32xf32>
    %114 = vector.extract_strided_slice %0 {offsets = [3, 0, 0], sizes = [1, 2, 32], strides = [1, 1, 1]} : vector<8x2x32xf32> to vector<1x2x32xf32>
    %115 = vector.shape_cast %114 : vector<1x2x32xf32> to vector<2x32xf32>
    %cst_28 = arith.constant dense<0.000000e+00> : vector<2x128xf32>
    %116 = tpu.matmul %115, %1, %cst_28 {dimension_numbers = #tpu.dot_dimension_numbers<[1], [0], [0], [1], [0, 0, 1, 1], [], []>} : vector<2x32xf32>, vector<32x128xf32>, vector<2x128xf32> -> vector<2x128xf32>
    %117 = vector.broadcast %6 : vector<1x128xf32> to vector<2x128xf32>
    %118 = arith.addf %116, %117 : vector<2x128xf32>
    %cst_29 = arith.constant dense<0.000000e+00> : vector<2x128xf32>
    %119 = tpu.matmul %113, %2, %cst_29 {dimension_numbers = #tpu.dot_dimension_numbers<[1], [0], [0], [1], [0, 0, 1, 1], [], []>} : vector<2x32xf32>, vector<32x128xf32>, vector<2x128xf32> -> vector<2x128xf32>
    %120 = vector.broadcast %7 : vector<1x128xf32> to vector<2x128xf32>
    %121 = arith.addf %119, %120 : vector<2x128xf32>
    %122 = vector.extract_strided_slice %118 {offsets = [0, 0], sizes = [2, 32], strides = [1, 1]} : vector<2x128xf32> to vector<2x32xf32>
    %123 = vector.extract_strided_slice %121 {offsets = [0, 0], sizes = [2, 32], strides = [1, 1]} : vector<2x128xf32> to vector<2x32xf32>
    %124 = arith.addf %122, %123 : vector<2x32xf32>
    %125 = arith.negf %124 : vector<2x32xf32>
    %126 = math.exp %125 : vector<2x32xf32>
    %cst_30 = arith.constant 1.000000e+00 : f32
    %127 = vector.broadcast %cst_30 : f32 to vector<2x32xf32>
    %128 = arith.addf %127, %126 : vector<2x32xf32>
    %129 = arith.divf %127, %128 : vector<2x32xf32>
    %130 = vector.extract_strided_slice %118 {offsets = [0, 32], sizes = [2, 32], strides = [1, 1]} : vector<2x128xf32> to vector<2x32xf32>
    %131 = vector.extract_strided_slice %121 {offsets = [0, 32], sizes = [2, 32], strides = [1, 1]} : vector<2x128xf32> to vector<2x32xf32>
    %132 = arith.addf %130, %131 : vector<2x32xf32>
    %133 = arith.negf %132 : vector<2x32xf32>
    %134 = math.exp %133 : vector<2x32xf32>
    %cst_31 = arith.constant 1.000000e+00 : f32
    %135 = vector.broadcast %cst_31 : f32 to vector<2x32xf32>
    %136 = arith.addf %135, %134 : vector<2x32xf32>
    %137 = arith.divf %135, %136 : vector<2x32xf32>
    %138 = vector.extract_strided_slice %118 {offsets = [0, 64], sizes = [2, 32], strides = [1, 1]} : vector<2x128xf32> to vector<2x32xf32>
    %139 = vector.extract_strided_slice %121 {offsets = [0, 64], sizes = [2, 32], strides = [1, 1]} : vector<2x128xf32> to vector<2x32xf32>
    %140 = arith.mulf %129, %139 : vector<2x32xf32>
    %141 = arith.addf %138, %140 : vector<2x32xf32>
    %142 = math.tanh %141 : vector<2x32xf32>
    %cst_32 = arith.constant 1.000000e+00 : f32
    %143 = vector.broadcast %cst_32 : f32 to vector<2x32xf32>
    %144 = arith.subf %143, %137 : vector<2x32xf32>
    %145 = arith.mulf %144, %142 : vector<2x32xf32>
    %146 = arith.mulf %137, %113 : vector<2x32xf32>
    %147 = arith.addf %145, %146 : vector<2x32xf32>
    %148 = vector.extract_strided_slice %0 {offsets = [4, 0, 0], sizes = [1, 2, 32], strides = [1, 1, 1]} : vector<8x2x32xf32> to vector<1x2x32xf32>
    %149 = vector.shape_cast %148 : vector<1x2x32xf32> to vector<2x32xf32>
    %cst_33 = arith.constant dense<0.000000e+00> : vector<2x128xf32>
    %150 = tpu.matmul %149, %1, %cst_33 {dimension_numbers = #tpu.dot_dimension_numbers<[1], [0], [0], [1], [0, 0, 1, 1], [], []>} : vector<2x32xf32>, vector<32x128xf32>, vector<2x128xf32> -> vector<2x128xf32>
    %151 = vector.broadcast %6 : vector<1x128xf32> to vector<2x128xf32>
    %152 = arith.addf %150, %151 : vector<2x128xf32>
    %cst_34 = arith.constant dense<0.000000e+00> : vector<2x128xf32>
    %153 = tpu.matmul %147, %2, %cst_34 {dimension_numbers = #tpu.dot_dimension_numbers<[1], [0], [0], [1], [0, 0, 1, 1], [], []>} : vector<2x32xf32>, vector<32x128xf32>, vector<2x128xf32> -> vector<2x128xf32>
    %154 = vector.broadcast %7 : vector<1x128xf32> to vector<2x128xf32>
    %155 = arith.addf %153, %154 : vector<2x128xf32>
    %156 = vector.extract_strided_slice %152 {offsets = [0, 0], sizes = [2, 32], strides = [1, 1]} : vector<2x128xf32> to vector<2x32xf32>
    %157 = vector.extract_strided_slice %155 {offsets = [0, 0], sizes = [2, 32], strides = [1, 1]} : vector<2x128xf32> to vector<2x32xf32>
    %158 = arith.addf %156, %157 : vector<2x32xf32>
    %159 = arith.negf %158 : vector<2x32xf32>
    %160 = math.exp %159 : vector<2x32xf32>
    %cst_35 = arith.constant 1.000000e+00 : f32
    %161 = vector.broadcast %cst_35 : f32 to vector<2x32xf32>
    %162 = arith.addf %161, %160 : vector<2x32xf32>
    %163 = arith.divf %161, %162 : vector<2x32xf32>
    %164 = vector.extract_strided_slice %152 {offsets = [0, 32], sizes = [2, 32], strides = [1, 1]} : vector<2x128xf32> to vector<2x32xf32>
    %165 = vector.extract_strided_slice %155 {offsets = [0, 32], sizes = [2, 32], strides = [1, 1]} : vector<2x128xf32> to vector<2x32xf32>
    %166 = arith.addf %164, %165 : vector<2x32xf32>
    %167 = arith.negf %166 : vector<2x32xf32>
    %168 = math.exp %167 : vector<2x32xf32>
    %cst_36 = arith.constant 1.000000e+00 : f32
    %169 = vector.broadcast %cst_36 : f32 to vector<2x32xf32>
    %170 = arith.addf %169, %168 : vector<2x32xf32>
    %171 = arith.divf %169, %170 : vector<2x32xf32>
    %172 = vector.extract_strided_slice %152 {offsets = [0, 64], sizes = [2, 32], strides = [1, 1]} : vector<2x128xf32> to vector<2x32xf32>
    %173 = vector.extract_strided_slice %155 {offsets = [0, 64], sizes = [2, 32], strides = [1, 1]} : vector<2x128xf32> to vector<2x32xf32>
    %174 = arith.mulf %163, %173 : vector<2x32xf32>
    %175 = arith.addf %172, %174 : vector<2x32xf32>
    %176 = math.tanh %175 : vector<2x32xf32>
    %cst_37 = arith.constant 1.000000e+00 : f32
    %177 = vector.broadcast %cst_37 : f32 to vector<2x32xf32>
    %178 = arith.subf %177, %171 : vector<2x32xf32>
    %179 = arith.mulf %178, %176 : vector<2x32xf32>
    %180 = arith.mulf %171, %147 : vector<2x32xf32>
    %181 = arith.addf %179, %180 : vector<2x32xf32>
    %182 = vector.extract_strided_slice %0 {offsets = [5, 0, 0], sizes = [1, 2, 32], strides = [1, 1, 1]} : vector<8x2x32xf32> to vector<1x2x32xf32>
    %183 = vector.shape_cast %182 : vector<1x2x32xf32> to vector<2x32xf32>
    %cst_38 = arith.constant dense<0.000000e+00> : vector<2x128xf32>
    %184 = tpu.matmul %183, %1, %cst_38 {dimension_numbers = #tpu.dot_dimension_numbers<[1], [0], [0], [1], [0, 0, 1, 1], [], []>} : vector<2x32xf32>, vector<32x128xf32>, vector<2x128xf32> -> vector<2x128xf32>
    %185 = vector.broadcast %6 : vector<1x128xf32> to vector<2x128xf32>
    %186 = arith.addf %184, %185 : vector<2x128xf32>
    %cst_39 = arith.constant dense<0.000000e+00> : vector<2x128xf32>
    %187 = tpu.matmul %181, %2, %cst_39 {dimension_numbers = #tpu.dot_dimension_numbers<[1], [0], [0], [1], [0, 0, 1, 1], [], []>} : vector<2x32xf32>, vector<32x128xf32>, vector<2x128xf32> -> vector<2x128xf32>
    %188 = vector.broadcast %7 : vector<1x128xf32> to vector<2x128xf32>
    %189 = arith.addf %187, %188 : vector<2x128xf32>
    %190 = vector.extract_strided_slice %186 {offsets = [0, 0], sizes = [2, 32], strides = [1, 1]} : vector<2x128xf32> to vector<2x32xf32>
    %191 = vector.extract_strided_slice %189 {offsets = [0, 0], sizes = [2, 32], strides = [1, 1]} : vector<2x128xf32> to vector<2x32xf32>
    %192 = arith.addf %190, %191 : vector<2x32xf32>
    %193 = arith.negf %192 : vector<2x32xf32>
    %194 = math.exp %193 : vector<2x32xf32>
    %cst_40 = arith.constant 1.000000e+00 : f32
    %195 = vector.broadcast %cst_40 : f32 to vector<2x32xf32>
    %196 = arith.addf %195, %194 : vector<2x32xf32>
    %197 = arith.divf %195, %196 : vector<2x32xf32>
    %198 = vector.extract_strided_slice %186 {offsets = [0, 32], sizes = [2, 32], strides = [1, 1]} : vector<2x128xf32> to vector<2x32xf32>
    %199 = vector.extract_strided_slice %189 {offsets = [0, 32], sizes = [2, 32], strides = [1, 1]} : vector<2x128xf32> to vector<2x32xf32>
    %200 = arith.addf %198, %199 : vector<2x32xf32>
    %201 = arith.negf %200 : vector<2x32xf32>
    %202 = math.exp %201 : vector<2x32xf32>
    %cst_41 = arith.constant 1.000000e+00 : f32
    %203 = vector.broadcast %cst_41 : f32 to vector<2x32xf32>
    %204 = arith.addf %203, %202 : vector<2x32xf32>
    %205 = arith.divf %203, %204 : vector<2x32xf32>
    %206 = vector.extract_strided_slice %186 {offsets = [0, 64], sizes = [2, 32], strides = [1, 1]} : vector<2x128xf32> to vector<2x32xf32>
    %207 = vector.extract_strided_slice %189 {offsets = [0, 64], sizes = [2, 32], strides = [1, 1]} : vector<2x128xf32> to vector<2x32xf32>
    %208 = arith.mulf %197, %207 : vector<2x32xf32>
    %209 = arith.addf %206, %208 : vector<2x32xf32>
    %210 = math.tanh %209 : vector<2x32xf32>
    %cst_42 = arith.constant 1.000000e+00 : f32
    %211 = vector.broadcast %cst_42 : f32 to vector<2x32xf32>
    %212 = arith.subf %211, %205 : vector<2x32xf32>
    %213 = arith.mulf %212, %210 : vector<2x32xf32>
    %214 = arith.mulf %205, %181 : vector<2x32xf32>
    %215 = arith.addf %213, %214 : vector<2x32xf32>
    %216 = vector.extract_strided_slice %0 {offsets = [6, 0, 0], sizes = [1, 2, 32], strides = [1, 1, 1]} : vector<8x2x32xf32> to vector<1x2x32xf32>
    %217 = vector.shape_cast %216 : vector<1x2x32xf32> to vector<2x32xf32>
    %cst_43 = arith.constant dense<0.000000e+00> : vector<2x128xf32>
    %218 = tpu.matmul %217, %1, %cst_43 {dimension_numbers = #tpu.dot_dimension_numbers<[1], [0], [0], [1], [0, 0, 1, 1], [], []>} : vector<2x32xf32>, vector<32x128xf32>, vector<2x128xf32> -> vector<2x128xf32>
    %219 = vector.broadcast %6 : vector<1x128xf32> to vector<2x128xf32>
    %220 = arith.addf %218, %219 : vector<2x128xf32>
    %cst_44 = arith.constant dense<0.000000e+00> : vector<2x128xf32>
    %221 = tpu.matmul %215, %2, %cst_44 {dimension_numbers = #tpu.dot_dimension_numbers<[1], [0], [0], [1], [0, 0, 1, 1], [], []>} : vector<2x32xf32>, vector<32x128xf32>, vector<2x128xf32> -> vector<2x128xf32>
    %222 = vector.broadcast %7 : vector<1x128xf32> to vector<2x128xf32>
    %223 = arith.addf %221, %222 : vector<2x128xf32>
    %224 = vector.extract_strided_slice %220 {offsets = [0, 0], sizes = [2, 32], strides = [1, 1]} : vector<2x128xf32> to vector<2x32xf32>
    %225 = vector.extract_strided_slice %223 {offsets = [0, 0], sizes = [2, 32], strides = [1, 1]} : vector<2x128xf32> to vector<2x32xf32>
    %226 = arith.addf %224, %225 : vector<2x32xf32>
    %227 = arith.negf %226 : vector<2x32xf32>
    %228 = math.exp %227 : vector<2x32xf32>
    %cst_45 = arith.constant 1.000000e+00 : f32
    %229 = vector.broadcast %cst_45 : f32 to vector<2x32xf32>
    %230 = arith.addf %229, %228 : vector<2x32xf32>
    %231 = arith.divf %229, %230 : vector<2x32xf32>
    %232 = vector.extract_strided_slice %220 {offsets = [0, 32], sizes = [2, 32], strides = [1, 1]} : vector<2x128xf32> to vector<2x32xf32>
    %233 = vector.extract_strided_slice %223 {offsets = [0, 32], sizes = [2, 32], strides = [1, 1]} : vector<2x128xf32> to vector<2x32xf32>
    %234 = arith.addf %232, %233 : vector<2x32xf32>
    %235 = arith.negf %234 : vector<2x32xf32>
    %236 = math.exp %235 : vector<2x32xf32>
    %cst_46 = arith.constant 1.000000e+00 : f32
    %237 = vector.broadcast %cst_46 : f32 to vector<2x32xf32>
    %238 = arith.addf %237, %236 : vector<2x32xf32>
    %239 = arith.divf %237, %238 : vector<2x32xf32>
    %240 = vector.extract_strided_slice %220 {offsets = [0, 64], sizes = [2, 32], strides = [1, 1]} : vector<2x128xf32> to vector<2x32xf32>
    %241 = vector.extract_strided_slice %223 {offsets = [0, 64], sizes = [2, 32], strides = [1, 1]} : vector<2x128xf32> to vector<2x32xf32>
    %242 = arith.mulf %231, %241 : vector<2x32xf32>
    %243 = arith.addf %240, %242 : vector<2x32xf32>
    %244 = math.tanh %243 : vector<2x32xf32>
    %cst_47 = arith.constant 1.000000e+00 : f32
    %245 = vector.broadcast %cst_47 : f32 to vector<2x32xf32>
    %246 = arith.subf %245, %239 : vector<2x32xf32>
    %247 = arith.mulf %246, %244 : vector<2x32xf32>
    %248 = arith.mulf %239, %215 : vector<2x32xf32>
    %249 = arith.addf %247, %248 : vector<2x32xf32>
    %250 = vector.extract_strided_slice %0 {offsets = [7, 0, 0], sizes = [1, 2, 32], strides = [1, 1, 1]} : vector<8x2x32xf32> to vector<1x2x32xf32>
    %251 = vector.shape_cast %250 : vector<1x2x32xf32> to vector<2x32xf32>
    %cst_48 = arith.constant dense<0.000000e+00> : vector<2x128xf32>
    %252 = tpu.matmul %251, %1, %cst_48 {dimension_numbers = #tpu.dot_dimension_numbers<[1], [0], [0], [1], [0, 0, 1, 1], [], []>} : vector<2x32xf32>, vector<32x128xf32>, vector<2x128xf32> -> vector<2x128xf32>
    %253 = vector.broadcast %6 : vector<1x128xf32> to vector<2x128xf32>
    %254 = arith.addf %252, %253 : vector<2x128xf32>
    %cst_49 = arith.constant dense<0.000000e+00> : vector<2x128xf32>
    %255 = tpu.matmul %249, %2, %cst_49 {dimension_numbers = #tpu.dot_dimension_numbers<[1], [0], [0], [1], [0, 0, 1, 1], [], []>} : vector<2x32xf32>, vector<32x128xf32>, vector<2x128xf32> -> vector<2x128xf32>
    %256 = vector.broadcast %7 : vector<1x128xf32> to vector<2x128xf32>
    %257 = arith.addf %255, %256 : vector<2x128xf32>
    %258 = vector.extract_strided_slice %254 {offsets = [0, 0], sizes = [2, 32], strides = [1, 1]} : vector<2x128xf32> to vector<2x32xf32>
    %259 = vector.extract_strided_slice %257 {offsets = [0, 0], sizes = [2, 32], strides = [1, 1]} : vector<2x128xf32> to vector<2x32xf32>
    %260 = arith.addf %258, %259 : vector<2x32xf32>
    %261 = arith.negf %260 : vector<2x32xf32>
    %262 = math.exp %261 : vector<2x32xf32>
    %cst_50 = arith.constant 1.000000e+00 : f32
    %263 = vector.broadcast %cst_50 : f32 to vector<2x32xf32>
    %264 = arith.addf %263, %262 : vector<2x32xf32>
    %265 = arith.divf %263, %264 : vector<2x32xf32>
    %266 = vector.extract_strided_slice %254 {offsets = [0, 32], sizes = [2, 32], strides = [1, 1]} : vector<2x128xf32> to vector<2x32xf32>
    %267 = vector.extract_strided_slice %257 {offsets = [0, 32], sizes = [2, 32], strides = [1, 1]} : vector<2x128xf32> to vector<2x32xf32>
    %268 = arith.addf %266, %267 : vector<2x32xf32>
    %269 = arith.negf %268 : vector<2x32xf32>
    %270 = math.exp %269 : vector<2x32xf32>
    %cst_51 = arith.constant 1.000000e+00 : f32
    %271 = vector.broadcast %cst_51 : f32 to vector<2x32xf32>
    %272 = arith.addf %271, %270 : vector<2x32xf32>
    %273 = arith.divf %271, %272 : vector<2x32xf32>
    %274 = vector.extract_strided_slice %254 {offsets = [0, 64], sizes = [2, 32], strides = [1, 1]} : vector<2x128xf32> to vector<2x32xf32>
    %275 = vector.extract_strided_slice %257 {offsets = [0, 64], sizes = [2, 32], strides = [1, 1]} : vector<2x128xf32> to vector<2x32xf32>
    %276 = arith.mulf %265, %275 : vector<2x32xf32>
    %277 = arith.addf %274, %276 : vector<2x32xf32>
    %278 = math.tanh %277 : vector<2x32xf32>
    %cst_52 = arith.constant 1.000000e+00 : f32
    %279 = vector.broadcast %cst_52 : f32 to vector<2x32xf32>
    %280 = arith.subf %279, %273 : vector<2x32xf32>
    %281 = arith.mulf %280, %278 : vector<2x32xf32>
    %282 = arith.mulf %273, %249 : vector<2x32xf32>
    %283 = arith.addf %281, %282 : vector<2x32xf32>
    %284 = vector.extract_strided_slice %0 {offsets = [7, 0, 0], sizes = [1, 2, 32], strides = [1, 1, 1]} : vector<8x2x32xf32> to vector<1x2x32xf32>
    %285 = vector.shape_cast %284 : vector<1x2x32xf32> to vector<2x32xf32>
    %cst_53 = arith.constant dense<0.000000e+00> : vector<2x128xf32>
    %286 = tpu.matmul %285, %3, %cst_53 {dimension_numbers = #tpu.dot_dimension_numbers<[1], [0], [0], [1], [0, 0, 1, 1], [], []>} : vector<2x32xf32>, vector<32x128xf32>, vector<2x128xf32> -> vector<2x128xf32>
    %287 = vector.broadcast %8 : vector<1x128xf32> to vector<2x128xf32>
    %288 = arith.addf %286, %287 : vector<2x128xf32>
    %cst_54 = arith.constant dense<0.000000e+00> : vector<2x128xf32>
    %289 = tpu.matmul %11, %4, %cst_54 {dimension_numbers = #tpu.dot_dimension_numbers<[1], [0], [0], [1], [0, 0, 1, 1], [], []>} : vector<2x32xf32>, vector<32x128xf32>, vector<2x128xf32> -> vector<2x128xf32>
    %290 = vector.broadcast %9 : vector<1x128xf32> to vector<2x128xf32>
    %291 = arith.addf %289, %290 : vector<2x128xf32>
    %292 = vector.extract_strided_slice %288 {offsets = [0, 0], sizes = [2, 32], strides = [1, 1]} : vector<2x128xf32> to vector<2x32xf32>
    %293 = vector.extract_strided_slice %291 {offsets = [0, 0], sizes = [2, 32], strides = [1, 1]} : vector<2x128xf32> to vector<2x32xf32>
    %294 = arith.addf %292, %293 : vector<2x32xf32>
    %295 = arith.negf %294 : vector<2x32xf32>
    %296 = math.exp %295 : vector<2x32xf32>
    %cst_55 = arith.constant 1.000000e+00 : f32
    %297 = vector.broadcast %cst_55 : f32 to vector<2x32xf32>
    %298 = arith.addf %297, %296 : vector<2x32xf32>
    %299 = arith.divf %297, %298 : vector<2x32xf32>
    %300 = vector.extract_strided_slice %288 {offsets = [0, 32], sizes = [2, 32], strides = [1, 1]} : vector<2x128xf32> to vector<2x32xf32>
    %301 = vector.extract_strided_slice %291 {offsets = [0, 32], sizes = [2, 32], strides = [1, 1]} : vector<2x128xf32> to vector<2x32xf32>
    %302 = arith.addf %300, %301 : vector<2x32xf32>
    %303 = arith.negf %302 : vector<2x32xf32>
    %304 = math.exp %303 : vector<2x32xf32>
    %cst_56 = arith.constant 1.000000e+00 : f32
    %305 = vector.broadcast %cst_56 : f32 to vector<2x32xf32>
    %306 = arith.addf %305, %304 : vector<2x32xf32>
    %307 = arith.divf %305, %306 : vector<2x32xf32>
    %308 = vector.extract_strided_slice %288 {offsets = [0, 64], sizes = [2, 32], strides = [1, 1]} : vector<2x128xf32> to vector<2x32xf32>
    %309 = vector.extract_strided_slice %291 {offsets = [0, 64], sizes = [2, 32], strides = [1, 1]} : vector<2x128xf32> to vector<2x32xf32>
    %310 = arith.mulf %299, %309 : vector<2x32xf32>
    %311 = arith.addf %308, %310 : vector<2x32xf32>
    %312 = math.tanh %311 : vector<2x32xf32>
    %cst_57 = arith.constant 1.000000e+00 : f32
    %313 = vector.broadcast %cst_57 : f32 to vector<2x32xf32>
    %314 = arith.subf %313, %307 : vector<2x32xf32>
    %315 = arith.mulf %314, %312 : vector<2x32xf32>
    %316 = arith.mulf %307, %11 : vector<2x32xf32>
    %317 = arith.addf %315, %316 : vector<2x32xf32>
    %318 = vector.extract_strided_slice %0 {offsets = [6, 0, 0], sizes = [1, 2, 32], strides = [1, 1, 1]} : vector<8x2x32xf32> to vector<1x2x32xf32>
    %319 = vector.shape_cast %318 : vector<1x2x32xf32> to vector<2x32xf32>
    %cst_58 = arith.constant dense<0.000000e+00> : vector<2x128xf32>
    %320 = tpu.matmul %319, %3, %cst_58 {dimension_numbers = #tpu.dot_dimension_numbers<[1], [0], [0], [1], [0, 0, 1, 1], [], []>} : vector<2x32xf32>, vector<32x128xf32>, vector<2x128xf32> -> vector<2x128xf32>
    %321 = vector.broadcast %8 : vector<1x128xf32> to vector<2x128xf32>
    %322 = arith.addf %320, %321 : vector<2x128xf32>
    %cst_59 = arith.constant dense<0.000000e+00> : vector<2x128xf32>
    %323 = tpu.matmul %317, %4, %cst_59 {dimension_numbers = #tpu.dot_dimension_numbers<[1], [0], [0], [1], [0, 0, 1, 1], [], []>} : vector<2x32xf32>, vector<32x128xf32>, vector<2x128xf32> -> vector<2x128xf32>
    %324 = vector.broadcast %9 : vector<1x128xf32> to vector<2x128xf32>
    %325 = arith.addf %323, %324 : vector<2x128xf32>
    %326 = vector.extract_strided_slice %322 {offsets = [0, 0], sizes = [2, 32], strides = [1, 1]} : vector<2x128xf32> to vector<2x32xf32>
    %327 = vector.extract_strided_slice %325 {offsets = [0, 0], sizes = [2, 32], strides = [1, 1]} : vector<2x128xf32> to vector<2x32xf32>
    %328 = arith.addf %326, %327 : vector<2x32xf32>
    %329 = arith.negf %328 : vector<2x32xf32>
    %330 = math.exp %329 : vector<2x32xf32>
    %cst_60 = arith.constant 1.000000e+00 : f32
    %331 = vector.broadcast %cst_60 : f32 to vector<2x32xf32>
    %332 = arith.addf %331, %330 : vector<2x32xf32>
    %333 = arith.divf %331, %332 : vector<2x32xf32>
    %334 = vector.extract_strided_slice %322 {offsets = [0, 32], sizes = [2, 32], strides = [1, 1]} : vector<2x128xf32> to vector<2x32xf32>
    %335 = vector.extract_strided_slice %325 {offsets = [0, 32], sizes = [2, 32], strides = [1, 1]} : vector<2x128xf32> to vector<2x32xf32>
    %336 = arith.addf %334, %335 : vector<2x32xf32>
    %337 = arith.negf %336 : vector<2x32xf32>
    %338 = math.exp %337 : vector<2x32xf32>
    %cst_61 = arith.constant 1.000000e+00 : f32
    %339 = vector.broadcast %cst_61 : f32 to vector<2x32xf32>
    %340 = arith.addf %339, %338 : vector<2x32xf32>
    %341 = arith.divf %339, %340 : vector<2x32xf32>
    %342 = vector.extract_strided_slice %322 {offsets = [0, 64], sizes = [2, 32], strides = [1, 1]} : vector<2x128xf32> to vector<2x32xf32>
    %343 = vector.extract_strided_slice %325 {offsets = [0, 64], sizes = [2, 32], strides = [1, 1]} : vector<2x128xf32> to vector<2x32xf32>
    %344 = arith.mulf %333, %343 : vector<2x32xf32>
    %345 = arith.addf %342, %344 : vector<2x32xf32>
    %346 = math.tanh %345 : vector<2x32xf32>
    %cst_62 = arith.constant 1.000000e+00 : f32
    %347 = vector.broadcast %cst_62 : f32 to vector<2x32xf32>
    %348 = arith.subf %347, %341 : vector<2x32xf32>
    %349 = arith.mulf %348, %346 : vector<2x32xf32>
    %350 = arith.mulf %341, %317 : vector<2x32xf32>
    %351 = arith.addf %349, %350 : vector<2x32xf32>
    %352 = vector.extract_strided_slice %0 {offsets = [5, 0, 0], sizes = [1, 2, 32], strides = [1, 1, 1]} : vector<8x2x32xf32> to vector<1x2x32xf32>
    %353 = vector.shape_cast %352 : vector<1x2x32xf32> to vector<2x32xf32>
    %cst_63 = arith.constant dense<0.000000e+00> : vector<2x128xf32>
    %354 = tpu.matmul %353, %3, %cst_63 {dimension_numbers = #tpu.dot_dimension_numbers<[1], [0], [0], [1], [0, 0, 1, 1], [], []>} : vector<2x32xf32>, vector<32x128xf32>, vector<2x128xf32> -> vector<2x128xf32>
    %355 = vector.broadcast %8 : vector<1x128xf32> to vector<2x128xf32>
    %356 = arith.addf %354, %355 : vector<2x128xf32>
    %cst_64 = arith.constant dense<0.000000e+00> : vector<2x128xf32>
    %357 = tpu.matmul %351, %4, %cst_64 {dimension_numbers = #tpu.dot_dimension_numbers<[1], [0], [0], [1], [0, 0, 1, 1], [], []>} : vector<2x32xf32>, vector<32x128xf32>, vector<2x128xf32> -> vector<2x128xf32>
    %358 = vector.broadcast %9 : vector<1x128xf32> to vector<2x128xf32>
    %359 = arith.addf %357, %358 : vector<2x128xf32>
    %360 = vector.extract_strided_slice %356 {offsets = [0, 0], sizes = [2, 32], strides = [1, 1]} : vector<2x128xf32> to vector<2x32xf32>
    %361 = vector.extract_strided_slice %359 {offsets = [0, 0], sizes = [2, 32], strides = [1, 1]} : vector<2x128xf32> to vector<2x32xf32>
    %362 = arith.addf %360, %361 : vector<2x32xf32>
    %363 = arith.negf %362 : vector<2x32xf32>
    %364 = math.exp %363 : vector<2x32xf32>
    %cst_65 = arith.constant 1.000000e+00 : f32
    %365 = vector.broadcast %cst_65 : f32 to vector<2x32xf32>
    %366 = arith.addf %365, %364 : vector<2x32xf32>
    %367 = arith.divf %365, %366 : vector<2x32xf32>
    %368 = vector.extract_strided_slice %356 {offsets = [0, 32], sizes = [2, 32], strides = [1, 1]} : vector<2x128xf32> to vector<2x32xf32>
    %369 = vector.extract_strided_slice %359 {offsets = [0, 32], sizes = [2, 32], strides = [1, 1]} : vector<2x128xf32> to vector<2x32xf32>
    %370 = arith.addf %368, %369 : vector<2x32xf32>
    %371 = arith.negf %370 : vector<2x32xf32>
    %372 = math.exp %371 : vector<2x32xf32>
    %cst_66 = arith.constant 1.000000e+00 : f32
    %373 = vector.broadcast %cst_66 : f32 to vector<2x32xf32>
    %374 = arith.addf %373, %372 : vector<2x32xf32>
    %375 = arith.divf %373, %374 : vector<2x32xf32>
    %376 = vector.extract_strided_slice %356 {offsets = [0, 64], sizes = [2, 32], strides = [1, 1]} : vector<2x128xf32> to vector<2x32xf32>
    %377 = vector.extract_strided_slice %359 {offsets = [0, 64], sizes = [2, 32], strides = [1, 1]} : vector<2x128xf32> to vector<2x32xf32>
    %378 = arith.mulf %367, %377 : vector<2x32xf32>
    %379 = arith.addf %376, %378 : vector<2x32xf32>
    %380 = math.tanh %379 : vector<2x32xf32>
    %cst_67 = arith.constant 1.000000e+00 : f32
    %381 = vector.broadcast %cst_67 : f32 to vector<2x32xf32>
    %382 = arith.subf %381, %375 : vector<2x32xf32>
    %383 = arith.mulf %382, %380 : vector<2x32xf32>
    %384 = arith.mulf %375, %351 : vector<2x32xf32>
    %385 = arith.addf %383, %384 : vector<2x32xf32>
    %386 = vector.extract_strided_slice %0 {offsets = [4, 0, 0], sizes = [1, 2, 32], strides = [1, 1, 1]} : vector<8x2x32xf32> to vector<1x2x32xf32>
    %387 = vector.shape_cast %386 : vector<1x2x32xf32> to vector<2x32xf32>
    %cst_68 = arith.constant dense<0.000000e+00> : vector<2x128xf32>
    %388 = tpu.matmul %387, %3, %cst_68 {dimension_numbers = #tpu.dot_dimension_numbers<[1], [0], [0], [1], [0, 0, 1, 1], [], []>} : vector<2x32xf32>, vector<32x128xf32>, vector<2x128xf32> -> vector<2x128xf32>
    %389 = vector.broadcast %8 : vector<1x128xf32> to vector<2x128xf32>
    %390 = arith.addf %388, %389 : vector<2x128xf32>
    %cst_69 = arith.constant dense<0.000000e+00> : vector<2x128xf32>
    %391 = tpu.matmul %385, %4, %cst_69 {dimension_numbers = #tpu.dot_dimension_numbers<[1], [0], [0], [1], [0, 0, 1, 1], [], []>} : vector<2x32xf32>, vector<32x128xf32>, vector<2x128xf32> -> vector<2x128xf32>
    %392 = vector.broadcast %9 : vector<1x128xf32> to vector<2x128xf32>
    %393 = arith.addf %391, %392 : vector<2x128xf32>
    %394 = vector.extract_strided_slice %390 {offsets = [0, 0], sizes = [2, 32], strides = [1, 1]} : vector<2x128xf32> to vector<2x32xf32>
    %395 = vector.extract_strided_slice %393 {offsets = [0, 0], sizes = [2, 32], strides = [1, 1]} : vector<2x128xf32> to vector<2x32xf32>
    %396 = arith.addf %394, %395 : vector<2x32xf32>
    %397 = arith.negf %396 : vector<2x32xf32>
    %398 = math.exp %397 : vector<2x32xf32>
    %cst_70 = arith.constant 1.000000e+00 : f32
    %399 = vector.broadcast %cst_70 : f32 to vector<2x32xf32>
    %400 = arith.addf %399, %398 : vector<2x32xf32>
    %401 = arith.divf %399, %400 : vector<2x32xf32>
    %402 = vector.extract_strided_slice %390 {offsets = [0, 32], sizes = [2, 32], strides = [1, 1]} : vector<2x128xf32> to vector<2x32xf32>
    %403 = vector.extract_strided_slice %393 {offsets = [0, 32], sizes = [2, 32], strides = [1, 1]} : vector<2x128xf32> to vector<2x32xf32>
    %404 = arith.addf %402, %403 : vector<2x32xf32>
    %405 = arith.negf %404 : vector<2x32xf32>
    %406 = math.exp %405 : vector<2x32xf32>
    %cst_71 = arith.constant 1.000000e+00 : f32
    %407 = vector.broadcast %cst_71 : f32 to vector<2x32xf32>
    %408 = arith.addf %407, %406 : vector<2x32xf32>
    %409 = arith.divf %407, %408 : vector<2x32xf32>
    %410 = vector.extract_strided_slice %390 {offsets = [0, 64], sizes = [2, 32], strides = [1, 1]} : vector<2x128xf32> to vector<2x32xf32>
    %411 = vector.extract_strided_slice %393 {offsets = [0, 64], sizes = [2, 32], strides = [1, 1]} : vector<2x128xf32> to vector<2x32xf32>
    %412 = arith.mulf %401, %411 : vector<2x32xf32>
    %413 = arith.addf %410, %412 : vector<2x32xf32>
    %414 = math.tanh %413 : vector<2x32xf32>
    %cst_72 = arith.constant 1.000000e+00 : f32
    %415 = vector.broadcast %cst_72 : f32 to vector<2x32xf32>
    %416 = arith.subf %415, %409 : vector<2x32xf32>
    %417 = arith.mulf %416, %414 : vector<2x32xf32>
    %418 = arith.mulf %409, %385 : vector<2x32xf32>
    %419 = arith.addf %417, %418 : vector<2x32xf32>
    %420 = vector.extract_strided_slice %0 {offsets = [3, 0, 0], sizes = [1, 2, 32], strides = [1, 1, 1]} : vector<8x2x32xf32> to vector<1x2x32xf32>
    %421 = vector.shape_cast %420 : vector<1x2x32xf32> to vector<2x32xf32>
    %cst_73 = arith.constant dense<0.000000e+00> : vector<2x128xf32>
    %422 = tpu.matmul %421, %3, %cst_73 {dimension_numbers = #tpu.dot_dimension_numbers<[1], [0], [0], [1], [0, 0, 1, 1], [], []>} : vector<2x32xf32>, vector<32x128xf32>, vector<2x128xf32> -> vector<2x128xf32>
    %423 = vector.broadcast %8 : vector<1x128xf32> to vector<2x128xf32>
    %424 = arith.addf %422, %423 : vector<2x128xf32>
    %cst_74 = arith.constant dense<0.000000e+00> : vector<2x128xf32>
    %425 = tpu.matmul %419, %4, %cst_74 {dimension_numbers = #tpu.dot_dimension_numbers<[1], [0], [0], [1], [0, 0, 1, 1], [], []>} : vector<2x32xf32>, vector<32x128xf32>, vector<2x128xf32> -> vector<2x128xf32>
    %426 = vector.broadcast %9 : vector<1x128xf32> to vector<2x128xf32>
    %427 = arith.addf %425, %426 : vector<2x128xf32>
    %428 = vector.extract_strided_slice %424 {offsets = [0, 0], sizes = [2, 32], strides = [1, 1]} : vector<2x128xf32> to vector<2x32xf32>
    %429 = vector.extract_strided_slice %427 {offsets = [0, 0], sizes = [2, 32], strides = [1, 1]} : vector<2x128xf32> to vector<2x32xf32>
    %430 = arith.addf %428, %429 : vector<2x32xf32>
    %431 = arith.negf %430 : vector<2x32xf32>
    %432 = math.exp %431 : vector<2x32xf32>
    %cst_75 = arith.constant 1.000000e+00 : f32
    %433 = vector.broadcast %cst_75 : f32 to vector<2x32xf32>
    %434 = arith.addf %433, %432 : vector<2x32xf32>
    %435 = arith.divf %433, %434 : vector<2x32xf32>
    %436 = vector.extract_strided_slice %424 {offsets = [0, 32], sizes = [2, 32], strides = [1, 1]} : vector<2x128xf32> to vector<2x32xf32>
    %437 = vector.extract_strided_slice %427 {offsets = [0, 32], sizes = [2, 32], strides = [1, 1]} : vector<2x128xf32> to vector<2x32xf32>
    %438 = arith.addf %436, %437 : vector<2x32xf32>
    %439 = arith.negf %438 : vector<2x32xf32>
    %440 = math.exp %439 : vector<2x32xf32>
    %cst_76 = arith.constant 1.000000e+00 : f32
    %441 = vector.broadcast %cst_76 : f32 to vector<2x32xf32>
    %442 = arith.addf %441, %440 : vector<2x32xf32>
    %443 = arith.divf %441, %442 : vector<2x32xf32>
    %444 = vector.extract_strided_slice %424 {offsets = [0, 64], sizes = [2, 32], strides = [1, 1]} : vector<2x128xf32> to vector<2x32xf32>
    %445 = vector.extract_strided_slice %427 {offsets = [0, 64], sizes = [2, 32], strides = [1, 1]} : vector<2x128xf32> to vector<2x32xf32>
    %446 = arith.mulf %435, %445 : vector<2x32xf32>
    %447 = arith.addf %444, %446 : vector<2x32xf32>
    %448 = math.tanh %447 : vector<2x32xf32>
    %cst_77 = arith.constant 1.000000e+00 : f32
    %449 = vector.broadcast %cst_77 : f32 to vector<2x32xf32>
    %450 = arith.subf %449, %443 : vector<2x32xf32>
    %451 = arith.mulf %450, %448 : vector<2x32xf32>
    %452 = arith.mulf %443, %419 : vector<2x32xf32>
    %453 = arith.addf %451, %452 : vector<2x32xf32>
    %454 = vector.extract_strided_slice %0 {offsets = [2, 0, 0], sizes = [1, 2, 32], strides = [1, 1, 1]} : vector<8x2x32xf32> to vector<1x2x32xf32>
    %455 = vector.shape_cast %454 : vector<1x2x32xf32> to vector<2x32xf32>
    %cst_78 = arith.constant dense<0.000000e+00> : vector<2x128xf32>
    %456 = tpu.matmul %455, %3, %cst_78 {dimension_numbers = #tpu.dot_dimension_numbers<[1], [0], [0], [1], [0, 0, 1, 1], [], []>} : vector<2x32xf32>, vector<32x128xf32>, vector<2x128xf32> -> vector<2x128xf32>
    %457 = vector.broadcast %8 : vector<1x128xf32> to vector<2x128xf32>
    %458 = arith.addf %456, %457 : vector<2x128xf32>
    %cst_79 = arith.constant dense<0.000000e+00> : vector<2x128xf32>
    %459 = tpu.matmul %453, %4, %cst_79 {dimension_numbers = #tpu.dot_dimension_numbers<[1], [0], [0], [1], [0, 0, 1, 1], [], []>} : vector<2x32xf32>, vector<32x128xf32>, vector<2x128xf32> -> vector<2x128xf32>
    %460 = vector.broadcast %9 : vector<1x128xf32> to vector<2x128xf32>
    %461 = arith.addf %459, %460 : vector<2x128xf32>
    %462 = vector.extract_strided_slice %458 {offsets = [0, 0], sizes = [2, 32], strides = [1, 1]} : vector<2x128xf32> to vector<2x32xf32>
    %463 = vector.extract_strided_slice %461 {offsets = [0, 0], sizes = [2, 32], strides = [1, 1]} : vector<2x128xf32> to vector<2x32xf32>
    %464 = arith.addf %462, %463 : vector<2x32xf32>
    %465 = arith.negf %464 : vector<2x32xf32>
    %466 = math.exp %465 : vector<2x32xf32>
    %cst_80 = arith.constant 1.000000e+00 : f32
    %467 = vector.broadcast %cst_80 : f32 to vector<2x32xf32>
    %468 = arith.addf %467, %466 : vector<2x32xf32>
    %469 = arith.divf %467, %468 : vector<2x32xf32>
    %470 = vector.extract_strided_slice %458 {offsets = [0, 32], sizes = [2, 32], strides = [1, 1]} : vector<2x128xf32> to vector<2x32xf32>
    %471 = vector.extract_strided_slice %461 {offsets = [0, 32], sizes = [2, 32], strides = [1, 1]} : vector<2x128xf32> to vector<2x32xf32>
    %472 = arith.addf %470, %471 : vector<2x32xf32>
    %473 = arith.negf %472 : vector<2x32xf32>
    %474 = math.exp %473 : vector<2x32xf32>
    %cst_81 = arith.constant 1.000000e+00 : f32
    %475 = vector.broadcast %cst_81 : f32 to vector<2x32xf32>
    %476 = arith.addf %475, %474 : vector<2x32xf32>
    %477 = arith.divf %475, %476 : vector<2x32xf32>
    %478 = vector.extract_strided_slice %458 {offsets = [0, 64], sizes = [2, 32], strides = [1, 1]} : vector<2x128xf32> to vector<2x32xf32>
    %479 = vector.extract_strided_slice %461 {offsets = [0, 64], sizes = [2, 32], strides = [1, 1]} : vector<2x128xf32> to vector<2x32xf32>
    %480 = arith.mulf %469, %479 : vector<2x32xf32>
    %481 = arith.addf %478, %480 : vector<2x32xf32>
    %482 = math.tanh %481 : vector<2x32xf32>
    %cst_82 = arith.constant 1.000000e+00 : f32
    %483 = vector.broadcast %cst_82 : f32 to vector<2x32xf32>
    %484 = arith.subf %483, %477 : vector<2x32xf32>
    %485 = arith.mulf %484, %482 : vector<2x32xf32>
    %486 = arith.mulf %477, %453 : vector<2x32xf32>
    %487 = arith.addf %485, %486 : vector<2x32xf32>
    %488 = vector.extract_strided_slice %0 {offsets = [1, 0, 0], sizes = [1, 2, 32], strides = [1, 1, 1]} : vector<8x2x32xf32> to vector<1x2x32xf32>
    %489 = vector.shape_cast %488 : vector<1x2x32xf32> to vector<2x32xf32>
    %cst_83 = arith.constant dense<0.000000e+00> : vector<2x128xf32>
    %490 = tpu.matmul %489, %3, %cst_83 {dimension_numbers = #tpu.dot_dimension_numbers<[1], [0], [0], [1], [0, 0, 1, 1], [], []>} : vector<2x32xf32>, vector<32x128xf32>, vector<2x128xf32> -> vector<2x128xf32>
    %491 = vector.broadcast %8 : vector<1x128xf32> to vector<2x128xf32>
    %492 = arith.addf %490, %491 : vector<2x128xf32>
    %cst_84 = arith.constant dense<0.000000e+00> : vector<2x128xf32>
    %493 = tpu.matmul %487, %4, %cst_84 {dimension_numbers = #tpu.dot_dimension_numbers<[1], [0], [0], [1], [0, 0, 1, 1], [], []>} : vector<2x32xf32>, vector<32x128xf32>, vector<2x128xf32> -> vector<2x128xf32>
    %494 = vector.broadcast %9 : vector<1x128xf32> to vector<2x128xf32>
    %495 = arith.addf %493, %494 : vector<2x128xf32>
    %496 = vector.extract_strided_slice %492 {offsets = [0, 0], sizes = [2, 32], strides = [1, 1]} : vector<2x128xf32> to vector<2x32xf32>
    %497 = vector.extract_strided_slice %495 {offsets = [0, 0], sizes = [2, 32], strides = [1, 1]} : vector<2x128xf32> to vector<2x32xf32>
    %498 = arith.addf %496, %497 : vector<2x32xf32>
    %499 = arith.negf %498 : vector<2x32xf32>
    %500 = math.exp %499 : vector<2x32xf32>
    %cst_85 = arith.constant 1.000000e+00 : f32
    %501 = vector.broadcast %cst_85 : f32 to vector<2x32xf32>
    %502 = arith.addf %501, %500 : vector<2x32xf32>
    %503 = arith.divf %501, %502 : vector<2x32xf32>
    %504 = vector.extract_strided_slice %492 {offsets = [0, 32], sizes = [2, 32], strides = [1, 1]} : vector<2x128xf32> to vector<2x32xf32>
    %505 = vector.extract_strided_slice %495 {offsets = [0, 32], sizes = [2, 32], strides = [1, 1]} : vector<2x128xf32> to vector<2x32xf32>
    %506 = arith.addf %504, %505 : vector<2x32xf32>
    %507 = arith.negf %506 : vector<2x32xf32>
    %508 = math.exp %507 : vector<2x32xf32>
    %cst_86 = arith.constant 1.000000e+00 : f32
    %509 = vector.broadcast %cst_86 : f32 to vector<2x32xf32>
    %510 = arith.addf %509, %508 : vector<2x32xf32>
    %511 = arith.divf %509, %510 : vector<2x32xf32>
    %512 = vector.extract_strided_slice %492 {offsets = [0, 64], sizes = [2, 32], strides = [1, 1]} : vector<2x128xf32> to vector<2x32xf32>
    %513 = vector.extract_strided_slice %495 {offsets = [0, 64], sizes = [2, 32], strides = [1, 1]} : vector<2x128xf32> to vector<2x32xf32>
    %514 = arith.mulf %503, %513 : vector<2x32xf32>
    %515 = arith.addf %512, %514 : vector<2x32xf32>
    %516 = math.tanh %515 : vector<2x32xf32>
    %cst_87 = arith.constant 1.000000e+00 : f32
    %517 = vector.broadcast %cst_87 : f32 to vector<2x32xf32>
    %518 = arith.subf %517, %511 : vector<2x32xf32>
    %519 = arith.mulf %518, %516 : vector<2x32xf32>
    %520 = arith.mulf %511, %487 : vector<2x32xf32>
    %521 = arith.addf %519, %520 : vector<2x32xf32>
    %522 = vector.extract_strided_slice %0 {offsets = [0, 0, 0], sizes = [1, 2, 32], strides = [1, 1, 1]} : vector<8x2x32xf32> to vector<1x2x32xf32>
    %523 = vector.shape_cast %522 : vector<1x2x32xf32> to vector<2x32xf32>
    %cst_88 = arith.constant dense<0.000000e+00> : vector<2x128xf32>
    %524 = tpu.matmul %523, %3, %cst_88 {dimension_numbers = #tpu.dot_dimension_numbers<[1], [0], [0], [1], [0, 0, 1, 1], [], []>} : vector<2x32xf32>, vector<32x128xf32>, vector<2x128xf32> -> vector<2x128xf32>
    %525 = vector.broadcast %8 : vector<1x128xf32> to vector<2x128xf32>
    %526 = arith.addf %524, %525 : vector<2x128xf32>
    %cst_89 = arith.constant dense<0.000000e+00> : vector<2x128xf32>
    %527 = tpu.matmul %521, %4, %cst_89 {dimension_numbers = #tpu.dot_dimension_numbers<[1], [0], [0], [1], [0, 0, 1, 1], [], []>} : vector<2x32xf32>, vector<32x128xf32>, vector<2x128xf32> -> vector<2x128xf32>
    %528 = vector.broadcast %9 : vector<1x128xf32> to vector<2x128xf32>
    %529 = arith.addf %527, %528 : vector<2x128xf32>
    %530 = vector.extract_strided_slice %526 {offsets = [0, 0], sizes = [2, 32], strides = [1, 1]} : vector<2x128xf32> to vector<2x32xf32>
    %531 = vector.extract_strided_slice %529 {offsets = [0, 0], sizes = [2, 32], strides = [1, 1]} : vector<2x128xf32> to vector<2x32xf32>
    %532 = arith.addf %530, %531 : vector<2x32xf32>
    %533 = arith.negf %532 : vector<2x32xf32>
    %534 = math.exp %533 : vector<2x32xf32>
    %cst_90 = arith.constant 1.000000e+00 : f32
    %535 = vector.broadcast %cst_90 : f32 to vector<2x32xf32>
    %536 = arith.addf %535, %534 : vector<2x32xf32>
    %537 = arith.divf %535, %536 : vector<2x32xf32>
    %538 = vector.extract_strided_slice %526 {offsets = [0, 32], sizes = [2, 32], strides = [1, 1]} : vector<2x128xf32> to vector<2x32xf32>
    %539 = vector.extract_strided_slice %529 {offsets = [0, 32], sizes = [2, 32], strides = [1, 1]} : vector<2x128xf32> to vector<2x32xf32>
    %540 = arith.addf %538, %539 : vector<2x32xf32>
    %541 = arith.negf %540 : vector<2x32xf32>
    %542 = math.exp %541 : vector<2x32xf32>
    %cst_91 = arith.constant 1.000000e+00 : f32
    %543 = vector.broadcast %cst_91 : f32 to vector<2x32xf32>
    %544 = arith.addf %543, %542 : vector<2x32xf32>
    %545 = arith.divf %543, %544 : vector<2x32xf32>
    %546 = vector.extract_strided_slice %526 {offsets = [0, 64], sizes = [2, 32], strides = [1, 1]} : vector<2x128xf32> to vector<2x32xf32>
    %547 = vector.extract_strided_slice %529 {offsets = [0, 64], sizes = [2, 32], strides = [1, 1]} : vector<2x128xf32> to vector<2x32xf32>
    %548 = arith.mulf %537, %547 : vector<2x32xf32>
    %549 = arith.addf %546, %548 : vector<2x32xf32>
    %550 = math.tanh %549 : vector<2x32xf32>
    %cst_92 = arith.constant 1.000000e+00 : f32
    %551 = vector.broadcast %cst_92 : f32 to vector<2x32xf32>
    %552 = arith.subf %551, %545 : vector<2x32xf32>
    %553 = arith.mulf %552, %550 : vector<2x32xf32>
    %554 = arith.mulf %545, %521 : vector<2x32xf32>
    %555 = arith.addf %553, %554 : vector<2x32xf32>
    %556 = vector.shape_cast %45 : vector<2x32xf32> to vector<1x2x32xf32>
    %557 = vector.shape_cast %79 : vector<2x32xf32> to vector<1x2x32xf32>
    %558 = vector.shape_cast %113 : vector<2x32xf32> to vector<1x2x32xf32>
    %559 = vector.shape_cast %147 : vector<2x32xf32> to vector<1x2x32xf32>
    %560 = vector.shape_cast %181 : vector<2x32xf32> to vector<1x2x32xf32>
    %561 = vector.shape_cast %215 : vector<2x32xf32> to vector<1x2x32xf32>
    %562 = vector.shape_cast %249 : vector<2x32xf32> to vector<1x2x32xf32>
    %563 = vector.shape_cast %283 : vector<2x32xf32> to vector<1x2x32xf32>
    %564 = tpu.concatenate %556, %557, %558, %559, %560, %561, %562, %563 in 0 : vector<1x2x32xf32>, vector<1x2x32xf32>, vector<1x2x32xf32>, vector<1x2x32xf32>, vector<1x2x32xf32>, vector<1x2x32xf32>, vector<1x2x32xf32>, vector<1x2x32xf32> -> vector<8x2x32xf32>
    %565 = vector.shape_cast %555 : vector<2x32xf32> to vector<1x2x32xf32>
    %566 = vector.shape_cast %521 : vector<2x32xf32> to vector<1x2x32xf32>
    %567 = vector.shape_cast %487 : vector<2x32xf32> to vector<1x2x32xf32>
    %568 = vector.shape_cast %453 : vector<2x32xf32> to vector<1x2x32xf32>
    %569 = vector.shape_cast %419 : vector<2x32xf32> to vector<1x2x32xf32>
    %570 = vector.shape_cast %385 : vector<2x32xf32> to vector<1x2x32xf32>
    %571 = vector.shape_cast %351 : vector<2x32xf32> to vector<1x2x32xf32>
    %572 = vector.shape_cast %317 : vector<2x32xf32> to vector<1x2x32xf32>
    %573 = tpu.concatenate %565, %566, %567, %568, %569, %570, %571, %572 in 0 : vector<1x2x32xf32>, vector<1x2x32xf32>, vector<1x2x32xf32>, vector<1x2x32xf32>, vector<1x2x32xf32>, vector<1x2x32xf32>, vector<1x2x32xf32>, vector<1x2x32xf32> -> vector<8x2x32xf32>
    %574 = tpu.concatenate %564, %573 in 2 : vector<8x2x32xf32>, vector<8x2x32xf32> -> vector<8x2x64xf32>
    %c0_93 = arith.constant 0 : index
    %c0_94 = arith.constant 0 : index
    %c0_95 = arith.constant 0 : index
    %575 = vector.load %arg9[%c0_93, %c0_94, %c0_95] : memref<8x2x64xf32, #tpu.memory_space<vmem>>, vector<8x2x64xf32>
    tpu.vector_store %arg9[%c0_93, %c0_94, %c0_95], %574 {strides = array<i32>} : memref<8x2x64xf32, #tpu.memory_space<vmem>>, vector<8x2x64xf32>,
    %576 = tpu.concatenate %283, %555 in 1 : vector<2x32xf32>, vector<2x32xf32> -> vector<2x64xf32>
    %c0_96 = arith.constant 0 : index
    %c0_97 = arith.constant 0 : index
    %577 = vector.load %arg7[%c0_96, %c0_97] : memref<64x32xf32, #tpu.memory_space<vmem>>, vector<64x32xf32>
    %cst_98 = arith.constant dense<0.000000e+00> : vector<2x32xf32>
    %578 = tpu.matmul %576, %577, %cst_98 {dimension_numbers = #tpu.dot_dimension_numbers<[1], [0], [0], [1], [0, 0, 1, 1], [], []>} : vector<2x64xf32>, vector<64x32xf32>, vector<2x32xf32> -> vector<2x32xf32>
    %c0_99 = arith.constant 0 : index
    %c0_100 = arith.constant 0 : index
    %579 = vector.load %arg8[%c0_99, %c0_100] : memref<1x32xf32, #tpu.memory_space<vmem>>, vector<1x32xf32>
    %580 = vector.broadcast %579 : vector<1x32xf32> to vector<2x32xf32>
    %581 = arith.addf %578, %580 : vector<2x32xf32>
    %582 = math.tanh %581 : vector<2x32xf32>
    %c0_101 = arith.constant 0 : index
    %c0_102 = arith.constant 0 : index
    %583 = vector.load %arg10[%c0_101, %c0_102] : memref<2x32xf32, #tpu.memory_space<vmem>>, vector<2x32xf32>
    tpu.vector_store %arg10[%c0_101, %c0_102], %582 {strides = array<i32>} : memref<2x32xf32, #tpu.memory_space<vmem>>, vector<2x32xf32>,
    return
  }
  func.func @transform_0(%arg0: i32) -> (i32, i32, i32) {
    %c0_i32 = arith.constant 0 : i32
    %c0_i32_0 = arith.constant 0 : i32
    %c0_i32_1 = arith.constant 0 : i32
    %c0_i32_2 = arith.constant 0 : i32
    return %c0_i32, %c0_i32_0, %c0_i32_1 : i32, i32, i32
  }
  func.func @transform_1(%arg0: i32) -> (i32, i32) {
    %c0_i32 = arith.constant 0 : i32
    %c0_i32_0 = arith.constant 0 : i32
    %c0_i32_1 = arith.constant 0 : i32
    return %c0_i32, %c0_i32_0 : i32, i32
  }
  func.func @transform_2(%arg0: i32) -> (i32, i32) {
    %c0_i32 = arith.constant 0 : i32
    %c0_i32_0 = arith.constant 0 : i32
    %c0_i32_1 = arith.constant 0 : i32
    return %c0_i32, %c0_i32_0 : i32, i32
  }
  func.func @transform_3(%arg0: i32) -> (i32, i32) {
    %c0_i32 = arith.constant 0 : i32
    %c0_i32_0 = arith.constant 0 : i32
    %c0_i32_1 = arith.constant 0 : i32
    return %c0_i32, %c0_i32_0 : i32, i32
  }
  func.func @transform_4(%arg0: i32) -> (i32, i32) {
    %c0_i32 = arith.constant 0 : i32
    %c0_i32_0 = arith.constant 0 : i32
    %c0_i32_1 = arith.constant 0 : i32
    return %c0_i32, %c0_i32_0 : i32, i32
  }
  func.func @transform_5(%arg0: i32) -> (i32, i32) {
    %c0_i32 = arith.constant 0 : i32
    %c0_i32_0 = arith.constant 0 : i32
    %c0_i32_1 = arith.constant 0 : i32
    return %c0_i32, %c0_i32_0 : i32, i32
  }
  func.func @transform_6(%arg0: i32) -> (i32, i32) {
    %c0_i32 = arith.constant 0 : i32
    %c0_i32_0 = arith.constant 0 : i32
    %c0_i32_1 = arith.constant 0 : i32
    return %c0_i32, %c0_i32_0 : i32, i32
  }
  func.func @transform_7(%arg0: i32) -> (i32, i32) {
    %c0_i32 = arith.constant 0 : i32
    %c0_i32_0 = arith.constant 0 : i32
    %c0_i32_1 = arith.constant 0 : i32
    return %c0_i32, %c0_i32_0 : i32, i32
  }
  func.func @transform_8(%arg0: i32) -> (i32, i32, i32) {
    %c0_i32 = arith.constant 0 : i32
    %c0_i32_0 = arith.constant 0 : i32
    %c0_i32_1 = arith.constant 0 : i32
    %c0_i32_2 = arith.constant 0 : i32
    return %c0_i32, %c0_i32_0, %c0_i32_1 : i32, i32, i32
  }
  func.func @transform_9(%arg0: i32) -> (i32, i32) {
    %c0_i32 = arith.constant 0 : i32
    %c0_i32_0 = arith.constant 0 : i32
    %c0_i32_1 = arith.constant 0 : i32
    return %c0_i32, %c0_i32_0 : i32, i32
  }
}

</mosaic_0001>

<llo_original>
// kernel: encoder_forward.1
$region0: #{encoder_forward.1}
  #allocation0 [shape = 'u32[]', space=smem, size = 0x4, offset = 0x4, fixed_abs, tag = 'smem constant byte address 0x4 - core index']
  #allocation1 [shape = 'u32[144,128]{1,0:T(1,128)}', space=vmem, size = 0x12000, scoped, tag = 'internal scratch']
  %s0 = inlined_call_operand.vmem [shape: f32[8,2,32], index: 0, kind: input, shape index: {}]
  %s1 = inlined_call_operand.vmem [shape: f32[32,128], index: 1, kind: input, shape index: {}]
  %s2 = inlined_call_operand.vmem [shape: f32[32,128], index: 2, kind: input, shape index: {}]
  %s3 = inlined_call_operand.vmem [shape: f32[32,128], index: 3, kind: input, shape index: {}]
  %s4 = inlined_call_operand.vmem [shape: f32[32,128], index: 4, kind: input, shape index: {}]
  %s5 = inlined_call_operand.vmem [shape: f32[4,128], index: 5, kind: input, shape index: {}]
  %s6 = inlined_call_operand.vmem [shape: f32[64,32], index: 6, kind: input, shape index: {}]
  %s7 = inlined_call_operand.vmem [shape: f32[1,32], index: 7, kind: input, shape index: {}]
  %s8 = inlined_call_operand.hbm [shape: f32[8,2,64], index: 8, kind: output, shape index: {0}]
  %s9 = inlined_call_operand.hbm [shape: f32[2,32], index: 9, kind: output, shape index: {1}]
  %10 = xla_tuple %s8, %s9
  %s11 = sld [smem:[#allocation0]]
  $region50: #{encoder_forward.1} parent=0
    _
  %s13 = ssub.s32 1, %s11
  %s14 = scalar_select 0, %s13, %s11
  $region1: #{encoder_forward.1} parent=0
    #allocation2 [shape = 'u8[8192]{0}', space=vmem, size = 0x2000, scoped, tag = 'output window, operand 0, single buffered']
    #allocation3 [shape = 's32[1]{0}', space=sflag, size = 0x4, scoped, tag = 'scoped memory for encoder_forward.1']
    #allocation4 [shape = 'u8[1024]{0}', space=vmem, size = 0x400, scoped, tag = 'output window, operand 1, single buffered']
    #allocation5 [shape = 's32[1]{0}', space=sflag, size = 0x4, scoped, tag = 'scoped memory for encoder_forward.1']
    %15 = vsyncpa [#allocation3], 0
    %16 = vsyncpa [#allocation5], 0
    // Predicated region
    $region2: #{encoder_forward.1} parent=1 // pred_check
      _
    $region3: #{encoder_forward.1} parent=1 // pred_check_branch
      %18 = sbr.rel (0) target = $region5
    $region4: #{encoder_forward.1} parent=1 // pred_region
      _
    $region5: #{encoder_forward.1} parent=1 // pred_fallthru
      _
    // Predicated region
    $region6: #{encoder_forward.1} parent=1 // pred_check
      _
    $region7: #{encoder_forward.1} parent=1 // pred_check_branch
      %20 = sbr.rel (0) target = $region9
    $region8: #{encoder_forward.1} parent=1 // pred_region
      _
    $region9: #{encoder_forward.1} parent=1 // pred_fallthru
      _
    // Predicated region
    $region10: #{encoder_forward.1} parent=1 // pred_check
      _
    $region11: #{encoder_forward.1} parent=1 // pred_check_branch
      %22 = sbr.rel (0) target = $region13
    $region12: #{encoder_forward.1} parent=1 // pred_region
      _
    $region13: #{encoder_forward.1} parent=1 // pred_fallthru
      _
    // Predicated region
    $region14: #{encoder_forward.1} parent=1 // pred_check
      _
    $region15: #{encoder_forward.1} parent=1 // pred_check_branch
      %24 = sbr.rel (0) target = $region17
    $region16: #{encoder_forward.1} parent=1 // pred_region
      _
    $region17: #{encoder_forward.1} parent=1 // pred_fallthru
      _
    // Predicated region
    $region18: #{encoder_forward.1} parent=1 // pred_check
      _
    $region19: #{encoder_forward.1} parent=1 // pred_check_branch
      %26 = sbr.rel (0) target = $region21
    $region20: #{encoder_forward.1} parent=1 // pred_region
      _
    $region21: #{encoder_forward.1} parent=1 // pred_fallthru
      _
    // Predicated region
    $region22: #{encoder_forward.1} parent=1 // pred_check
      _
    $region23: #{encoder_forward.1} parent=1 // pred_check_branch
      %28 = sbr.rel (0) target = $region25
    $region24: #{encoder_forward.1} parent=1 // pred_region
      _
    $region25: #{encoder_forward.1} parent=1 // pred_fallthru
      _
    // Predicated region
    $region26: #{encoder_forward.1} parent=1 // pred_check
      _
    $region27: #{encoder_forward.1} parent=1 // pred_check_branch
      %30 = sbr.rel (0) target = $region29
    $region28: #{encoder_forward.1} parent=1 // pred_region
      _
    $region29: #{encoder_forward.1} parent=1 // pred_fallthru
      _
    // Predicated region
    $region30: #{encoder_forward.1} parent=1 // pred_check
      _
    $region31: #{encoder_forward.1} parent=1 // pred_check_branch
      %32 = sbr.rel (0) target = $region33
    $region32: #{encoder_forward.1} parent=1 // pred_region
      _
    $region33: #{encoder_forward.1} parent=1 // pred_fallthru
      _
    %v33 = vld [vmem:[%s0] sm:$0x3]
    %v34 = vld [vmem:[%s0 + $0x2] sm:$0x3]
    %v35 = vld [vmem:[%s0 + $0x4] sm:$0x3]
    %v36 = vld [vmem:[%s0 + $0x6] sm:$0x3]
    %v37 = vld [vmem:[%s0 + $0x8] sm:$0x3]
    %v38 = vld [vmem:[%s0 + $0xa] sm:$0x3]
    %v39 = vld [vmem:[%s0 + $0xc] sm:$0x3]
    %v40 = vld [vmem:[%s0 + $0xe] sm:$0x3]
    %v41 = vld [vmem:[%s1] sm:$0xff]
    %v42 = vld [vmem:[%s1 + $0x8] sm:$0xff]
    %v43 = vld [vmem:[%s1 + $0x10] sm:$0xff]
    %v44 = vld [vmem:[%s1 + $0x18] sm:$0xff]
    %v45 = vld [vmem:[%s2] sm:$0xff]
    %v46 = vld [vmem:[%s2 + $0x8] sm:$0xff]
    %v47 = vld [vmem:[%s2 + $0x10] sm:$0xff]
    %v48 = vld [vmem:[%s2 + $0x18] sm:$0xff]
    %v49 = vld [vmem:[%s3] sm:$0xff]
    %v50 = vld [vmem:[%s3 + $0x8] sm:$0xff]
    %v51 = vld [vmem:[%s3 + $0x10] sm:$0xff]
    %v52 = vld [vmem:[%s3 + $0x18] sm:$0xff]
    %v53 = vld [vmem:[%s4] sm:$0xff]
    %v54 = vld [vmem:[%s4 + $0x8] sm:$0xff]
    %v55 = vld [vmem:[%s4 + $0x10] sm:$0xff]
    %v56 = vld [vmem:[%s4 + $0x18] sm:$0xff]
    %v57 = vld [vmem:[%s5] sm:$0xf]
    %v58 = vlaneseq
    %v59 = vshrl.u32 %v58, 7
    %v60 = vsub.s32 0, %v59
    %v61 = vrot.slane %v57, %v60
    %vm62 = vcmask 261120
    %v64 = vsel %vm62, %v33, 0
    %66 = vmatprep.subr.mxu0 0.0
    %67 = vmatpush1.msra.mxu0 %v41
    %68 = vmatprep.subr.mxu0 0.0
    %69 = vmatpush1.msra.mxu0 %v42
    %70 = vmatprep.subr.mxu0 0.0
    %71 = vmatpush1.msra.mxu0 %v43
    %72 = vmatprep.subr.mxu0 0.0
    %73 = vmatpush1.msra.mxu0 %v44
    %74 = vmatprep.subr.mxu0 0.0
    %75 = vmatpush1.msra.mxu0 0.0
    %76 = vmatprep.subr.mxu0 0.0
    %77 = vmatpush1.msra.mxu0 0.0
    %78 = vmatprep.subr.mxu0 0.0
    %79 = vmatpush1.msra.mxu0 0.0
    %80 = vmatprep.subr.mxu0 0.0
    %81 = vmatpush1.msra.mxu0 0.0
    %82 = vmatprep.subr.mxu0 0.0
    %83 = vmatpush1.msra.mxu0 0.0
    %84 = vmatprep.subr.mxu0 0.0
    %85 = vmatpush1.msra.mxu0 0.0
    %86 = vmatprep.subr.mxu0 0.0
    %87 = vmatpush1.msra.mxu0 0.0
    %88 = vmatprep.subr.mxu0 0.0
    %89 = vmatpush1.msra.mxu0 0.0
    %90 = vmatprep.subr.mxu0 0.0
    %91 = vmatpush1.msra.mxu0 0.0
    %92 = vmatprep.subr.mxu0 0.0
    %93 = vmatpush1.msra.mxu0 0.0
    %94 = vmatprep.subr.mxu0 0.0
    %95 = vmatpush1.msra.mxu0 0.0
    %96 = vmatprep.subr.mxu0 0.0
    %97 = vmatpush1.msra.mxu0 0.0
    %98 = vmatprep.subr.mxu0 0.0
    %99 = vmatpush1.msra.mxu0 0.0
    %100 = vmatprep.subr.mxu0 0.0
    %101 = vmatpush1.msra.mxu0 0.0
    %102 = vmatprep.subr.mxu0 0.0
    %103 = vmatpush1.msra.mxu0 0.0
    %104 = vmatprep.subr.mxu0 0.0
    %105 = vmatpush1.msra.mxu0 0.0
    %106 = vmatprep.subr.mxu0 0.0
    %107 = vmatpush1.msra.mxu0 0.0
    %108 = vmatprep.subr.mxu0 0.0
    %109 = vmatpush1.msra.mxu0 0.0
    %110 = vmatprep.subr.mxu0 0.0
    %111 = vmatpush1.msra.mxu0 0.0
    %112 = vmatprep.subr.mxu0 0.0
    %113 = vmatpush1.msra.mxu0 0.0
    %114 = vmatprep.subr.mxu0 0.0
    %115 = vmatpush1.msra.mxu0 0.0
    %116 = vmatprep.subr.mxu0 0.0
    %117 = vmatpush1.msra.mxu0 0.0
    %118 = vmatprep.subr.mxu0 0.0
    %119 = vmatpush1.msra.mxu0 0.0
    %120 = vmatprep.subr.mxu0 0.0
    %121 = vmatpush1.msra.mxu0 0.0
    %122 = vmatprep.subr.mxu0 0.0
    %123 = vmatpush1.msra.mxu0 0.0
    %124 = vmatprep.subr.mxu0 0.0
    %125 = vmatpush1.msra.mxu0 0.0
    %126 = vmatprep.subr.mxu0 0.0
    %127 = vmatpush1.msra.mxu0 0.0
    %128 = vmatprep.subr.mxu0 0.0
    %129 = vmatpush1.msra.mxu0 0.0
    %130 = vmatprep.mubr.f32.mxu0 0.0
    %131 = vmatmul.mubr.f32.gmra.mrb[0].mxu0 %v64
    %v132 = vpop.f32.mrb[0].mxu0
    %v133 = vadd.f32 %v61, %v132
    %v134 = vpop.f32.mrb[0].mxu0
    %135 = vdwg.mxu0
    %v136 = vlaneseq
    %v137 = vshrl.u32 %v136, 7
    %v138 = vsub.s32 1, %v137
    %v139 = vrot.slane %v57, %v138
    %v141 = vsel %vm62, 0.0, 0
    %143 = vmatprep.subr.mxu0 0.0
    %144 = vmatpush1.msra.mxu0 %v45
    %145 = vmatprep.subr.mxu0 0.0
    %146 = vmatpush1.msra.mxu0 %v46
    %147 = vmatprep.subr.mxu0 0.0
    %148 = vmatpush1.msra.mxu0 %v47
    %149 = vmatprep.subr.mxu0 0.0
    %150 = vmatpush1.msra.mxu0 %v48
    %151 = vmatprep.subr.mxu0 0.0
    %152 = vmatpush1.msra.mxu0 0.0
    %153 = vmatprep.subr.mxu0 0.0
    %154 = vmatpush1.msra.mxu0 0.0
    %155 = vmatprep.subr.mxu0 0.0
    %156 = vmatpush1.msra.mxu0 0.0
    %157 = vmatprep.subr.mxu0 0.0
    %158 = vmatpush1.msra.mxu0 0.0
    %159 = vmatprep.subr.mxu0 0.0
    %160 = vmatpush1.msra.mxu0 0.0
    %161 = vmatprep.subr.mxu0 0.0
    %162 = vmatpush1.msra.mxu0 0.0
    %163 = vmatprep.subr.mxu0 0.0
    %164 = vmatpush1.msra.mxu0 0.0
    %165 = vmatprep.subr.mxu0 0.0
    %166 = vmatpush1.msra.mxu0 0.0
    %167 = vmatprep.subr.mxu0 0.0
    %168 = vmatpush1.msra.mxu0 0.0
    %169 = vmatprep.subr.mxu0 0.0
    %170 = vmatpush1.msra.mxu0 0.0
    %171 = vmatprep.subr.mxu0 0.0
    %172 = vmatpush1.msra.mxu0 0.0
    %173 = vmatprep.subr.mxu0 0.0
    %174 = vmatpush1.msra.mxu0 0.0
    %175 = vmatprep.subr.mxu0 0.0
    %176 = vmatpush1.msra.mxu0 0.0
    %177 = vmatprep.subr.mxu0 0.0
    %178 = vmatpush1.msra.mxu0 0.0
    %179 = vmatprep.subr.mxu0 0.0
    %180 = vmatpush1.msra.mxu0 0.0
    %181 = vmatprep.subr.mxu0 0.0
    %182 = vmatpush1.msra.mxu0 0.0
    %183 = vmatprep.subr.mxu0 0.0
    %184 = vmatpush1.msra.mxu0 0.0
    %185 = vmatprep.subr.mxu0 0.0
    %186 = vmatpush1.msra.mxu0 0.0
    %187 = vmatprep.subr.mxu0 0.0
    %188 = vmatpush1.msra.mxu0 0.0
    %189 = vmatprep.subr.mxu0 0.0
    %190 = vmatpush1.msra.mxu0 0.0
    %191 = vmatprep.subr.mxu0 0.0
    %192 = vmatpush1.msra.mxu0 0.0
    %193 = vmatprep.subr.mxu0 0.0
    %194 = vmatpush1.msra.mxu0 0.0
    %195 = vmatprep.subr.mxu0 0.0
    %196 = vmatpush1.msra.mxu0 0.0
    %197 = vmatprep.subr.mxu0 0.0
    %198 = vmatpush1.msra.mxu0 0.0
    %199 = vmatprep.subr.mxu0 0.0
    %200 = vmatpush1.msra.mxu0 0.0
    %201 = vmatprep.subr.mxu0 0.0
    %202 = vmatpush1.msra.mxu0 0.0
    %203 = vmatprep.subr.mxu0 0.0
    %204 = vmatpush1.msra.mxu0 0.0
    %205 = vmatprep.subr.mxu0 0.0
    %206 = vmatpush1.msra.mxu0 0.0
    %207 = vmatprep.mubr.f32.mxu0 0.0
    %208 = vmatmul.mubr.f32.gmra.mrb[0].mxu0 %v141
    %v209 = vpop.f32.mrb[0].mxu0
    %v210 = vadd.f32 %v139, %v209
    %v211 = vpop.f32.mrb[0].mxu0
    %212 = vdwg.mxu0
    %v213 = vadd.f32 %v133, %v210
    %v214 = vxor.u32 %v213, 2147483648
    %v215 = vmul.f32 %v214, 1.442695
    %v216 = vpow.pop %v215
    %v217 = vadd.f32 %v216, 1.0
    %v218 = vrcp.pop %v217
    %v219 = vmul.f32 1.0, %v218
    %221 = vrot.lane.b32.xlu0 %v210, 64
    %v222 = vpop.permute.xlu0 %221
    %v224 = vmul.f32 %v219, %v222
    %226 = vrot.lane.b32.xlu0 %v224, 64
    %v227 = vpop.permute.xlu0 %226
    %v229 = vadd.f32 %v133, %v227
    %v230 = vtanh.pop %v229
    %v231 = vsub.f32 1.0, %v219
    %233 = vrot.lane.b32.xlu0 %v230, 96
    %v234 = vpop.permute.xlu0 %233
    %v236 = vmul.f32 %v231, %v234
    %v237 = vmul.f32 %v219, 0.0
    %v238 = vadd.f32 %v236, %v237
    %v240 = vsel %vm62, %v34, 0
    %242 = vmatprep.subr.mxu0 0.0
    %243 = vmatpush1.msra.mxu0 %v41
    %244 = vmatprep.subr.mxu0 0.0
    %245 = vmatpush1.msra.mxu0 %v42
    %246 = vmatprep.subr.mxu0 0.0
    %247 = vmatpush1.msra.mxu0 %v43
    %248 = vmatprep.subr.mxu0 0.0
    %249 = vmatpush1.msra.mxu0 %v44
    %250 = vmatprep.subr.mxu0 0.0
    %251 = vmatpush1.msra.mxu0 0.0
    %252 = vmatprep.subr.mxu0 0.0
    %253 = vmatpush1.msra.mxu0 0.0
    %254 = vmatprep.subr.mxu0 0.0
    %255 = vmatpush1.msra.mxu0 0.0
    %256 = vmatprep.subr.mxu0 0.0
    %257 = vmatpush1.msra.mxu0 0.0
    %258 = vmatprep.subr.mxu0 0.0
    %259 = vmatpush1.msra.mxu0 0.0
    %260 = vmatprep.subr.mxu0 0.0
    %261 = vmatpush1.msra.mxu0 0.0
    %262 = vmatprep.subr.mxu0 0.0
    %263 = vmatpush1.msra.mxu0 0.0
    %264 = vmatprep.subr.mxu0 0.0
    %265 = vmatpush1.msra.mxu0 0.0
    %266 = vmatprep.subr.mxu0 0.0
    %267 = vmatpush1.msra.mxu0 0.0
    %268 = vmatprep.subr.mxu0 0.0
    %269 = vmatpush1.msra.mxu0 0.0
    %270 = vmatprep.subr.mxu0 0.0
    %271 = vmatpush1.msra.mxu0 0.0
    %272 = vmatprep.subr.mxu0 0.0
    %273 = vmatpush1.msra.mxu0 0.0
    %274 = vmatprep.subr.mxu0 0.0
    %275 = vmatpush1.msra.mxu0 0.0
    %276 = vmatprep.subr.mxu0 0.0
    %277 = vmatpush1.msra.mxu0 0.0
    %278 = vmatprep.subr.mxu0 0.0
    %279 = vmatpush1.msra.mxu0 0.0
    %280 = vmatprep.subr.mxu0 0.0
    %281 = vmatpush1.msra.mxu0 0.0
    %282 = vmatprep.subr.mxu0 0.0
    %283 = vmatpush1.msra.mxu0 0.0
    %284 = vmatprep.subr.mxu0 0.0
    %285 = vmatpush1.msra.mxu0 0.0
    %286 = vmatprep.subr.mxu0 0.0
    %287 = vmatpush1.msra.mxu0 0.0
    %288 = vmatprep.subr.mxu0 0.0
    %289 = vmatpush1.msra.mxu0 0.0
    %290 = vmatprep.subr.mxu0 0.0
    %291 = vmatpush1.msra.mxu0 0.0
    %292 = vmatprep.subr.mxu0 0.0
    %293 = vmatpush1.msra.mxu0 0.0
    %294 = vmatprep.subr.mxu0 0.0
    %295 = vmatpush1.msra.mxu0 0.0
    %296 = vmatprep.subr.mxu0 0.0
    %297 = vmatpush1.msra.mxu0 0.0
    %298 = vmatprep.subr.mxu0 0.0
    %299 = vmatpush1.msra.mxu0 0.0
    %300 = vmatprep.subr.mxu0 0.0
    %301 = vmatpush1.msra.mxu0 0.0
    %302 = vmatprep.subr.mxu0 0.0
    %303 = vmatpush1.msra.mxu0 0.0
    %304 = vmatprep.subr.mxu0 0.0
    %305 = vmatpush1.msra.mxu0 0.0
    %306 = vmatprep.mubr.f32.mxu0 0.0
    %307 = vmatmul.mubr.f32.gmra.mrb[0].mxu0 %v240
    %v308 = vpop.f32.mrb[0].mxu0
    %v309 = vadd.f32 %v61, %v308
    %v310 = vpop.f32.mrb[0].mxu0
    %311 = vdwg.mxu0
    %313 = vrot.lane.b32.xlu0 %v238, 96
    %v314 = vpop.permute.xlu0 %313
    %v315 = vsel %vm62, %v314, 0
    %317 = vmatprep.subr.mxu0 0.0
    %318 = vmatpush1.msra.mxu0 %v45
    %319 = vmatprep.subr.mxu0 0.0
    %320 = vmatpush1.msra.mxu0 %v46
    %321 = vmatprep.subr.mxu0 0.0
    %322 = vmatpush1.msra.mxu0 %v47
    %323 = vmatprep.subr.mxu0 0.0
    %324 = vmatpush1.msra.mxu0 %v48
    %325 = vmatprep.subr.mxu0 0.0
    %326 = vmatpush1.msra.mxu0 0.0
    %327 = vmatprep.subr.mxu0 0.0
    %328 = vmatpush1.msra.mxu0 0.0
    %329 = vmatprep.subr.mxu0 0.0
    %330 = vmatpush1.msra.mxu0 0.0
    %331 = vmatprep.subr.mxu0 0.0
    %332 = vmatpush1.msra.mxu0 0.0
    %333 = vmatprep.subr.mxu0 0.0
    %334 = vmatpush1.msra.mxu0 0.0
    %335 = vmatprep.subr.mxu0 0.0
    %336 = vmatpush1.msra.mxu0 0.0
    %337 = vmatprep.subr.mxu0 0.0
    %338 = vmatpush1.msra.mxu0 0.0
    %339 = vmatprep.subr.mxu0 0.0
    %340 = vmatpush1.msra.mxu0 0.0
    %341 = vmatprep.subr.mxu0 0.0
    %342 = vmatpush1.msra.mxu0 0.0
    %343 = vmatprep.subr.mxu0 0.0
    %344 = vmatpush1.msra.mxu0 0.0
    %345 = vmatprep.subr.mxu0 0.0
    %346 = vmatpush1.msra.mxu0 0.0
    %347 = vmatprep.subr.mxu0 0.0
    %348 = vmatpush1.msra.mxu0 0.0
    %349 = vmatprep.subr.mxu0 0.0
    %350 = vmatpush1.msra.mxu0 0.0
    %351 = vmatprep.subr.mxu0 0.0
    %352 = vmatpush1.msra.mxu0 0.0
    %353 = vmatprep.subr.mxu0 0.0
    %354 = vmatpush1.msra.mxu0 0.0
    %355 = vmatprep.subr.mxu0 0.0
    %356 = vmatpush1.msra.mxu0 0.0
    %357 = vmatprep.subr.mxu0 0.0
    %358 = vmatpush1.msra.mxu0 0.0
    %359 = vmatprep.subr.mxu0 0.0
    %360 = vmatpush1.msra.mxu0 0.0
    %361 = vmatprep.subr.mxu0 0.0
    %362 = vmatpush1.msra.mxu0 0.0
    %363 = vmatprep.subr.mxu0 0.0
    %364 = vmatpush1.msra.mxu0 0.0
    %365 = vmatprep.subr.mxu0 0.0
    %366 = vmatpush1.msra.mxu0 0.0
    %367 = vmatprep.subr.mxu0 0.0
    %368 = vmatpush1.msra.mxu0 0.0
    %369 = vmatprep.subr.mxu0 0.0
    %370 = vmatpush1.msra.mxu0 0.0
    %371 = vmatprep.subr.mxu0 0.0
    %372 = vmatpush1.msra.mxu0 0.0
    %373 = vmatprep.subr.mxu0 0.0
    %374 = vmatpush1.msra.mxu0 0.0
    %375 = vmatprep.subr.mxu0 0.0
    %376 = vmatpush1.msra.mxu0 0.0
    %377 = vmatprep.subr.mxu0 0.0
    %378 = vmatpush1.msra.mxu0 0.0
    %379 = vmatprep.subr.mxu0 0.0
    %380 = vmatpush1.msra.mxu0 0.0
    %381 = vmatprep.mubr.f32.mxu0 0.0
    %382 = vmatmul.mubr.f32.gmra.mrb[0].mxu0 %v315
    %v383 = vpop.f32.mrb[0].mxu0
    %v384 = vadd.f32 %v139, %v383
    %v385 = vpop.f32.mrb[0].mxu0
    %386 = vdwg.mxu0
    %v387 = vadd.f32 %v309, %v384
    %v388 = vxor.u32 %v387, 2147483648
    %v389 = vmul.f32 %v388, 1.442695
    %v390 = vpow.pop %v389
    %v391 = vadd.f32 %v390, 1.0
    %v392 = vrcp.pop %v391
    %v393 = vmul.f32 1.0, %v392
    %395 = vrot.lane.b32.xlu0 %v384, 64
    %v396 = vpop.permute.xlu0 %395
    %v398 = vmul.f32 %v393, %v396
    %400 = vrot.lane.b32.xlu0 %v398, 64
    %v401 = vpop.permute.xlu0 %400
    %v403 = vadd.f32 %v309, %v401
    %v404 = vtanh.pop %v403
    %v405 = vsub.f32 1.0, %v393
    %407 = vrot.lane.b32.xlu0 %v404, 96
    %v408 = vpop.permute.xlu0 %407
    %v410 = vmul.f32 %v405, %v408
    %v411 = vmul.f32 %v393, %v238
    %v412 = vadd.f32 %v410, %v411
    %v414 = vsel %vm62, %v35, 0
    %416 = vmatprep.subr.mxu0 0.0
    %417 = vmatpush1.msra.mxu0 %v41
    %418 = vmatprep.subr.mxu0 0.0
    %419 = vmatpush1.msra.mxu0 %v42
    %420 = vmatprep.subr.mxu0 0.0
    %421 = vmatpush1.msra.mxu0 %v43
    %422 = vmatprep.subr.mxu0 0.0
    %423 = vmatpush1.msra.mxu0 %v44
    %424 = vmatprep.subr.mxu0 0.0
    %425 = vmatpush1.msra.mxu0 0.0
    %426 = vmatprep.subr.mxu0 0.0
    %427 = vmatpush1.msra.mxu0 0.0
    %428 = vmatprep.subr.mxu0 0.0
    %429 = vmatpush1.msra.mxu0 0.0
    %430 = vmatprep.subr.mxu0 0.0
    %431 = vmatpush1.msra.mxu0 0.0
    %432 = vmatprep.subr.mxu0 0.0
    %433 = vmatpush1.msra.mxu0 0.0
    %434 = vmatprep.subr.mxu0 0.0
    %435 = vmatpush1.msra.mxu0 0.0
    %436 = vmatprep.subr.mxu0 0.0
    %437 = vmatpush1.msra.mxu0 0.0
    %438 = vmatprep.subr.mxu0 0.0
    %439 = vmatpush1.msra.mxu0 0.0
    %440 = vmatprep.subr.mxu0 0.0
    %441 = vmatpush1.msra.mxu0 0.0
    %442 = vmatprep.subr.mxu0 0.0
    %443 = vmatpush1.msra.mxu0 0.0
    %444 = vmatprep.subr.mxu0 0.0
    %445 = vmatpush1.msra.mxu0 0.0
    %446 = vmatprep.subr.mxu0 0.0
    %447 = vmatpush1.msra.mxu0 0.0
    %448 = vmatprep.subr.mxu0 0.0
    %449 = vmatpush1.msra.mxu0 0.0
    %450 = vmatprep.subr.mxu0 0.0
    %451 = vmatpush1.msra.mxu0 0.0
    %452 = vmatprep.subr.mxu0 0.0
    %453 = vmatpush1.msra.mxu0 0.0
    %454 = vmatprep.subr.mxu0 0.0
    %455 = vmatpush1.msra.mxu0 0.0
    %456 = vmatprep.subr.mxu0 0.0
    %457 = vmatpush1.msra.mxu0 0.0
    %458 = vmatprep.subr.mxu0 0.0
    %459 = vmatpush1.msra.mxu0 0.0
    %460 = vmatprep.subr.mxu0 0.0
    %461 = vmatpush1.msra.mxu0 0.0
    %462 = vmatprep.subr.mxu0 0.0
    %463 = vmatpush1.msra.mxu0 0.0
    %464 = vmatprep.subr.mxu0 0.0
    %465 = vmatpush1.msra.mxu0 0.0
    %466 = vmatprep.subr.mxu0 0.0
    %467 = vmatpush1.msra.mxu0 0.0
    %468 = vmatprep.subr.mxu0 0.0
    %469 = vmatpush1.msra.mxu0 0.0
    %470 = vmatprep.subr.mxu0 0.0
    %471 = vmatpush1.msra.mxu0 0.0
    %472 = vmatprep.subr.mxu0 0.0
    %473 = vmatpush1.msra.mxu0 0.0
    %474 = vmatprep.subr.mxu0 0.0
    %475 = vmatpush1.msra.mxu0 0.0
    %476 = vmatprep.subr.mxu0 0.0
    %477 = vmatpush1.msra.mxu0 0.0
    %478 = vmatprep.subr.mxu0 0.0
    %479 = vmatpush1.msra.mxu0 0.0
    %480 = vmatprep.mubr.f32.mxu0 0.0
    %481 = vmatmul.mubr.f32.gmra.mrb[0].mxu0 %v414
    %v482 = vpop.f32.mrb[0].mxu0
    %v483 = vadd.f32 %v61, %v482
    %v484 = vpop.f32.mrb[0].mxu0
    %485 = vdwg.mxu0
    %487 = vrot.lane.b32.xlu0 %v412, 96
    %v488 = vpop.permute.xlu0 %487
    %v489 = vsel %vm62, %v488, 0
    %491 = vmatprep.subr.mxu0 0.0
    %492 = vmatpush1.msra.mxu0 %v45
    %493 = vmatprep.subr.mxu0 0.0
    %494 = vmatpush1.msra.mxu0 %v46
    %495 = vmatprep.subr.mxu0 0.0
    %496 = vmatpush1.msra.mxu0 %v47
    %497 = vmatprep.subr.mxu0 0.0
    %498 = vmatpush1.msra.mxu0 %v48
    %499 = vmatprep.subr.mxu0 0.0
    %500 = vmatpush1.msra.mxu0 0.0
    %501 = vmatprep.subr.mxu0 0.0
    %502 = vmatpush1.msra.mxu0 0.0
    %503 = vmatprep.subr.mxu0 0.0
    %504 = vmatpush1.msra.mxu0 0.0
    %505 = vmatprep.subr.mxu0 0.0
    %506 = vmatpush1.msra.mxu0 0.0
    %507 = vmatprep.subr.mxu0 0.0
    %508 = vmatpush1.msra.mxu0 0.0
    %509 = vmatprep.subr.mxu0 0.0
    %510 = vmatpush1.msra.mxu0 0.0
    %511 = vmatprep.subr.mxu0 0.0
    %512 = vmatpush1.msra.mxu0 0.0
    %513 = vmatprep.subr.mxu0 0.0
    %514 = vmatpush1.msra.mxu0 0.0
    %515 = vmatprep.subr.mxu0 0.0
    %516 = vmatpush1.msra.mxu0 0.0
    %517 = vmatprep.subr.mxu0 0.0
    %518 = vmatpush1.msra.mxu0 0.0
    %519 = vmatprep.subr.mxu0 0.0
    %520 = vmatpush1.msra.mxu0 0.0
    %521 = vmatprep.subr.mxu0 0.0
    %522 = vmatpush1.msra.mxu0 0.0
    %523 = vmatprep.subr.mxu0 0.0
    %524 = vmatpush1.msra.mxu0 0.0
    %525 = vmatprep.subr.mxu0 0.0
    %526 = vmatpush1.msra.mxu0 0.0
    %527 = vmatprep.subr.mxu0 0.0
    %528 = vmatpush1.msra.mxu0 0.0
    %529 = vmatprep.subr.mxu0 0.0
    %530 = vmatpush1.msra.mxu0 0.0
    %531 = vmatprep.subr.mxu0 0.0
    %532 = vmatpush1.msra.mxu0 0.0
    %533 = vmatprep.subr.mxu0 0.0
    %534 = vmatpush1.msra.mxu0 0.0
    %535 = vmatprep.subr.mxu0 0.0
    %536 = vmatpush1.msra.mxu0 0.0
    %537 = vmatprep.subr.mxu0 0.0
    %538 = vmatpush1.msra.mxu0 0.0
    %539 = vmatprep.subr.mxu0 0.0
    %540 = vmatpush1.msra.mxu0 0.0
    %541 = vmatprep.subr.mxu0 0.0
    %542 = vmatpush1.msra.mxu0 0.0
    %543 = vmatprep.subr.mxu0 0.0
    %544 = vmatpush1.msra.mxu0 0.0
    %545 = vmatprep.subr.mxu0 0.0
    %546 = vmatpush1.msra.mxu0 0.0
    %547 = vmatprep.subr.mxu0 0.0
    %548 = vmatpush1.msra.mxu0 0.0
    %549 = vmatprep.subr.mxu0 0.0
    %550 = vmatpush1.msra.mxu0 0.0
    %551 = vmatprep.subr.mxu0 0.0
    %552 = vmatpush1.msra.mxu0 0.0
    %553 = vmatprep.subr.mxu0 0.0
    %554 = vmatpush1.msra.mxu0 0.0
    %555 = vmatprep.mubr.f32.mxu0 0.0
    %556 = vmatmul.mubr.f32.gmra.mrb[0].mxu0 %v489
    %v557 = vpop.f32.mrb[0].mxu0
    %v558 = vadd.f32 %v139, %v557
    %v559 = vpop.f32.mrb[0].mxu0
    %560 = vdwg.mxu0
    %v561 = vadd.f32 %v483, %v558
    %v562 = vxor.u32 %v561, 2147483648
    %v563 = vmul.f32 %v562, 1.442695
    %v564 = vpow.pop %v563
    %v565 = vadd.f32 %v564, 1.0
    %v566 = vrcp.pop %v565
    %v567 = vmul.f32 1.0, %v566
    %569 = vrot.lane.b32.xlu0 %v558, 64
    %v570 = vpop.permute.xlu0 %569
    %v572 = vmul.f32 %v567, %v570
    %574 = vrot.lane.b32.xlu0 %v572, 64
    %v575 = vpop.permute.xlu0 %574
    %v577 = vadd.f32 %v483, %v575
    %v578 = vtanh.pop %v577
    %v579 = vsub.f32 1.0, %v567
    %581 = vrot.lane.b32.xlu0 %v578, 96
    %v582 = vpop.permute.xlu0 %581
    %v584 = vmul.f32 %v579, %v582
    %v585 = vmul.f32 %v567, %v412
    %v586 = vadd.f32 %v584, %v585
    %v588 = vsel %vm62, %v36, 0
    %590 = vmatprep.subr.mxu0 0.0
    %591 = vmatpush1.msra.mxu0 %v41
    %592 = vmatprep.subr.mxu0 0.0
    %593 = vmatpush1.msra.mxu0 %v42
    %594 = vmatprep.subr.mxu0 0.0
    %595 = vmatpush1.msra.mxu0 %v43
    %596 = vmatprep.subr.mxu0 0.0
    %597 = vmatpush1.msra.mxu0 %v44
    %598 = vmatprep.subr.mxu0 0.0
    %599 = vmatpush1.msra.mxu0 0.0
    %600 = vmatprep.subr.mxu0 0.0
    %601 = vmatpush1.msra.mxu0 0.0
    %602 = vmatprep.subr.mxu0 0.0
    %603 = vmatpush1.msra.mxu0 0.0
    %604 = vmatprep.subr.mxu0 0.0
    %605 = vmatpush1.msra.mxu0 0.0
    %606 = vmatprep.subr.mxu0 0.0
    %607 = vmatpush1.msra.mxu0 0.0
    %608 = vmatprep.subr.mxu0 0.0
    %609 = vmatpush1.msra.mxu0 0.0
    %610 = vmatprep.subr.mxu0 0.0
    %611 = vmatpush1.msra.mxu0 0.0
    %612 = vmatprep.subr.mxu0 0.0
    %613 = vmatpush1.msra.mxu0 0.0
    %614 = vmatprep.subr.mxu0 0.0
    %615 = vmatpush1.msra.mxu0 0.0
    %616 = vmatprep.subr.mxu0 0.0
    %617 = vmatpush1.msra.mxu0 0.0
    %618 = vmatprep.subr.mxu0 0.0
    %619 = vmatpush1.msra.mxu0 0.0
    %620 = vmatprep.subr.mxu0 0.0
    %621 = vmatpush1.msra.mxu0 0.0
    %622 = vmatprep.subr.mxu0 0.0
    %623 = vmatpush1.msra.mxu0 0.0
    %624 = vmatprep.subr.mxu0 0.0
    %625 = vmatpush1.msra.mxu0 0.0
    %626 = vmatprep.subr.mxu0 0.0
    %627 = vmatpush1.msra.mxu0 0.0
    %628 = vmatprep.subr.mxu0 0.0
    %629 = vmatpush1.msra.mxu0 0.0
    %630 = vmatprep.subr.mxu0 0.0
    %631 = vmatpush1.msra.mxu0 0.0
    %632 = vmatprep.subr.mxu0 0.0
    %633 = vmatpush1.msra.mxu0 0.0
    %634 = vmatprep.subr.mxu0 0.0
    %635 = vmatpush1.msra.mxu0 0.0
    %636 = vmatprep.subr.mxu0 0.0
    %637 = vmatpush1.msra.mxu0 0.0
    %638 = vmatprep.subr.mxu0 0.0
    %639 = vmatpush1.msra.mxu0 0.0
    %640 = vmatprep.subr.mxu0 0.0
    %641 = vmatpush1.msra.mxu0 0.0
    %642 = vmatprep.subr.mxu0 0.0
    %643 = vmatpush1.msra.mxu0 0.0
    %644 = vmatprep.subr.mxu0 0.0
    %645 = vmatpush1.msra.mxu0 0.0
    %646 = vmatprep.subr.mxu0 0.0
    %647 = vmatpush1.msra.mxu0 0.0
    %648 = vmatprep.subr.mxu0 0.0
    %649 = vmatpush1.msra.mxu0 0.0
    %650 = vmatprep.subr.mxu0 0.0
    %651 = vmatpush1.msra.mxu0 0.0
    %652 = vmatprep.subr.mxu0 0.0
    %653 = vmatpush1.msra.mxu0 0.0
    %654 = vmatprep.mubr.f32.mxu0 0.0
    %655 = vmatmul.mubr.f32.gmra.mrb[0].mxu0 %v588
    %v656 = vpop.f32.mrb[0].mxu0
    %v657 = vadd.f32 %v61, %v656
    %v658 = vpop.f32.mrb[0].mxu0
    %659 = vdwg.mxu0
    %661 = vrot.lane.b32.xlu0 %v586, 96
    %v662 = vpop.permute.xlu0 %661
    %v663 = vsel %vm62, %v662, 0
    %665 = vmatprep.subr.mxu0 0.0
    %666 = vmatpush1.msra.mxu0 %v45
    %667 = vmatprep.subr.mxu0 0.0
    %668 = vmatpush1.msra.mxu0 %v46
    %669 = vmatprep.subr.mxu0 0.0
    %670 = vmatpush1.msra.mxu0 %v47
    %671 = vmatprep.subr.mxu0 0.0
    %672 = vmatpush1.msra.mxu0 %v48
    %673 = vmatprep.subr.mxu0 0.0
    %674 = vmatpush1.msra.mxu0 0.0
    %675 = vmatprep.subr.mxu0 0.0
    %676 = vmatpush1.msra.mxu0 0.0
    %677 = vmatprep.subr.mxu0 0.0
    %678 = vmatpush1.msra.mxu0 0.0
    %679 = vmatprep.subr.mxu0 0.0
    %680 = vmatpush1.msra.mxu0 0.0
    %681 = vmatprep.subr.mxu0 0.0
    %682 = vmatpush1.msra.mxu0 0.0
    %683 = vmatprep.subr.mxu0 0.0
    %684 = vmatpush1.msra.mxu0 0.0
    %685 = vmatprep.subr.mxu0 0.0
    %686 = vmatpush1.msra.mxu0 0.0
    %687 = vmatprep.subr.mxu0 0.0
    %688 = vmatpush1.msra.mxu0 0.0
    %689 = vmatprep.subr.mxu0 0.0
    %690 = vmatpush1.msra.mxu0 0.0
    %691 = vmatprep.subr.mxu0 0.0
    %692 = vmatpush1.msra.mxu0 0.0
    %693 = vmatprep.subr.mxu0 0.0
    %694 = vmatpush1.msra.mxu0 0.0
    %695 = vmatprep.subr.mxu0 0.0
    %696 = vmatpush1.msra.mxu0 0.0
    %697 = vmatprep.subr.mxu0 0.0
    %698 = vmatpush1.msra.mxu0 0.0
    %699 = vmatprep.subr.mxu0 0.0
    %700 = vmatpush1.msra.mxu0 0.0
    %701 = vmatprep.subr.mxu0 0.0
    %702 = vmatpush1.msra.mxu0 0.0
    %703 = vmatprep.subr.mxu0 0.0
    %704 = vmatpush1.msra.mxu0 0.0
    %705 = vmatprep.subr.mxu0 0.0
    %706 = vmatpush1.msra.mxu0 0.0
    %707 = vmatprep.subr.mxu0 0.0
    %708 = vmatpush1.msra.mxu0 0.0
    %709 = vmatprep.subr.mxu0 0.0
    %710 = vmatpush1.msra.mxu0 0.0
    %711 = vmatprep.subr.mxu0 0.0
    %712 = vmatpush1.msra.mxu0 0.0
    %713 = vmatprep.subr.mxu0 0.0
    %714 = vmatpush1.msra.mxu0 0.0
    %715 = vmatprep.subr.mxu0 0.0
    %716 = vmatpush1.msra.mxu0 0.0
    %717 = vmatprep.subr.mxu0 0.0
    %718 = vmatpush1.msra.mxu0 0.0
    %719 = vmatprep.subr.mxu0 0.0
    %720 = vmatpush1.msra.mxu0 0.0
    %721 = vmatprep.subr.mxu0 0.0
    %722 = vmatpush1.msra.mxu0 0.0
    %723 = vmatprep.subr.mxu0 0.0
    %724 = vmatpush1.msra.mxu0 0.0
    %725 = vmatprep.subr.mxu0 0.0
    %726 = vmatpush1.msra.mxu0 0.0
    %727 = vmatprep.subr.mxu0 0.0
    %728 = vmatpush1.msra.mxu0 0.0
    %729 = vmatprep.mubr.f32.mxu0 0.0
    %730 = vmatmul.mubr.f32.gmra.mrb[0].mxu0 %v663
    %v731 = vpop.f32.mrb[0].mxu0
    %v732 = vadd.f32 %v139, %v731
    %v733 = vpop.f32.mrb[0].mxu0
    %734 = vdwg.mxu0
    %v735 = vadd.f32 %v657, %v732
    %v736 = vxor.u32 %v735, 2147483648
    %v737 = vmul.f32 %v736, 1.442695
    %v738 = vpow.pop %v737
    %v739 = vadd.f32 %v738, 1.0
    %v740 = vrcp.pop %v739
    %v741 = vmul.f32 1.0, %v740
    %743 = vrot.lane.b32.xlu0 %v732, 64
    %v744 = vpop.permute.xlu0 %743
    %v746 = vmul.f32 %v741, %v744
    %748 = vrot.lane.b32.xlu0 %v746, 64
    %v749 = vpop.permute.xlu0 %748
    %v751 = vadd.f32 %v657, %v749
    %v752 = vtanh.pop %v751
    %v753 = vsub.f32 1.0, %v741
    %755 = vrot.lane.b32.xlu0 %v752, 96
    %v756 = vpop.permute.xlu0 %755
    %v758 = vmul.f32 %v753, %v756
    %v759 = vmul.f32 %v741, %v586
    %v760 = vadd.f32 %v758, %v759
    %v762 = vsel %vm62, %v37, 0
    %764 = vmatprep.subr.mxu0 0.0
    %765 = vmatpush1.msra.mxu0 %v41
    %766 = vmatprep.subr.mxu0 0.0
    %767 = vmatpush1.msra.mxu0 %v42
    %768 = vmatprep.subr.mxu0 0.0
    %769 = vmatpush1.msra.mxu0 %v43
    %770 = vmatprep.subr.mxu0 0.0
    %771 = vmatpush1.msra.mxu0 %v44
    %772 = vmatprep.subr.mxu0 0.0
    %773 = vmatpush1.msra.mxu0 0.0
    %774 = vmatprep.subr.mxu0 0.0
    %775 = vmatpush1.msra.mxu0 0.0
    %776 = vmatprep.subr.mxu0 0.0
    %777 = vmatpush1.msra.mxu0 0.0
    %778 = vmatprep.subr.mxu0 0.0
    %779 = vmatpush1.msra.mxu0 0.0
    %780 = vmatprep.subr.mxu0 0.0
    %781 = vmatpush1.msra.mxu0 0.0
    %782 = vmatprep.subr.mxu0 0.0
    %783 = vmatpush1.msra.mxu0 0.0
    %784 = vmatprep.subr.mxu0 0.0
    %785 = vmatpush1.msra.mxu0 0.0
    %786 = vmatprep.subr.mxu0 0.0
    %787 = vmatpush1.msra.mxu0 0.0
    %788 = vmatprep.subr.mxu0 0.0
    %789 = vmatpush1.msra.mxu0 0.0
    %790 = vmatprep.subr.mxu0 0.0
    %791 = vmatpush1.msra.mxu0 0.0
    %792 = vmatprep.subr.mxu0 0.0
    %793 = vmatpush1.msra.mxu0 0.0
    %794 = vmatprep.subr.mxu0 0.0
    %795 = vmatpush1.msra.mxu0 0.0
    %796 = vmatprep.subr.mxu0 0.0
    %797 = vmatpush1.msra.mxu0 0.0
    %798 = vmatprep.subr.mxu0 0.0
    %799 = vmatpush1.msra.mxu0 0.0
    %800 = vmatprep.subr.mxu0 0.0
    %801 = vmatpush1.msra.mxu0 0.0
    %802 = vmatprep.subr.mxu0 0.0
    %803 = vmatpush1.msra.mxu0 0.0
    %804 = vmatprep.subr.mxu0 0.0
    %805 = vmatpush1.msra.mxu0 0.0
    %806 = vmatprep.subr.mxu0 0.0
    %807 = vmatpush1.msra.mxu0 0.0
    %808 = vmatprep.subr.mxu0 0.0
    %809 = vmatpush1.msra.mxu0 0.0
    %810 = vmatprep.subr.mxu0 0.0
    %811 = vmatpush1.msra.mxu0 0.0
    %812 = vmatprep.subr.mxu0 0.0
    %813 = vmatpush1.msra.mxu0 0.0
    %814 = vmatprep.subr.mxu0 0.0
    %815 = vmatpush1.msra.mxu0 0.0
    %816 = vmatprep.subr.mxu0 0.0
    %817 = vmatpush1.msra.mxu0 0.0
    %818 = vmatprep.subr.mxu0 0.0
    %819 = vmatpush1.msra.mxu0 0.0
    %820 = vmatprep.subr.mxu0 0.0
    %821 = vmatpush1.msra.mxu0 0.0
    %822 = vmatprep.subr.mxu0 0.0
    %823 = vmatpush1.msra.mxu0 0.0
    %824 = vmatprep.subr.mxu0 0.0
    %825 = vmatpush1.msra.mxu0 0.0
    %826 = vmatprep.subr.mxu0 0.0
    %827 = vmatpush1.msra.mxu0 0.0
    %828 = vmatprep.mubr.f32.mxu0 0.0
    %829 = vmatmul.mubr.f32.gmra.mrb[0].mxu0 %v762
    %v830 = vpop.f32.mrb[0].mxu0
    %v831 = vadd.f32 %v61, %v830
    %v832 = vpop.f32.mrb[0].mxu0
    %833 = vdwg.mxu0
    %835 = vrot.lane.b32.xlu0 %v760, 96
    %v836 = vpop.permute.xlu0 %835
    %v837 = vsel %vm62, %v836, 0
    %839 = vmatprep.subr.mxu0 0.0
    %840 = vmatpush1.msra.mxu0 %v45
    %841 = vmatprep.subr.mxu0 0.0
    %842 = vmatpush1.msra.mxu0 %v46
    %843 = vmatprep.subr.mxu0 0.0
    %844 = vmatpush1.msra.mxu0 %v47
    %845 = vmatprep.subr.mxu0 0.0
    %846 = vmatpush1.msra.mxu0 %v48
    %847 = vmatprep.subr.mxu0 0.0
    %848 = vmatpush1.msra.mxu0 0.0
    %849 = vmatprep.subr.mxu0 0.0
    %850 = vmatpush1.msra.mxu0 0.0
    %851 = vmatprep.subr.mxu0 0.0
    %852 = vmatpush1.msra.mxu0 0.0
    %853 = vmatprep.subr.mxu0 0.0
    %854 = vmatpush1.msra.mxu0 0.0
    %855 = vmatprep.subr.mxu0 0.0
    %856 = vmatpush1.msra.mxu0 0.0
    %857 = vmatprep.subr.mxu0 0.0
    %858 = vmatpush1.msra.mxu0 0.0
    %859 = vmatprep.subr.mxu0 0.0
    %860 = vmatpush1.msra.mxu0 0.0
    %861 = vmatprep.subr.mxu0 0.0
    %862 = vmatpush1.msra.mxu0 0.0
    %863 = vmatprep.subr.mxu0 0.0
    %864 = vmatpush1.msra.mxu0 0.0
    %865 = vmatprep.subr.mxu0 0.0
    %866 = vmatpush1.msra.mxu0 0.0
    %867 = vmatprep.subr.mxu0 0.0
    %868 = vmatpush1.msra.mxu0 0.0
    %869 = vmatprep.subr.mxu0 0.0
    %870 = vmatpush1.msra.mxu0 0.0
    %871 = vmatprep.subr.mxu0 0.0
    %872 = vmatpush1.msra.mxu0 0.0
    %873 = vmatprep.subr.mxu0 0.0
    %874 = vmatpush1.msra.mxu0 0.0
    %875 = vmatprep.subr.mxu0 0.0
    %876 = vmatpush1.msra.mxu0 0.0
    %877 = vmatprep.subr.mxu0 0.0
    %878 = vmatpush1.msra.mxu0 0.0
    %879 = vmatprep.subr.mxu0 0.0
    %880 = vmatpush1.msra.mxu0 0.0
    %881 = vmatprep.subr.mxu0 0.0
    %882 = vmatpush1.msra.mxu0 0.0
    %883 = vmatprep.subr.mxu0 0.0
    %884 = vmatpush1.msra.mxu0 0.0
    %885 = vmatprep.subr.mxu0 0.0
    %886 = vmatpush1.msra.mxu0 0.0
    %887 = vmatprep.subr.mxu0 0.0
    %888 = vmatpush1.msra.mxu0 0.0
    %889 = vmatprep.subr.mxu0 0.0
    %890 = vmatpush1.msra.mxu0 0.0
    %891 = vmatprep.subr.mxu0 0.0
    %892 = vmatpush1.msra.mxu0 0.0
    %893 = vmatprep.subr.mxu0 0.0
    %894 = vmatpush1.msra.mxu0 0.0
    %895 = vmatprep.subr.mxu0 0.0
    %896 = vmatpush1.msra.mxu0 0.0
    %897 = vmatprep.subr.mxu0 0.0
    %898 = vmatpush1.msra.mxu0 0.0
    %899 = vmatprep.subr.mxu0 0.0
    %900 = vmatpush1.msra.mxu0 0.0
    %901 = vmatprep.subr.mxu0 0.0
    %902 = vmatpush1.msra.mxu0 0.0
    %903 = vmatprep.mubr.f32.mxu0 0.0
    %904 = vmatmul.mubr.f32.gmra.mrb[0].mxu0 %v837
    %v905 = vpop.f32.mrb[0].mxu0
    %v906 = vadd.f32 %v139, %v905
    %v907 = vpop.f32.mrb[0].mxu0
    %908 = vdwg.mxu0
    %v909 = vadd.f32 %v831, %v906
    %v910 = vxor.u32 %v909, 2147483648
    %v911 = vmul.f32 %v910, 1.442695
    %v912 = vpow.pop %v911
    %v913 = vadd.f32 %v912, 1.0
    %v914 = vrcp.pop %v913
    %v915 = vmul.f32 1.0, %v914
    %917 = vrot.lane.b32.xlu0 %v906, 64
    %v918 = vpop.permute.xlu0 %917
    %v920 = vmul.f32 %v915, %v918
    %922 = vrot.lane.b32.xlu0 %v920, 64
    %v923 = vpop.permute.xlu0 %922
    %v925 = vadd.f32 %v831, %v923
    %v926 = vtanh.pop %v925
    %v927 = vsub.f32 1.0, %v915
    %929 = vrot.lane.b32.xlu0 %v926, 96
    %v930 = vpop.permute.xlu0 %929
    %v932 = vmul.f32 %v927, %v930
    %v933 = vmul.f32 %v915, %v760
    %v934 = vadd.f32 %v932, %v933
    %v936 = vsel %vm62, %v38, 0
    %938 = vmatprep.subr.mxu0 0.0
    %939 = vmatpush1.msra.mxu0 %v41
    %940 = vmatprep.subr.mxu0 0.0
    %941 = vmatpush1.msra.mxu0 %v42
    %942 = vmatprep.subr.mxu0 0.0
    %943 = vmatpush1.msra.mxu0 %v43
    %944 = vmatprep.subr.mxu0 0.0
    %945 = vmatpush1.msra.mxu0 %v44
    %946 = vmatprep.subr.mxu0 0.0
    %947 = vmatpush1.msra.mxu0 0.0
    %948 = vmatprep.subr.mxu0 0.0
    %949 = vmatpush1.msra.mxu0 0.0
    %950 = vmatprep.subr.mxu0 0.0
    %951 = vmatpush1.msra.mxu0 0.0
    %952 = vmatprep.subr.mxu0 0.0
    %953 = vmatpush1.msra.mxu0 0.0
    %954 = vmatprep.subr.mxu0 0.0
    %955 = vmatpush1.msra.mxu0 0.0
    %956 = vmatprep.subr.mxu0 0.0
    %957 = vmatpush1.msra.mxu0 0.0
    %958 = vmatprep.subr.mxu0 0.0
    %959 = vmatpush1.msra.mxu0 0.0
    %960 = vmatprep.subr.mxu0 0.0
    %961 = vmatpush1.msra.mxu0 0.0
    %962 = vmatprep.subr.mxu0 0.0
    %963 = vmatpush1.msra.mxu0 0.0
    %964 = vmatprep.subr.mxu0 0.0
    %965 = vmatpush1.msra.mxu0 0.0
    %966 = vmatprep.subr.mxu0 0.0
    %967 = vmatpush1.msra.mxu0 0.0
    %968 = vmatprep.subr.mxu0 0.0
    %969 = vmatpush1.msra.mxu0 0.0
    %970 = vmatprep.subr.mxu0 0.0
    %971 = vmatpush1.msra.mxu0 0.0
    %972 = vmatprep.subr.mxu0 0.0
    %973 = vmatpush1.msra.mxu0 0.0
    %974 = vmatprep.subr.mxu0 0.0
    %975 = vmatpush1.msra.mxu0 0.0
    %976 = vmatprep.subr.mxu0 0.0
    %977 = vmatpush1.msra.mxu0 0.0
    %978 = vmatprep.subr.mxu0 0.0
    %979 = vmatpush1.msra.mxu0 0.0
    %980 = vmatprep.subr.mxu0 0.0
    %981 = vmatpush1.msra.mxu0 0.0
    %982 = vmatprep.subr.mxu0 0.0
    %983 = vmatpush1.msra.mxu0 0.0
    %984 = vmatprep.subr.mxu0 0.0
    %985 = vmatpush1.msra.mxu0 0.0
    %986 = vmatprep.subr.mxu0 0.0
    %987 = vmatpush1.msra.mxu0 0.0
    %988 = vmatprep.subr.mxu0 0.0
    %989 = vmatpush1.msra.mxu0 0.0
    %990 = vmatprep.subr.mxu0 0.0
    %991 = vmatpush1.msra.mxu0 0.0
    %992 = vmatprep.subr.mxu0 0.0
    %993 = vmatpush1.msra.mxu0 0.0
    %994 = vmatprep.subr.mxu0 0.0
    %995 = vmatpush1.msra.mxu0 0.0
    %996 = vmatprep.subr.mxu0 0.0
    %997 = vmatpush1.msra.mxu0 0.0
    %998 = vmatprep.subr.mxu0 0.0
    %999 = vmatpush1.msra.mxu0 0.0
    %1000 = vmatprep.subr.mxu0 0.0
    %1001 = vmatpush1.msra.mxu0 0.0
    %1002 = vmatprep.mubr.f32.mxu0 0.0
    %1003 = vmatmul.mubr.f32.gmra.mrb[0].mxu0 %v936
    %v1004 = vpop.f32.mrb[0].mxu0
    %v1005 = vadd.f32 %v61, %v1004
    %v1006 = vpop.f32.mrb[0].mxu0
    %1007 = vdwg.mxu0
    %1009 = vrot.lane.b32.xlu0 %v934, 96
    %v1010 = vpop.permute.xlu0 %1009
    %v1011 = vsel %vm62, %v1010, 0
    %1013 = vmatprep.subr.mxu0 0.0
    %1014 = vmatpush1.msra.mxu0 %v45
    %1015 = vmatprep.subr.mxu0 0.0
    %1016 = vmatpush1.msra.mxu0 %v46
    %1017 = vmatprep.subr.mxu0 0.0
    %1018 = vmatpush1.msra.mxu0 %v47
    %1019 = vmatprep.subr.mxu0 0.0
    %1020 = vmatpush1.msra.mxu0 %v48
    %1021 = vmatprep.subr.mxu0 0.0
    %1022 = vmatpush1.msra.mxu0 0.0
    %1023 = vmatprep.subr.mxu0 0.0
    %1024 = vmatpush1.msra.mxu0 0.0
    %1025 = vmatprep.subr.mxu0 0.0
    %1026 = vmatpush1.msra.mxu0 0.0
    %1027 = vmatprep.subr.mxu0 0.0
    %1028 = vmatpush1.msra.mxu0 0.0
    %1029 = vmatprep.subr.mxu0 0.0
    %1030 = vmatpush1.msra.mxu0 0.0
    %1031 = vmatprep.subr.mxu0 0.0
    %1032 = vmatpush1.msra.mxu0 0.0
    %1033 = vmatprep.subr.mxu0 0.0
    %1034 = vmatpush1.msra.mxu0 0.0
    %1035 = vmatprep.subr.mxu0 0.0
    %1036 = vmatpush1.msra.mxu0 0.0
    %1037 = vmatprep.subr.mxu0 0.0
    %1038 = vmatpush1.msra.mxu0 0.0
    %1039 = vmatprep.subr.mxu0 0.0
    %1040 = vmatpush1.msra.mxu0 0.0
    %1041 = vmatprep.subr.mxu0 0.0
    %1042 = vmatpush1.msra.mxu0 0.0
    %1043 = vmatprep.subr.mxu0 0.0
    %1044 = vmatpush1.msra.mxu0 0.0
    %1045 = vmatprep.subr.mxu0 0.0
    %1046 = vmatpush1.msra.mxu0 0.0
    %1047 = vmatprep.subr.mxu0 0.0
    %1048 = vmatpush1.msra.mxu0 0.0
    %1049 = vmatprep.subr.mxu0 0.0
    %1050 = vmatpush1.msra.mxu0 0.0
    %1051 = vmatprep.subr.mxu0 0.0
    %1052 = vmatpush1.msra.mxu0 0.0
    %1053 = vmatprep.subr.mxu0 0.0
    %1054 = vmatpush1.msra.mxu0 0.0
    %1055 = vmatprep.subr.mxu0 0.0
    %1056 = vmatpush1.msra.mxu0 0.0
    %1057 = vmatprep.subr.mxu0 0.0
    %1058 = vmatpush1.msra.mxu0 0.0
    %1059 = vmatprep.subr.mxu0 0.0
    %1060 = vmatpush1.msra.mxu0 0.0
    %1061 = vmatprep.subr.mxu0 0.0
    %1062 = vmatpush1.msra.mxu0 0.0
    %1063 = vmatprep.subr.mxu0 0.0
    %1064 = vmatpush1.msra.mxu0 0.0
    %1065 = vmatprep.subr.mxu0 0.0
    %1066 = vmatpush1.msra.mxu0 0.0
    %1067 = vmatprep.subr.mxu0 0.0
    %1068 = vmatpush1.msra.mxu0 0.0
    %1069 = vmatprep.subr.mxu0 0.0
    %1070 = vmatpush1.msra.mxu0 0.0
    %1071 = vmatprep.subr.mxu0 0.0
    %1072 = vmatpush1.msra.mxu0 0.0
    %1073 = vmatprep.subr.mxu0 0.0
    %1074 = vmatpush1.msra.mxu0 0.0
    %1075 = vmatprep.subr.mxu0 0.0
    %1076 = vmatpush1.msra.mxu0 0.0
    %1077 = vmatprep.mubr.f32.mxu0 0.0
    %1078 = vmatmul.mubr.f32.gmra.mrb[0].mxu0 %v1011
    %v1079 = vpop.f32.mrb[0].mxu0
    %v1080 = vadd.f32 %v139, %v1079
    %v1081 = vpop.f32.mrb[0].mxu0
    %1082 = vdwg.mxu0
    %v1083 = vadd.f32 %v1005, %v1080
    %v1084 = vxor.u32 %v1083, 2147483648
    %v1085 = vmul.f32 %v1084, 1.442695
    %v1086 = vpow.pop %v1085
    %v1087 = vadd.f32 %v1086, 1.0
    %v1088 = vrcp.pop %v1087
    %v1089 = vmul.f32 1.0, %v1088
    %1091 = vrot.lane.b32.xlu0 %v1080, 64
    %v1092 = vpop.permute.xlu0 %1091
    %v1094 = vmul.f32 %v1089, %v1092
    %1096 = vrot.lane.b32.xlu0 %v1094, 64
    %v1097 = vpop.permute.xlu0 %1096
    %v1099 = vadd.f32 %v1005, %v1097
    %v1100 = vtanh.pop %v1099
    %v1101 = vsub.f32 1.0, %v1089
    %1103 = vrot.lane.b32.xlu0 %v1100, 96
    %v1104 = vpop.permute.xlu0 %1103
    %v1106 = vmul.f32 %v1101, %v1104
    %v1107 = vmul.f32 %v1089, %v934
    %v1108 = vadd.f32 %v1106, %v1107
    %v1110 = vsel %vm62, %v39, 0
    %1112 = vmatprep.subr.mxu0 0.0
    %1113 = vmatpush1.msra.mxu0 %v41
    %1114 = vmatprep.subr.mxu0 0.0
    %1115 = vmatpush1.msra.mxu0 %v42
    %1116 = vmatprep.subr.mxu0 0.0
    %1117 = vmatpush1.msra.mxu0 %v43
    %1118 = vmatprep.subr.mxu0 0.0
    %1119 = vmatpush1.msra.mxu0 %v44
    %1120 = vmatprep.subr.mxu0 0.0
    %1121 = vmatpush1.msra.mxu0 0.0
    %1122 = vmatprep.subr.mxu0 0.0
    %1123 = vmatpush1.msra.mxu0 0.0
    %1124 = vmatprep.subr.mxu0 0.0
    %1125 = vmatpush1.msra.mxu0 0.0
    %1126 = vmatprep.subr.mxu0 0.0
    %1127 = vmatpush1.msra.mxu0 0.0
    %1128 = vmatprep.subr.mxu0 0.0
    %1129 = vmatpush1.msra.mxu0 0.0
    %1130 = vmatprep.subr.mxu0 0.0
    %1131 = vmatpush1.msra.mxu0 0.0
    %1132 = vmatprep.subr.mxu0 0.0
    %1133 = vmatpush1.msra.mxu0 0.0
    %1134 = vmatprep.subr.mxu0 0.0
    %1135 = vmatpush1.msra.mxu0 0.0
    %1136 = vmatprep.subr.mxu0 0.0
    %1137 = vmatpush1.msra.mxu0 0.0
    %1138 = vmatprep.subr.mxu0 0.0
    %1139 = vmatpush1.msra.mxu0 0.0
    %1140 = vmatprep.subr.mxu0 0.0
    %1141 = vmatpush1.msra.mxu0 0.0
    %1142 = vmatprep.subr.mxu0 0.0
    %1143 = vmatpush1.msra.mxu0 0.0
    %1144 = vmatprep.subr.mxu0 0.0
    %1145 = vmatpush1.msra.mxu0 0.0
    %1146 = vmatprep.subr.mxu0 0.0
    %1147 = vmatpush1.msra.mxu0 0.0
    %1148 = vmatprep.subr.mxu0 0.0
    %1149 = vmatpush1.msra.mxu0 0.0
    %1150 = vmatprep.subr.mxu0 0.0
    %1151 = vmatpush1.msra.mxu0 0.0
    %1152 = vmatprep.subr.mxu0 0.0
    %1153 = vmatpush1.msra.mxu0 0.0
    %1154 = vmatprep.subr.mxu0 0.0
    %1155 = vmatpush1.msra.mxu0 0.0
    %1156 = vmatprep.subr.mxu0 0.0
    %1157 = vmatpush1.msra.mxu0 0.0
    %1158 = vmatprep.subr.mxu0 0.0
    %1159 = vmatpush1.msra.mxu0 0.0
    %1160 = vmatprep.subr.mxu0 0.0
    %1161 = vmatpush1.msra.mxu0 0.0
    %1162 = vmatprep.subr.mxu0 0.0
    %1163 = vmatpush1.msra.mxu0 0.0
    %1164 = vmatprep.subr.mxu0 0.0
    %1165 = vmatpush1.msra.mxu0 0.0
    %1166 = vmatprep.subr.mxu0 0.0
    %1167 = vmatpush1.msra.mxu0 0.0
    %1168 = vmatprep.subr.mxu0 0.0
    %1169 = vmatpush1.msra.mxu0 0.0
    %1170 = vmatprep.subr.mxu0 0.0
    %1171 = vmatpush1.msra.mxu0 0.0
    %1172 = vmatprep.subr.mxu0 0.0
    %1173 = vmatpush1.msra.mxu0 0.0
    %1174 = vmatprep.subr.mxu0 0.0
    %1175 = vmatpush1.msra.mxu0 0.0
    %1176 = vmatprep.mubr.f32.mxu0 0.0
    %1177 = vmatmul.mubr.f32.gmra.mrb[0].mxu0 %v1110
    %v1178 = vpop.f32.mrb[0].mxu0
    %v1179 = vadd.f32 %v61, %v1178
    %v1180 = vpop.f32.mrb[0].mxu0
    %1181 = vdwg.mxu0
    %1183 = vrot.lane.b32.xlu0 %v1108, 96
    %v1184 = vpop.permute.xlu0 %1183
    %v1185 = vsel %vm62, %v1184, 0
    %1187 = vmatprep.subr.mxu0 0.0
    %1188 = vmatpush1.msra.mxu0 %v45
    %1189 = vmatprep.subr.mxu0 0.0
    %1190 = vmatpush1.msra.mxu0 %v46
    %1191 = vmatprep.subr.mxu0 0.0
    %1192 = vmatpush1.msra.mxu0 %v47
    %1193 = vmatprep.subr.mxu0 0.0
    %1194 = vmatpush1.msra.mxu0 %v48
    %1195 = vmatprep.subr.mxu0 0.0
    %1196 = vmatpush1.msra.mxu0 0.0
    %1197 = vmatprep.subr.mxu0 0.0
    %1198 = vmatpush1.msra.mxu0 0.0
    %1199 = vmatprep.subr.mxu0 0.0
    %1200 = vmatpush1.msra.mxu0 0.0
    %1201 = vmatprep.subr.mxu0 0.0
    %1202 = vmatpush1.msra.mxu0 0.0
    %1203 = vmatprep.subr.mxu0 0.0
    %1204 = vmatpush1.msra.mxu0 0.0
    %1205 = vmatprep.subr.mxu0 0.0
    %1206 = vmatpush1.msra.mxu0 0.0
    %1207 = vmatprep.subr.mxu0 0.0
    %1208 = vmatpush1.msra.mxu0 0.0
    %1209 = vmatprep.subr.mxu0 0.0
    %1210 = vmatpush1.msra.mxu0 0.0
    %1211 = vmatprep.subr.mxu0 0.0
    %1212 = vmatpush1.msra.mxu0 0.0
    %1213 = vmatprep.subr.mxu0 0.0
    %1214 = vmatpush1.msra.mxu0 0.0
    %1215 = vmatprep.subr.mxu0 0.0
    %1216 = vmatpush1.msra.mxu0 0.0
    %1217 = vmatprep.subr.mxu0 0.0
    %1218 = vmatpush1.msra.mxu0 0.0
    %1219 = vmatprep.subr.mxu0 0.0
    %1220 = vmatpush1.msra.mxu0 0.0
    %1221 = vmatprep.subr.mxu0 0.0
    %1222 = vmatpush1.msra.mxu0 0.0
    %1223 = vmatprep.subr.mxu0 0.0
    %1224 = vmatpush1.msra.mxu0 0.0
    %1225 = vmatprep.subr.mxu0 0.0
    %1226 = vmatpush1.msra.mxu0 0.0
    %1227 = vmatprep.subr.mxu0 0.0
    %1228 = vmatpush1.msra.mxu0 0.0
    %1229 = vmatprep.subr.mxu0 0.0
    %1230 = vmatpush1.msra.mxu0 0.0
    %1231 = vmatprep.subr.mxu0 0.0
    %1232 = vmatpush1.msra.mxu0 0.0
    %1233 = vmatprep.subr.mxu0 0.0
    %1234 = vmatpush1.msra.mxu0 0.0
    %1235 = vmatprep.subr.mxu0 0.0
    %1236 = vmatpush1.msra.mxu0 0.0
    %1237 = vmatprep.subr.mxu0 0.0
    %1238 = vmatpush1.msra.mxu0 0.0
    %1239 = vmatprep.subr.mxu0 0.0
    %1240 = vmatpush1.msra.mxu0 0.0
    %1241 = vmatprep.subr.mxu0 0.0
    %1242 = vmatpush1.msra.mxu0 0.0
    %1243 = vmatprep.subr.mxu0 0.0
    %1244 = vmatpush1.msra.mxu0 0.0
    %1245 = vmatprep.subr.mxu0 0.0
    %1246 = vmatpush1.msra.mxu0 0.0
    %1247 = vmatprep.subr.mxu0 0.0
    %1248 = vmatpush1.msra.mxu0 0.0
    %1249 = vmatprep.subr.mxu0 0.0
    %1250 = vmatpush1.msra.mxu0 0.0
    %1251 = vmatprep.mubr.f32.mxu0 0.0
    %1252 = vmatmul.mubr.f32.gmra.mrb[0].mxu0 %v1185
    %v1253 = vpop.f32.mrb[0].mxu0
    %v1254 = vadd.f32 %v139, %v1253
    %v1255 = vpop.f32.mrb[0].mxu0
    %1256 = vdwg.mxu0
    %v1257 = vadd.f32 %v1179, %v1254
    %v1258 = vxor.u32 %v1257, 2147483648
    %v1259 = vmul.f32 %v1258, 1.442695
    %v1260 = vpow.pop %v1259
    %v1261 = vadd.f32 %v1260, 1.0
    %v1262 = vrcp.pop %v1261
    %v1263 = vmul.f32 1.0, %v1262
    %1265 = vrot.lane.b32.xlu0 %v1254, 64
    %v1266 = vpop.permute.xlu0 %1265
    %v1268 = vmul.f32 %v1263, %v1266
    %1270 = vrot.lane.b32.xlu0 %v1268, 64
    %v1271 = vpop.permute.xlu0 %1270
    %v1273 = vadd.f32 %v1179, %v1271
    %v1274 = vtanh.pop %v1273
    %v1275 = vsub.f32 1.0, %v1263
    %1277 = vrot.lane.b32.xlu0 %v1274, 96
    %v1278 = vpop.permute.xlu0 %1277
    %v1280 = vmul.f32 %v1275, %v1278
    %v1281 = vmul.f32 %v1263, %v1108
    %v1282 = vadd.f32 %v1280, %v1281
    %v1284 = vsel %vm62, %v40, 0
    %1286 = vmatprep.subr.mxu0 0.0
    %1287 = vmatpush1.msra.mxu0 %v41
    %1288 = vmatprep.subr.mxu0 0.0
    %1289 = vmatpush1.msra.mxu0 %v42
    %1290 = vmatprep.subr.mxu0 0.0
    %1291 = vmatpush1.msra.mxu0 %v43
    %1292 = vmatprep.subr.mxu0 0.0
    %1293 = vmatpush1.msra.mxu0 %v44
    %1294 = vmatprep.subr.mxu0 0.0
    %1295 = vmatpush1.msra.mxu0 0.0
    %1296 = vmatprep.subr.mxu0 0.0
    %1297 = vmatpush1.msra.mxu0 0.0
    %1298 = vmatprep.subr.mxu0 0.0
    %1299 = vmatpush1.msra.mxu0 0.0
    %1300 = vmatprep.subr.mxu0 0.0
    %1301 = vmatpush1.msra.mxu0 0.0
    %1302 = vmatprep.subr.mxu0 0.0
    %1303 = vmatpush1.msra.mxu0 0.0
    %1304 = vmatprep.subr.mxu0 0.0
    %1305 = vmatpush1.msra.mxu0 0.0
    %1306 = vmatprep.subr.mxu0 0.0
    %1307 = vmatpush1.msra.mxu0 0.0
    %1308 = vmatprep.subr.mxu0 0.0
    %1309 = vmatpush1.msra.mxu0 0.0
    %1310 = vmatprep.subr.mxu0 0.0
    %1311 = vmatpush1.msra.mxu0 0.0
    %1312 = vmatprep.subr.mxu0 0.0
    %1313 = vmatpush1.msra.mxu0 0.0
    %1314 = vmatprep.subr.mxu0 0.0
    %1315 = vmatpush1.msra.mxu0 0.0
    %1316 = vmatprep.subr.mxu0 0.0
    %1317 = vmatpush1.msra.mxu0 0.0
    %1318 = vmatprep.subr.mxu0 0.0
    %1319 = vmatpush1.msra.mxu0 0.0
    %1320 = vmatprep.subr.mxu0 0.0
    %1321 = vmatpush1.msra.mxu0 0.0
    %1322 = vmatprep.subr.mxu0 0.0
    %1323 = vmatpush1.msra.mxu0 0.0
    %1324 = vmatprep.subr.mxu0 0.0
    %1325 = vmatpush1.msra.mxu0 0.0
    %1326 = vmatprep.subr.mxu0 0.0
    %1327 = vmatpush1.msra.mxu0 0.0
    %1328 = vmatprep.subr.mxu0 0.0
    %1329 = vmatpush1.msra.mxu0 0.0
    %1330 = vmatprep.subr.mxu0 0.0
    %1331 = vmatpush1.msra.mxu0 0.0
    %1332 = vmatprep.subr.mxu0 0.0
    %1333 = vmatpush1.msra.mxu0 0.0
    %1334 = vmatprep.subr.mxu0 0.0
    %1335 = vmatpush1.msra.mxu0 0.0
    %1336 = vmatprep.subr.mxu0 0.0
    %1337 = vmatpush1.msra.mxu0 0.0
    %1338 = vmatprep.subr.mxu0 0.0
    %1339 = vmatpush1.msra.mxu0 0.0
    %1340 = vmatprep.subr.mxu0 0.0
    %1341 = vmatpush1.msra.mxu0 0.0
    %1342 = vmatprep.subr.mxu0 0.0
    %1343 = vmatpush1.msra.mxu0 0.0
    %1344 = vmatprep.subr.mxu0 0.0
    %1345 = vmatpush1.msra.mxu0 0.0
    %1346 = vmatprep.subr.mxu0 0.0
    %1347 = vmatpush1.msra.mxu0 0.0
    %1348 = vmatprep.subr.mxu0 0.0
    %1349 = vmatpush1.msra.mxu0 0.0
    %1350 = vmatprep.mubr.f32.mxu0 0.0
    %1351 = vmatmul.mubr.f32.gmra.mrb[0].mxu0 %v1284
    %v1352 = vpop.f32.mrb[0].mxu0
    %v1353 = vadd.f32 %v61, %v1352
    %v1354 = vpop.f32.mrb[0].mxu0
    %1355 = vdwg.mxu0
    %1357 = vrot.lane.b32.xlu0 %v1282, 96
    %v1358 = vpop.permute.xlu0 %1357
    %v1359 = vsel %vm62, %v1358, 0
    %1361 = vmatprep.subr.mxu0 0.0
    %1362 = vmatpush1.msra.mxu0 %v45
    %1363 = vmatprep.subr.mxu0 0.0
    %1364 = vmatpush1.msra.mxu0 %v46
    %1365 = vmatprep.subr.mxu0 0.0
    %1366 = vmatpush1.msra.mxu0 %v47
    %1367 = vmatprep.subr.mxu0 0.0
    %1368 = vmatpush1.msra.mxu0 %v48
    %1369 = vmatprep.subr.mxu0 0.0
    %1370 = vmatpush1.msra.mxu0 0.0
    %1371 = vmatprep.subr.mxu0 0.0
    %1372 = vmatpush1.msra.mxu0 0.0
    %1373 = vmatprep.subr.mxu0 0.0
    %1374 = vmatpush1.msra.mxu0 0.0
    %1375 = vmatprep.subr.mxu0 0.0
    %1376 = vmatpush1.msra.mxu0 0.0
    %1377 = vmatprep.subr.mxu0 0.0
    %1378 = vmatpush1.msra.mxu0 0.0
    %1379 = vmatprep.subr.mxu0 0.0
    %1380 = vmatpush1.msra.mxu0 0.0
    %1381 = vmatprep.subr.mxu0 0.0
    %1382 = vmatpush1.msra.mxu0 0.0
    %1383 = vmatprep.subr.mxu0 0.0
    %1384 = vmatpush1.msra.mxu0 0.0
    %1385 = vmatprep.subr.mxu0 0.0
    %1386 = vmatpush1.msra.mxu0 0.0
    %1387 = vmatprep.subr.mxu0 0.0
    %1388 = vmatpush1.msra.mxu0 0.0
    %1389 = vmatprep.subr.mxu0 0.0
    %1390 = vmatpush1.msra.mxu0 0.0
    %1391 = vmatprep.subr.mxu0 0.0
    %1392 = vmatpush1.msra.mxu0 0.0
    %1393 = vmatprep.subr.mxu0 0.0
    %1394 = vmatpush1.msra.mxu0 0.0
    %1395 = vmatprep.subr.mxu0 0.0
    %1396 = vmatpush1.msra.mxu0 0.0
    %1397 = vmatprep.subr.mxu0 0.0
    %1398 = vmatpush1.msra.mxu0 0.0
    %1399 = vmatprep.subr.mxu0 0.0
    %1400 = vmatpush1.msra.mxu0 0.0
    %1401 = vmatprep.subr.mxu0 0.0
    %1402 = vmatpush1.msra.mxu0 0.0
    %1403 = vmatprep.subr.mxu0 0.0
    %1404 = vmatpush1.msra.mxu0 0.0
    %1405 = vmatprep.subr.mxu0 0.0
    %1406 = vmatpush1.msra.mxu0 0.0
    %1407 = vmatprep.subr.mxu0 0.0
    %1408 = vmatpush1.msra.mxu0 0.0
    %1409 = vmatprep.subr.mxu0 0.0
    %1410 = vmatpush1.msra.mxu0 0.0
    %1411 = vmatprep.subr.mxu0 0.0
    %1412 = vmatpush1.msra.mxu0 0.0
    %1413 = vmatprep.subr.mxu0 0.0
    %1414 = vmatpush1.msra.mxu0 0.0
    %1415 = vmatprep.subr.mxu0 0.0
    %1416 = vmatpush1.msra.mxu0 0.0
    %1417 = vmatprep.subr.mxu0 0.0
    %1418 = vmatpush1.msra.mxu0 0.0
    %1419 = vmatprep.subr.mxu0 0.0
    %1420 = vmatpush1.msra.mxu0 0.0
    %1421 = vmatprep.subr.mxu0 0.0
    %1422 = vmatpush1.msra.mxu0 0.0
    %1423 = vmatprep.subr.mxu0 0.0
    %1424 = vmatpush1.msra.mxu0 0.0
    %1425 = vmatprep.mubr.f32.mxu0 0.0
    %1426 = vmatmul.mubr.f32.gmra.mrb[0].mxu0 %v1359
    %v1427 = vpop.f32.mrb[0].mxu0
    %v1428 = vadd.f32 %v139, %v1427
    %v1429 = vpop.f32.mrb[0].mxu0
    %1430 = vdwg.mxu0
    %v1431 = vadd.f32 %v1353, %v1428
    %v1432 = vxor.u32 %v1431, 2147483648
    %v1433 = vmul.f32 %v1432, 1.442695
    %v1434 = vpow.pop %v1433
    %v1435 = vadd.f32 %v1434, 1.0
    %v1436 = vrcp.pop %v1435
    %v1437 = vmul.f32 1.0, %v1436
    %1439 = vrot.lane.b32.xlu0 %v1428, 64
    %v1440 = vpop.permute.xlu0 %1439
    %v1442 = vmul.f32 %v1437, %v1440
    %1444 = vrot.lane.b32.xlu0 %v1442, 64
    %v1445 = vpop.permute.xlu0 %1444
    %v1447 = vadd.f32 %v1353, %v1445
    %v1448 = vtanh.pop %v1447
    %v1449 = vsub.f32 1.0, %v1437
    %1451 = vrot.lane.b32.xlu0 %v1448, 96
    %v1452 = vpop.permute.xlu0 %1451
    %v1454 = vmul.f32 %v1449, %v1452
    %v1455 = vmul.f32 %v1437, %v1282
    %v1456 = vadd.f32 %v1454, %v1455
    %v1457 = vlaneseq
    %v1458 = vshrl.u32 %v1457, 7
    %v1459 = vsub.s32 2, %v1458
    %v1460 = vrot.slane %v57, %v1459
    %1461 = vmatprep.subr.mxu0 0.0
    %1462 = vmatpush1.msra.mxu0 %v49
    %1463 = vmatprep.subr.mxu0 0.0
    %1464 = vmatpush1.msra.mxu0 %v50
    %1465 = vmatprep.subr.mxu0 0.0
    %1466 = vmatpush1.msra.mxu0 %v51
    %1467 = vmatprep.subr.mxu0 0.0
    %1468 = vmatpush1.msra.mxu0 %v52
    %1469 = vmatprep.subr.mxu0 0.0
    %1470 = vmatpush1.msra.mxu0 0.0
    %1471 = vmatprep.subr.mxu0 0.0
    %1472 = vmatpush1.msra.mxu0 0.0
    %1473 = vmatprep.subr.mxu0 0.0
    %1474 = vmatpush1.msra.mxu0 0.0
    %1475 = vmatprep.subr.mxu0 0.0
    %1476 = vmatpush1.msra.mxu0 0.0
    %1477 = vmatprep.subr.mxu0 0.0
    %1478 = vmatpush1.msra.mxu0 0.0
    %1479 = vmatprep.subr.mxu0 0.0
    %1480 = vmatpush1.msra.mxu0 0.0
    %1481 = vmatprep.subr.mxu0 0.0
    %1482 = vmatpush1.msra.mxu0 0.0
    %1483 = vmatprep.subr.mxu0 0.0
    %1484 = vmatpush1.msra.mxu0 0.0
    %1485 = vmatprep.subr.mxu0 0.0
    %1486 = vmatpush1.msra.mxu0 0.0
    %1487 = vmatprep.subr.mxu0 0.0
    %1488 = vmatpush1.msra.mxu0 0.0
    %1489 = vmatprep.subr.mxu0 0.0
    %1490 = vmatpush1.msra.mxu0 0.0
    %1491 = vmatprep.subr.mxu0 0.0
    %1492 = vmatpush1.msra.mxu0 0.0
    %1493 = vmatprep.subr.mxu0 0.0
    %1494 = vmatpush1.msra.mxu0 0.0
    %1495 = vmatprep.subr.mxu0 0.0
    %1496 = vmatpush1.msra.mxu0 0.0
    %1497 = vmatprep.subr.mxu0 0.0
    %1498 = vmatpush1.msra.mxu0 0.0
    %1499 = vmatprep.subr.mxu0 0.0
    %1500 = vmatpush1.msra.mxu0 0.0
    %1501 = vmatprep.subr.mxu0 0.0
    %1502 = vmatpush1.msra.mxu0 0.0
    %1503 = vmatprep.subr.mxu0 0.0
    %1504 = vmatpush1.msra.mxu0 0.0
    %1505 = vmatprep.subr.mxu0 0.0
    %1506 = vmatpush1.msra.mxu0 0.0
    %1507 = vmatprep.subr.mxu0 0.0
    %1508 = vmatpush1.msra.mxu0 0.0
    %1509 = vmatprep.subr.mxu0 0.0
    %1510 = vmatpush1.msra.mxu0 0.0
    %1511 = vmatprep.subr.mxu0 0.0
    %1512 = vmatpush1.msra.mxu0 0.0
    %1513 = vmatprep.subr.mxu0 0.0
    %1514 = vmatpush1.msra.mxu0 0.0
    %1515 = vmatprep.subr.mxu0 0.0
    %1516 = vmatpush1.msra.mxu0 0.0
    %1517 = vmatprep.subr.mxu0 0.0
    %1518 = vmatpush1.msra.mxu0 0.0
    %1519 = vmatprep.subr.mxu0 0.0
    %1520 = vmatpush1.msra.mxu0 0.0
    %1521 = vmatprep.subr.mxu0 0.0
    %1522 = vmatpush1.msra.mxu0 0.0
    %1523 = vmatprep.subr.mxu0 0.0
    %1524 = vmatpush1.msra.mxu0 0.0
    %1525 = vmatprep.mubr.f32.mxu0 0.0
    %1526 = vmatmul.mubr.f32.gmra.mrb[0].mxu0 %v1284
    %v1527 = vpop.f32.mrb[0].mxu0
    %v1528 = vadd.f32 %v1460, %v1527
    %v1529 = vpop.f32.mrb[0].mxu0
    %1530 = vdwg.mxu0
    %v1531 = vlaneseq
    %v1532 = vshrl.u32 %v1531, 7
    %v1533 = vsub.s32 3, %v1532
    %v1534 = vrot.slane %v57, %v1533
    %1535 = vmatprep.subr.mxu0 0.0
    %1536 = vmatpush1.msra.mxu0 %v53
    %1537 = vmatprep.subr.mxu0 0.0
    %1538 = vmatpush1.msra.mxu0 %v54
    %1539 = vmatprep.subr.mxu0 0.0
    %1540 = vmatpush1.msra.mxu0 %v55
    %1541 = vmatprep.subr.mxu0 0.0
    %1542 = vmatpush1.msra.mxu0 %v56
    %1543 = vmatprep.subr.mxu0 0.0
    %1544 = vmatpush1.msra.mxu0 0.0
    %1545 = vmatprep.subr.mxu0 0.0
    %1546 = vmatpush1.msra.mxu0 0.0
    %1547 = vmatprep.subr.mxu0 0.0
    %1548 = vmatpush1.msra.mxu0 0.0
    %1549 = vmatprep.subr.mxu0 0.0
    %1550 = vmatpush1.msra.mxu0 0.0
    %1551 = vmatprep.subr.mxu0 0.0
    %1552 = vmatpush1.msra.mxu0 0.0
    %1553 = vmatprep.subr.mxu0 0.0
    %1554 = vmatpush1.msra.mxu0 0.0
    %1555 = vmatprep.subr.mxu0 0.0
    %1556 = vmatpush1.msra.mxu0 0.0
    %1557 = vmatprep.subr.mxu0 0.0
    %1558 = vmatpush1.msra.mxu0 0.0
    %1559 = vmatprep.subr.mxu0 0.0
    %1560 = vmatpush1.msra.mxu0 0.0
    %1561 = vmatprep.subr.mxu0 0.0
    %1562 = vmatpush1.msra.mxu0 0.0
    %1563 = vmatprep.subr.mxu0 0.0
    %1564 = vmatpush1.msra.mxu0 0.0
    %1565 = vmatprep.subr.mxu0 0.0
    %1566 = vmatpush1.msra.mxu0 0.0
    %1567 = vmatprep.subr.mxu0 0.0
    %1568 = vmatpush1.msra.mxu0 0.0
    %1569 = vmatprep.subr.mxu0 0.0
    %1570 = vmatpush1.msra.mxu0 0.0
    %1571 = vmatprep.subr.mxu0 0.0
    %1572 = vmatpush1.msra.mxu0 0.0
    %1573 = vmatprep.subr.mxu0 0.0
    %1574 = vmatpush1.msra.mxu0 0.0
    %1575 = vmatprep.subr.mxu0 0.0
    %1576 = vmatpush1.msra.mxu0 0.0
    %1577 = vmatprep.subr.mxu0 0.0
    %1578 = vmatpush1.msra.mxu0 0.0
    %1579 = vmatprep.subr.mxu0 0.0
    %1580 = vmatpush1.msra.mxu0 0.0
    %1581 = vmatprep.subr.mxu0 0.0
    %1582 = vmatpush1.msra.mxu0 0.0
    %1583 = vmatprep.subr.mxu0 0.0
    %1584 = vmatpush1.msra.mxu0 0.0
    %1585 = vmatprep.subr.mxu0 0.0
    %1586 = vmatpush1.msra.mxu0 0.0
    %1587 = vmatprep.subr.mxu0 0.0
    %1588 = vmatpush1.msra.mxu0 0.0
    %1589 = vmatprep.subr.mxu0 0.0
    %1590 = vmatpush1.msra.mxu0 0.0
    %1591 = vmatprep.subr.mxu0 0.0
    %1592 = vmatpush1.msra.mxu0 0.0
    %1593 = vmatprep.subr.mxu0 0.0
    %1594 = vmatpush1.msra.mxu0 0.0
    %1595 = vmatprep.subr.mxu0 0.0
    %1596 = vmatpush1.msra.mxu0 0.0
    %1597 = vmatprep.subr.mxu0 0.0
    %1598 = vmatpush1.msra.mxu0 0.0
    %1599 = vmatprep.mubr.f32.mxu0 0.0
    %1600 = vmatmul.mubr.f32.gmra.mrb[0].mxu0 %v141
    %v1601 = vpop.f32.mrb[0].mxu0
    %v1602 = vadd.f32 %v1534, %v1601
    %v1603 = vpop.f32.mrb[0].mxu0
    %1604 = vdwg.mxu0
    %v1605 = vadd.f32 %v1528, %v1602
    %v1606 = vxor.u32 %v1605, 2147483648
    %v1607 = vmul.f32 %v1606, 1.442695
    %v1608 = vpow.pop %v1607
    %v1609 = vadd.f32 %v1608, 1.0
    %v1610 = vrcp.pop %v1609
    %v1611 = vmul.f32 1.0, %v1610
    %1613 = vrot.lane.b32.xlu0 %v1602, 64
    %v1614 = vpop.permute.xlu0 %1613
    %v1616 = vmul.f32 %v1611, %v1614
    %1618 = vrot.lane.b32.xlu0 %v1616, 64
    %v1619 = vpop.permute.xlu0 %1618
    %v1621 = vadd.f32 %v1528, %v1619
    %v1622 = vtanh.pop %v1621
    %v1623 = vsub.f32 1.0, %v1611
    %1625 = vrot.lane.b32.xlu0 %v1622, 96
    %v1626 = vpop.permute.xlu0 %1625
    %v1628 = vmul.f32 %v1623, %v1626
    %v1629 = vmul.f32 %v1611, 0.0
    %v1630 = vadd.f32 %v1628, %v1629
    %1631 = vmatprep.subr.mxu0 0.0
    %1632 = vmatpush1.msra.mxu0 %v49
    %1633 = vmatprep.subr.mxu0 0.0
    %1634 = vmatpush1.msra.mxu0 %v50
    %1635 = vmatprep.subr.mxu0 0.0
    %1636 = vmatpush1.msra.mxu0 %v51
    %1637 = vmatprep.subr.mxu0 0.0
    %1638 = vmatpush1.msra.mxu0 %v52
    %1639 = vmatprep.subr.mxu0 0.0
    %1640 = vmatpush1.msra.mxu0 0.0
    %1641 = vmatprep.subr.mxu0 0.0
    %1642 = vmatpush1.msra.mxu0 0.0
    %1643 = vmatprep.subr.mxu0 0.0
    %1644 = vmatpush1.msra.mxu0 0.0
    %1645 = vmatprep.subr.mxu0 0.0
    %1646 = vmatpush1.msra.mxu0 0.0
    %1647 = vmatprep.subr.mxu0 0.0
    %1648 = vmatpush1.msra.mxu0 0.0
    %1649 = vmatprep.subr.mxu0 0.0
    %1650 = vmatpush1.msra.mxu0 0.0
    %1651 = vmatprep.subr.mxu0 0.0
    %1652 = vmatpush1.msra.mxu0 0.0
    %1653 = vmatprep.subr.mxu0 0.0
    %1654 = vmatpush1.msra.mxu0 0.0
    %1655 = vmatprep.subr.mxu0 0.0
    %1656 = vmatpush1.msra.mxu0 0.0
    %1657 = vmatprep.subr.mxu0 0.0
    %1658 = vmatpush1.msra.mxu0 0.0
    %1659 = vmatprep.subr.mxu0 0.0
    %1660 = vmatpush1.msra.mxu0 0.0
    %1661 = vmatprep.subr.mxu0 0.0
    %1662 = vmatpush1.msra.mxu0 0.0
    %1663 = vmatprep.subr.mxu0 0.0
    %1664 = vmatpush1.msra.mxu0 0.0
    %1665 = vmatprep.subr.mxu0 0.0
    %1666 = vmatpush1.msra.mxu0 0.0
    %1667 = vmatprep.subr.mxu0 0.0
    %1668 = vmatpush1.msra.mxu0 0.0
    %1669 = vmatprep.subr.mxu0 0.0
    %1670 = vmatpush1.msra.mxu0 0.0
    %1671 = vmatprep.subr.mxu0 0.0
    %1672 = vmatpush1.msra.mxu0 0.0
    %1673 = vmatprep.subr.mxu0 0.0
    %1674 = vmatpush1.msra.mxu0 0.0
    %1675 = vmatprep.subr.mxu0 0.0
    %1676 = vmatpush1.msra.mxu0 0.0
    %1677 = vmatprep.subr.mxu0 0.0
    %1678 = vmatpush1.msra.mxu0 0.0
    %1679 = vmatprep.subr.mxu0 0.0
    %1680 = vmatpush1.msra.mxu0 0.0
    %1681 = vmatprep.subr.mxu0 0.0
    %1682 = vmatpush1.msra.mxu0 0.0
    %1683 = vmatprep.subr.mxu0 0.0
    %1684 = vmatpush1.msra.mxu0 0.0
    %1685 = vmatprep.subr.mxu0 0.0
    %1686 = vmatpush1.msra.mxu0 0.0
    %1687 = vmatprep.subr.mxu0 0.0
    %1688 = vmatpush1.msra.mxu0 0.0
    %1689 = vmatprep.subr.mxu0 0.0
    %1690 = vmatpush1.msra.mxu0 0.0
    %1691 = vmatprep.subr.mxu0 0.0
    %1692 = vmatpush1.msra.mxu0 0.0
    %1693 = vmatprep.subr.mxu0 0.0
    %1694 = vmatpush1.msra.mxu0 0.0
    %1695 = vmatprep.mubr.f32.mxu0 0.0
    %1696 = vmatmul.mubr.f32.gmra.mrb[0].mxu0 %v1110
    %v1697 = vpop.f32.mrb[0].mxu0
    %v1698 = vadd.f32 %v1460, %v1697
    %v1699 = vpop.f32.mrb[0].mxu0
    %1700 = vdwg.mxu0
    %1702 = vrot.lane.b32.xlu0 %v1630, 96
    %v1703 = vpop.permute.xlu0 %1702
    %v1704 = vsel %vm62, %v1703, 0
    %1706 = vmatprep.subr.mxu0 0.0
    %1707 = vmatpush1.msra.mxu0 %v53
    %1708 = vmatprep.subr.mxu0 0.0
    %1709 = vmatpush1.msra.mxu0 %v54
    %1710 = vmatprep.subr.mxu0 0.0
    %1711 = vmatpush1.msra.mxu0 %v55
    %1712 = vmatprep.subr.mxu0 0.0
    %1713 = vmatpush1.msra.mxu0 %v56
    %1714 = vmatprep.subr.mxu0 0.0
    %1715 = vmatpush1.msra.mxu0 0.0
    %1716 = vmatprep.subr.mxu0 0.0
    %1717 = vmatpush1.msra.mxu0 0.0
    %1718 = vmatprep.subr.mxu0 0.0
    %1719 = vmatpush1.msra.mxu0 0.0
    %1720 = vmatprep.subr.mxu0 0.0
    %1721 = vmatpush1.msra.mxu0 0.0
    %1722 = vmatprep.subr.mxu0 0.0
    %1723 = vmatpush1.msra.mxu0 0.0
    %1724 = vmatprep.subr.mxu0 0.0
    %1725 = vmatpush1.msra.mxu0 0.0
    %1726 = vmatprep.subr.mxu0 0.0
    %1727 = vmatpush1.msra.mxu0 0.0
    %1728 = vmatprep.subr.mxu0 0.0
    %1729 = vmatpush1.msra.mxu0 0.0
    %1730 = vmatprep.subr.mxu0 0.0
    %1731 = vmatpush1.msra.mxu0 0.0
    %1732 = vmatprep.subr.mxu0 0.0
    %1733 = vmatpush1.msra.mxu0 0.0
    %1734 = vmatprep.subr.mxu0 0.0
    %1735 = vmatpush1.msra.mxu0 0.0
    %1736 = vmatprep.subr.mxu0 0.0
    %1737 = vmatpush1.msra.mxu0 0.0
    %1738 = vmatprep.subr.mxu0 0.0
    %1739 = vmatpush1.msra.mxu0 0.0
    %1740 = vmatprep.subr.mxu0 0.0
    %1741 = vmatpush1.msra.mxu0 0.0
    %1742 = vmatprep.subr.mxu0 0.0
    %1743 = vmatpush1.msra.mxu0 0.0
    %1744 = vmatprep.subr.mxu0 0.0
    %1745 = vmatpush1.msra.mxu0 0.0
    %1746 = vmatprep.subr.mxu0 0.0
    %1747 = vmatpush1.msra.mxu0 0.0
    %1748 = vmatprep.subr.mxu0 0.0
    %1749 = vmatpush1.msra.mxu0 0.0
    %1750 = vmatprep.subr.mxu0 0.0
    %1751 = vmatpush1.msra.mxu0 0.0
    %1752 = vmatprep.subr.mxu0 0.0
    %1753 = vmatpush1.msra.mxu0 0.0
    %1754 = vmatprep.subr.mxu0 0.0
    %1755 = vmatpush1.msra.mxu0 0.0
    %1756 = vmatprep.subr.mxu0 0.0
    %1757 = vmatpush1.msra.mxu0 0.0
    %1758 = vmatprep.subr.mxu0 0.0
    %1759 = vmatpush1.msra.mxu0 0.0
    %1760 = vmatprep.subr.mxu0 0.0
    %1761 = vmatpush1.msra.mxu0 0.0
    %1762 = vmatprep.subr.mxu0 0.0
    %1763 = vmatpush1.msra.mxu0 0.0
    %1764 = vmatprep.subr.mxu0 0.0
    %1765 = vmatpush1.msra.mxu0 0.0
    %1766 = vmatprep.subr.mxu0 0.0
    %1767 = vmatpush1.msra.mxu0 0.0
    %1768 = vmatprep.subr.mxu0 0.0
    %1769 = vmatpush1.msra.mxu0 0.0
    %1770 = vmatprep.mubr.f32.mxu0 0.0
    %1771 = vmatmul.mubr.f32.gmra.mrb[0].mxu0 %v1704
    %v1772 = vpop.f32.mrb[0].mxu0
    %v1773 = vadd.f32 %v1534, %v1772
    %v1774 = vpop.f32.mrb[0].mxu0
    %1775 = vdwg.mxu0
    %v1776 = vadd.f32 %v1698, %v1773
    %v1777 = vxor.u32 %v1776, 2147483648
    %v1778 = vmul.f32 %v1777, 1.442695
    %v1779 = vpow.pop %v1778
    %v1780 = vadd.f32 %v1779, 1.0
    %v1781 = vrcp.pop %v1780
    %v1782 = vmul.f32 1.0, %v1781
    %1784 = vrot.lane.b32.xlu0 %v1773, 64
    %v1785 = vpop.permute.xlu0 %1784
    %v1787 = vmul.f32 %v1782, %v1785
    %1789 = vrot.lane.b32.xlu0 %v1787, 64
    %v1790 = vpop.permute.xlu0 %1789
    %v1792 = vadd.f32 %v1698, %v1790
    %v1793 = vtanh.pop %v1792
    %v1794 = vsub.f32 1.0, %v1782
    %1796 = vrot.lane.b32.xlu0 %v1793, 96
    %v1797 = vpop.permute.xlu0 %1796
    %v1799 = vmul.f32 %v1794, %v1797
    %v1800 = vmul.f32 %v1782, %v1630
    %v1801 = vadd.f32 %v1799, %v1800
    %1802 = vmatprep.subr.mxu0 0.0
    %1803 = vmatpush1.msra.mxu0 %v49
    %1804 = vmatprep.subr.mxu0 0.0
    %1805 = vmatpush1.msra.mxu0 %v50
    %1806 = vmatprep.subr.mxu0 0.0
    %1807 = vmatpush1.msra.mxu0 %v51
    %1808 = vmatprep.subr.mxu0 0.0
    %1809 = vmatpush1.msra.mxu0 %v52
    %1810 = vmatprep.subr.mxu0 0.0
    %1811 = vmatpush1.msra.mxu0 0.0
    %1812 = vmatprep.subr.mxu0 0.0
    %1813 = vmatpush1.msra.mxu0 0.0
    %1814 = vmatprep.subr.mxu0 0.0
    %1815 = vmatpush1.msra.mxu0 0.0
    %1816 = vmatprep.subr.mxu0 0.0
    %1817 = vmatpush1.msra.mxu0 0.0
    %1818 = vmatprep.subr.mxu0 0.0
    %1819 = vmatpush1.msra.mxu0 0.0
    %1820 = vmatprep.subr.mxu0 0.0
    %1821 = vmatpush1.msra.mxu0 0.0
    %1822 = vmatprep.subr.mxu0 0.0
    %1823 = vmatpush1.msra.mxu0 0.0
    %1824 = vmatprep.subr.mxu0 0.0
    %1825 = vmatpush1.msra.mxu0 0.0
    %1826 = vmatprep.subr.mxu0 0.0
    %1827 = vmatpush1.msra.mxu0 0.0
    %1828 = vmatprep.subr.mxu0 0.0
    %1829 = vmatpush1.msra.mxu0 0.0
    %1830 = vmatprep.subr.mxu0 0.0
    %1831 = vmatpush1.msra.mxu0 0.0
    %1832 = vmatprep.subr.mxu0 0.0
    %1833 = vmatpush1.msra.mxu0 0.0
    %1834 = vmatprep.subr.mxu0 0.0
    %1835 = vmatpush1.msra.mxu0 0.0
    %1836 = vmatprep.subr.mxu0 0.0
    %1837 = vmatpush1.msra.mxu0 0.0
    %1838 = vmatprep.subr.mxu0 0.0
    %1839 = vmatpush1.msra.mxu0 0.0
    %1840 = vmatprep.subr.mxu0 0.0
    %1841 = vmatpush1.msra.mxu0 0.0
    %1842 = vmatprep.subr.mxu0 0.0
    %1843 = vmatpush1.msra.mxu0 0.0
    %1844 = vmatprep.subr.mxu0 0.0
    %1845 = vmatpush1.msra.mxu0 0.0
    %1846 = vmatprep.subr.mxu0 0.0
    %1847 = vmatpush1.msra.mxu0 0.0
    %1848 = vmatprep.subr.mxu0 0.0
    %1849 = vmatpush1.msra.mxu0 0.0
    %1850 = vmatprep.subr.mxu0 0.0
    %1851 = vmatpush1.msra.mxu0 0.0
    %1852 = vmatprep.subr.mxu0 0.0
    %1853 = vmatpush1.msra.mxu0 0.0
    %1854 = vmatprep.subr.mxu0 0.0
    %1855 = vmatpush1.msra.mxu0 0.0
    %1856 = vmatprep.subr.mxu0 0.0
    %1857 = vmatpush1.msra.mxu0 0.0
    %1858 = vmatprep.subr.mxu0 0.0
    %1859 = vmatpush1.msra.mxu0 0.0
    %1860 = vmatprep.subr.mxu0 0.0
    %1861 = vmatpush1.msra.mxu0 0.0
    %1862 = vmatprep.subr.mxu0 0.0
    %1863 = vmatpush1.msra.mxu0 0.0
    %1864 = vmatprep.subr.mxu0 0.0
    %1865 = vmatpush1.msra.mxu0 0.0
    %1866 = vmatprep.mubr.f32.mxu0 0.0
    %1867 = vmatmul.mubr.f32.gmra.mrb[0].mxu0 %v936
    %v1868 = vpop.f32.mrb[0].mxu0
    %v1869 = vadd.f32 %v1460, %v1868
    %v1870 = vpop.f32.mrb[0].mxu0
    %1871 = vdwg.mxu0
    %1873 = vrot.lane.b32.xlu0 %v1801, 96
    %v1874 = vpop.permute.xlu0 %1873
    %v1875 = vsel %vm62, %v1874, 0
    %1877 = vmatprep.subr.mxu0 0.0
    %1878 = vmatpush1.msra.mxu0 %v53
    %1879 = vmatprep.subr.mxu0 0.0
    %1880 = vmatpush1.msra.mxu0 %v54
    %1881 = vmatprep.subr.mxu0 0.0
    %1882 = vmatpush1.msra.mxu0 %v55
    %1883 = vmatprep.subr.mxu0 0.0
    %1884 = vmatpush1.msra.mxu0 %v56
    %1885 = vmatprep.subr.mxu0 0.0
    %1886 = vmatpush1.msra.mxu0 0.0
    %1887 = vmatprep.subr.mxu0 0.0
    %1888 = vmatpush1.msra.mxu0 0.0
    %1889 = vmatprep.subr.mxu0 0.0
    %1890 = vmatpush1.msra.mxu0 0.0
    %1891 = vmatprep.subr.mxu0 0.0
    %1892 = vmatpush1.msra.mxu0 0.0
    %1893 = vmatprep.subr.mxu0 0.0
    %1894 = vmatpush1.msra.mxu0 0.0
    %1895 = vmatprep.subr.mxu0 0.0
    %1896 = vmatpush1.msra.mxu0 0.0
    %1897 = vmatprep.subr.mxu0 0.0
    %1898 = vmatpush1.msra.mxu0 0.0
    %1899 = vmatprep.subr.mxu0 0.0
    %1900 = vmatpush1.msra.mxu0 0.0
    %1901 = vmatprep.subr.mxu0 0.0
    %1902 = vmatpush1.msra.mxu0 0.0
    %1903 = vmatprep.subr.mxu0 0.0
    %1904 = vmatpush1.msra.mxu0 0.0
    %1905 = vmatprep.subr.mxu0 0.0
    %1906 = vmatpush1.msra.mxu0 0.0
    %1907 = vmatprep.subr.mxu0 0.0
    %1908 = vmatpush1.msra.mxu0 0.0
    %1909 = vmatprep.subr.mxu0 0.0
    %1910 = vmatpush1.msra.mxu0 0.0
    %1911 = vmatprep.subr.mxu0 0.0
    %1912 = vmatpush1.msra.mxu0 0.0
    %1913 = vmatprep.subr.mxu0 0.0
    %1914 = vmatpush1.msra.mxu0 0.0
    %1915 = vmatprep.subr.mxu0 0.0
    %1916 = vmatpush1.msra.mxu0 0.0
    %1917 = vmatprep.subr.mxu0 0.0
    %1918 = vmatpush1.msra.mxu0 0.0
    %1919 = vmatprep.subr.mxu0 0.0
    %1920 = vmatpush1.msra.mxu0 0.0
    %1921 = vmatprep.subr.mxu0 0.0
    %1922 = vmatpush1.msra.mxu0 0.0
    %1923 = vmatprep.subr.mxu0 0.0
    %1924 = vmatpush1.msra.mxu0 0.0
    %1925 = vmatprep.subr.mxu0 0.0
    %1926 = vmatpush1.msra.mxu0 0.0
    %1927 = vmatprep.subr.mxu0 0.0
    %1928 = vmatpush1.msra.mxu0 0.0
    %1929 = vmatprep.subr.mxu0 0.0
    %1930 = vmatpush1.msra.mxu0 0.0
    %1931 = vmatprep.subr.mxu0 0.0
    %1932 = vmatpush1.msra.mxu0 0.0
    %1933 = vmatprep.subr.mxu0 0.0
    %1934 = vmatpush1.msra.mxu0 0.0
    %1935 = vmatprep.subr.mxu0 0.0
    %1936 = vmatpush1.msra.mxu0 0.0
    %1937 = vmatprep.subr.mxu0 0.0
    %1938 = vmatpush1.msra.mxu0 0.0
    %1939 = vmatprep.subr.mxu0 0.0
    %1940 = vmatpush1.msra.mxu0 0.0
    %1941 = vmatprep.mubr.f32.mxu0 0.0
    %1942 = vmatmul.mubr.f32.gmra.mrb[0].mxu0 %v1875
    %v1943 = vpop.f32.mrb[0].mxu0
    %v1944 = vadd.f32 %v1534, %v1943
    %v1945 = vpop.f32.mrb[0].mxu0
    %1946 = vdwg.mxu0
    %v1947 = vadd.f32 %v1869, %v1944
    %v1948 = vxor.u32 %v1947, 2147483648
    %v1949 = vmul.f32 %v1948, 1.442695
    %v1950 = vpow.pop %v1949
    %v1951 = vadd.f32 %v1950, 1.0
    %v1952 = vrcp.pop %v1951
    %v1953 = vmul.f32 1.0, %v1952
    %1955 = vrot.lane.b32.xlu0 %v1944, 64
    %v1956 = vpop.permute.xlu0 %1955
    %v1958 = vmul.f32 %v1953, %v1956
    %1960 = vrot.lane.b32.xlu0 %v1958, 64
    %v1961 = vpop.permute.xlu0 %1960
    %v1963 = vadd.f32 %v1869, %v1961
    %v1964 = vtanh.pop %v1963
    %v1965 = vsub.f32 1.0, %v1953
    %1967 = vrot.lane.b32.xlu0 %v1964, 96
    %v1968 = vpop.permute.xlu0 %1967
    %v1970 = vmul.f32 %v1965, %v1968
    %v1971 = vmul.f32 %v1953, %v1801
    %v1972 = vadd.f32 %v1970, %v1971
    %1973 = vmatprep.subr.mxu0 0.0
    %1974 = vmatpush1.msra.mxu0 %v49
    %1975 = vmatprep.subr.mxu0 0.0
    %1976 = vmatpush1.msra.mxu0 %v50
    %1977 = vmatprep.subr.mxu0 0.0
    %1978 = vmatpush1.msra.mxu0 %v51
    %1979 = vmatprep.subr.mxu0 0.0
    %1980 = vmatpush1.msra.mxu0 %v52
    %1981 = vmatprep.subr.mxu0 0.0
    %1982 = vmatpush1.msra.mxu0 0.0
    %1983 = vmatprep.subr.mxu0 0.0
    %1984 = vmatpush1.msra.mxu0 0.0
    %1985 = vmatprep.subr.mxu0 0.0
    %1986 = vmatpush1.msra.mxu0 0.0
    %1987 = vmatprep.subr.mxu0 0.0
    %1988 = vmatpush1.msra.mxu0 0.0
    %1989 = vmatprep.subr.mxu0 0.0
    %1990 = vmatpush1.msra.mxu0 0.0
    %1991 = vmatprep.subr.mxu0 0.0
    %1992 = vmatpush1.msra.mxu0 0.0
    %1993 = vmatprep.subr.mxu0 0.0
    %1994 = vmatpush1.msra.mxu0 0.0
    %1995 = vmatprep.subr.mxu0 0.0
    %1996 = vmatpush1.msra.mxu0 0.0
    %1997 = vmatprep.subr.mxu0 0.0
    %1998 = vmatpush1.msra.mxu0 0.0
    %1999 = vmatprep.subr.mxu0 0.0
    %2000 = vmatpush1.msra.mxu0 0.0
    %2001 = vmatprep.subr.mxu0 0.0
    %2002 = vmatpush1.msra.mxu0 0.0
    %2003 = vmatprep.subr.mxu0 0.0
    %2004 = vmatpush1.msra.mxu0 0.0
    %2005 = vmatprep.subr.mxu0 0.0
    %2006 = vmatpush1.msra.mxu0 0.0
    %2007 = vmatprep.subr.mxu0 0.0
    %2008 = vmatpush1.msra.mxu0 0.0
    %2009 = vmatprep.subr.mxu0 0.0
    %2010 = vmatpush1.msra.mxu0 0.0
    %2011 = vmatprep.subr.mxu0 0.0
    %2012 = vmatpush1.msra.mxu0 0.0
    %2013 = vmatprep.subr.mxu0 0.0
    %2014 = vmatpush1.msra.mxu0 0.0
    %2015 = vmatprep.subr.mxu0 0.0
    %2016 = vmatpush1.msra.mxu0 0.0
    %2017 = vmatprep.subr.mxu0 0.0
    %2018 = vmatpush1.msra.mxu0 0.0
    %2019 = vmatprep.subr.mxu0 0.0
    %2020 = vmatpush1.msra.mxu0 0.0
    %2021 = vmatprep.subr.mxu0 0.0
    %2022 = vmatpush1.msra.mxu0 0.0
    %2023 = vmatprep.subr.mxu0 0.0
    %2024 = vmatpush1.msra.mxu0 0.0
    %2025 = vmatprep.subr.mxu0 0.0
    %2026 = vmatpush1.msra.mxu0 0.0
    %2027 = vmatprep.subr.mxu0 0.0
    %2028 = vmatpush1.msra.mxu0 0.0
    %2029 = vmatprep.subr.mxu0 0.0
    %2030 = vmatpush1.msra.mxu0 0.0
    %2031 = vmatprep.subr.mxu0 0.0
    %2032 = vmatpush1.msra.mxu0 0.0
    %2033 = vmatprep.subr.mxu0 0.0
    %2034 = vmatpush1.msra.mxu0 0.0
    %2035 = vmatprep.subr.mxu0 0.0
    %2036 = vmatpush1.msra.mxu0 0.0
    %2037 = vmatprep.mubr.f32.mxu0 0.0
    %2038 = vmatmul.mubr.f32.gmra.mrb[0].mxu0 %v762
    %v2039 = vpop.f32.mrb[0].mxu0
    %v2040 = vadd.f32 %v1460, %v2039
    %v2041 = vpop.f32.mrb[0].mxu0
    %2042 = vdwg.mxu0
    %2044 = vrot.lane.b32.xlu0 %v1972, 96
    %v2045 = vpop.permute.xlu0 %2044
    %v2046 = vsel %vm62, %v2045, 0
    %2048 = vmatprep.subr.mxu0 0.0
    %2049 = vmatpush1.msra.mxu0 %v53
    %2050 = vmatprep.subr.mxu0 0.0
    %2051 = vmatpush1.msra.mxu0 %v54
    %2052 = vmatprep.subr.mxu0 0.0
    %2053 = vmatpush1.msra.mxu0 %v55
    %2054 = vmatprep.subr.mxu0 0.0
    %2055 = vmatpush1.msra.mxu0 %v56
    %2056 = vmatprep.subr.mxu0 0.0
    %2057 = vmatpush1.msra.mxu0 0.0
    %2058 = vmatprep.subr.mxu0 0.0
    %2059 = vmatpush1.msra.mxu0 0.0
    %2060 = vmatprep.subr.mxu0 0.0
    %2061 = vmatpush1.msra.mxu0 0.0
    %2062 = vmatprep.subr.mxu0 0.0
    %2063 = vmatpush1.msra.mxu0 0.0
    %2064 = vmatprep.subr.mxu0 0.0
    %2065 = vmatpush1.msra.mxu0 0.0
    %2066 = vmatprep.subr.mxu0 0.0
    %2067 = vmatpush1.msra.mxu0 0.0
    %2068 = vmatprep.subr.mxu0 0.0
    %2069 = vmatpush1.msra.mxu0 0.0
    %2070 = vmatprep.subr.mxu0 0.0
    %2071 = vmatpush1.msra.mxu0 0.0
    %2072 = vmatprep.subr.mxu0 0.0
    %2073 = vmatpush1.msra.mxu0 0.0
    %2074 = vmatprep.subr.mxu0 0.0
    %2075 = vmatpush1.msra.mxu0 0.0
    %2076 = vmatprep.subr.mxu0 0.0
    %2077 = vmatpush1.msra.mxu0 0.0
    %2078 = vmatprep.subr.mxu0 0.0
    %2079 = vmatpush1.msra.mxu0 0.0
    %2080 = vmatprep.subr.mxu0 0.0
    %2081 = vmatpush1.msra.mxu0 0.0
    %2082 = vmatprep.subr.mxu0 0.0
    %2083 = vmatpush1.msra.mxu0 0.0
    %2084 = vmatprep.subr.mxu0 0.0
    %2085 = vmatpush1.msra.mxu0 0.0
    %2086 = vmatprep.subr.mxu0 0.0
    %2087 = vmatpush1.msra.mxu0 0.0
    %2088 = vmatprep.subr.mxu0 0.0
    %2089 = vmatpush1.msra.mxu0 0.0
    %2090 = vmatprep.subr.mxu0 0.0
    %2091 = vmatpush1.msra.mxu0 0.0
    %2092 = vmatprep.subr.mxu0 0.0
    %2093 = vmatpush1.msra.mxu0 0.0
    %2094 = vmatprep.subr.mxu0 0.0
    %2095 = vmatpush1.msra.mxu0 0.0
    %2096 = vmatprep.subr.mxu0 0.0
    %2097 = vmatpush1.msra.mxu0 0.0
    %2098 = vmatprep.subr.mxu0 0.0
    %2099 = vmatpush1.msra.mxu0 0.0
    %2100 = vmatprep.subr.mxu0 0.0
    %2101 = vmatpush1.msra.mxu0 0.0
    %2102 = vmatprep.subr.mxu0 0.0
    %2103 = vmatpush1.msra.mxu0 0.0
    %2104 = vmatprep.subr.mxu0 0.0
    %2105 = vmatpush1.msra.mxu0 0.0
    %2106 = vmatprep.subr.mxu0 0.0
    %2107 = vmatpush1.msra.mxu0 0.0
    %2108 = vmatprep.subr.mxu0 0.0
    %2109 = vmatpush1.msra.mxu0 0.0
    %2110 = vmatprep.subr.mxu0 0.0
    %2111 = vmatpush1.msra.mxu0 0.0
    %2112 = vmatprep.mubr.f32.mxu0 0.0
    %2113 = vmatmul.mubr.f32.gmra.mrb[0].mxu0 %v2046
    %v2114 = vpop.f32.mrb[0].mxu0
    %v2115 = vadd.f32 %v1534, %v2114
    %v2116 = vpop.f32.mrb[0].mxu0
    %2117 = vdwg.mxu0
    %v2118 = vadd.f32 %v2040, %v2115
    %v2119 = vxor.u32 %v2118, 2147483648
    %v2120 = vmul.f32 %v2119, 1.442695
    %v2121 = vpow.pop %v2120
    %v2122 = vadd.f32 %v2121, 1.0
    %v2123 = vrcp.pop %v2122
    %v2124 = vmul.f32 1.0, %v2123
    %2126 = vrot.lane.b32.xlu0 %v2115, 64
    %v2127 = vpop.permute.xlu0 %2126
    %v2129 = vmul.f32 %v2124, %v2127
    %2131 = vrot.lane.b32.xlu0 %v2129, 64
    %v2132 = vpop.permute.xlu0 %2131
    %v2134 = vadd.f32 %v2040, %v2132
    %v2135 = vtanh.pop %v2134
    %v2136 = vsub.f32 1.0, %v2124
    %2138 = vrot.lane.b32.xlu0 %v2135, 96
    %v2139 = vpop.permute.xlu0 %2138
    %v2141 = vmul.f32 %v2136, %v2139
    %v2142 = vmul.f32 %v2124, %v1972
    %v2143 = vadd.f32 %v2141, %v2142
    %2144 = vmatprep.subr.mxu0 0.0
    %2145 = vmatpush1.msra.mxu0 %v49
    %2146 = vmatprep.subr.mxu0 0.0
    %2147 = vmatpush1.msra.mxu0 %v50
    %2148 = vmatprep.subr.mxu0 0.0
    %2149 = vmatpush1.msra.mxu0 %v51
    %2150 = vmatprep.subr.mxu0 0.0
    %2151 = vmatpush1.msra.mxu0 %v52
    %2152 = vmatprep.subr.mxu0 0.0
    %2153 = vmatpush1.msra.mxu0 0.0
    %2154 = vmatprep.subr.mxu0 0.0
    %2155 = vmatpush1.msra.mxu0 0.0
    %2156 = vmatprep.subr.mxu0 0.0
    %2157 = vmatpush1.msra.mxu0 0.0
    %2158 = vmatprep.subr.mxu0 0.0
    %2159 = vmatpush1.msra.mxu0 0.0
    %2160 = vmatprep.subr.mxu0 0.0
    %2161 = vmatpush1.msra.mxu0 0.0
    %2162 = vmatprep.subr.mxu0 0.0
    %2163 = vmatpush1.msra.mxu0 0.0
    %2164 = vmatprep.subr.mxu0 0.0
    %2165 = vmatpush1.msra.mxu0 0.0
    %2166 = vmatprep.subr.mxu0 0.0
    %2167 = vmatpush1.msra.mxu0 0.0
    %2168 = vmatprep.subr.mxu0 0.0
    %2169 = vmatpush1.msra.mxu0 0.0
    %2170 = vmatprep.subr.mxu0 0.0
    %2171 = vmatpush1.msra.mxu0 0.0
    %2172 = vmatprep.subr.mxu0 0.0
    %2173 = vmatpush1.msra.mxu0 0.0
    %2174 = vmatprep.subr.mxu0 0.0
    %2175 = vmatpush1.msra.mxu0 0.0
    %2176 = vmatprep.subr.mxu0 0.0
    %2177 = vmatpush1.msra.mxu0 0.0
    %2178 = vmatprep.subr.mxu0 0.0
    %2179 = vmatpush1.msra.mxu0 0.0
    %2180 = vmatprep.subr.mxu0 0.0
    %2181 = vmatpush1.msra.mxu0 0.0
    %2182 = vmatprep.subr.mxu0 0.0
    %2183 = vmatpush1.msra.mxu0 0.0
    %2184 = vmatprep.subr.mxu0 0.0
    %2185 = vmatpush1.msra.mxu0 0.0
    %2186 = vmatprep.subr.mxu0 0.0
    %2187 = vmatpush1.msra.mxu0 0.0
    %2188 = vmatprep.subr.mxu0 0.0
    %2189 = vmatpush1.msra.mxu0 0.0
    %2190 = vmatprep.subr.mxu0 0.0
    %2191 = vmatpush1.msra.mxu0 0.0
    %2192 = vmatprep.subr.mxu0 0.0
    %2193 = vmatpush1.msra.mxu0 0.0
    %2194 = vmatprep.subr.mxu0 0.0
    %2195 = vmatpush1.msra.mxu0 0.0
    %2196 = vmatprep.subr.mxu0 0.0
    %2197 = vmatpush1.msra.mxu0 0.0
    %2198 = vmatprep.subr.mxu0 0.0
    %2199 = vmatpush1.msra.mxu0 0.0
    %2200 = vmatprep.subr.mxu0 0.0
    %2201 = vmatpush1.msra.mxu0 0.0
    %2202 = vmatprep.subr.mxu0 0.0
    %2203 = vmatpush1.msra.mxu0 0.0
    %2204 = vmatprep.subr.mxu0 0.0
    %2205 = vmatpush1.msra.mxu0 0.0
    %2206 = vmatprep.subr.mxu0 0.0
    %2207 = vmatpush1.msra.mxu0 0.0
    %2208 = vmatprep.mubr.f32.mxu0 0.0
    %2209 = vmatmul.mubr.f32.gmra.mrb[0].mxu0 %v588
    %v2210 = vpop.f32.mrb[0].mxu0
    %v2211 = vadd.f32 %v1460, %v2210
    %v2212 = vpop.f32.mrb[0].mxu0
    %2213 = vdwg.mxu0
    %2215 = vrot.lane.b32.xlu0 %v2143, 96
    %v2216 = vpop.permute.xlu0 %2215
    %v2217 = vsel %vm62, %v2216, 0
    %2219 = vmatprep.subr.mxu0 0.0
    %2220 = vmatpush1.msra.mxu0 %v53
    %2221 = vmatprep.subr.mxu0 0.0
    %2222 = vmatpush1.msra.mxu0 %v54
    %2223 = vmatprep.subr.mxu0 0.0
    %2224 = vmatpush1.msra.mxu0 %v55
    %2225 = vmatprep.subr.mxu0 0.0
    %2226 = vmatpush1.msra.mxu0 %v56
    %2227 = vmatprep.subr.mxu0 0.0
    %2228 = vmatpush1.msra.mxu0 0.0
    %2229 = vmatprep.subr.mxu0 0.0
    %2230 = vmatpush1.msra.mxu0 0.0
    %2231 = vmatprep.subr.mxu0 0.0
    %2232 = vmatpush1.msra.mxu0 0.0
    %2233 = vmatprep.subr.mxu0 0.0
    %2234 = vmatpush1.msra.mxu0 0.0
    %2235 = vmatprep.subr.mxu0 0.0
    %2236 = vmatpush1.msra.mxu0 0.0
    %2237 = vmatprep.subr.mxu0 0.0
    %2238 = vmatpush1.msra.mxu0 0.0
    %2239 = vmatprep.subr.mxu0 0.0
    %2240 = vmatpush1.msra.mxu0 0.0
    %2241 = vmatprep.subr.mxu0 0.0
    %2242 = vmatpush1.msra.mxu0 0.0
    %2243 = vmatprep.subr.mxu0 0.0
    %2244 = vmatpush1.msra.mxu0 0.0
    %2245 = vmatprep.subr.mxu0 0.0
    %2246 = vmatpush1.msra.mxu0 0.0
    %2247 = vmatprep.subr.mxu0 0.0
    %2248 = vmatpush1.msra.mxu0 0.0
    %2249 = vmatprep.subr.mxu0 0.0
    %2250 = vmatpush1.msra.mxu0 0.0
    %2251 = vmatprep.subr.mxu0 0.0
    %2252 = vmatpush1.msra.mxu0 0.0
    %2253 = vmatprep.subr.mxu0 0.0
    %2254 = vmatpush1.msra.mxu0 0.0
    %2255 = vmatprep.subr.mxu0 0.0
    %2256 = vmatpush1.msra.mxu0 0.0
    %2257 = vmatprep.subr.mxu0 0.0
    %2258 = vmatpush1.msra.mxu0 0.0
    %2259 = vmatprep.subr.mxu0 0.0
    %2260 = vmatpush1.msra.mxu0 0.0
    %2261 = vmatprep.subr.mxu0 0.0
    %2262 = vmatpush1.msra.mxu0 0.0
    %2263 = vmatprep.subr.mxu0 0.0
    %2264 = vmatpush1.msra.mxu0 0.0
    %2265 = vmatprep.subr.mxu0 0.0
    %2266 = vmatpush1.msra.mxu0 0.0
    %2267 = vmatprep.subr.mxu0 0.0
    %2268 = vmatpush1.msra.mxu0 0.0
    %2269 = vmatprep.subr.mxu0 0.0
    %2270 = vmatpush1.msra.mxu0 0.0
    %2271 = vmatprep.subr.mxu0 0.0
    %2272 = vmatpush1.msra.mxu0 0.0
    %2273 = vmatprep.subr.mxu0 0.0
    %2274 = vmatpush1.msra.mxu0 0.0
    %2275 = vmatprep.subr.mxu0 0.0
    %2276 = vmatpush1.msra.mxu0 0.0
    %2277 = vmatprep.subr.mxu0 0.0
    %2278 = vmatpush1.msra.mxu0 0.0
    %2279 = vmatprep.subr.mxu0 0.0
    %2280 = vmatpush1.msra.mxu0 0.0
    %2281 = vmatprep.subr.mxu0 0.0
    %2282 = vmatpush1.msra.mxu0 0.0
    %2283 = vmatprep.mubr.f32.mxu0 0.0
    %2284 = vmatmul.mubr.f32.gmra.mrb[0].mxu0 %v2217
    %v2285 = vpop.f32.mrb[0].mxu0
    %v2286 = vadd.f32 %v1534, %v2285
    %v2287 = vpop.f32.mrb[0].mxu0
    %2288 = vdwg.mxu0
    %v2289 = vadd.f32 %v2211, %v2286
    %v2290 = vxor.u32 %v2289, 2147483648
    %v2291 = vmul.f32 %v2290, 1.442695
    %v2292 = vpow.pop %v2291
    %v2293 = vadd.f32 %v2292, 1.0
    %v2294 = vrcp.pop %v2293
    %v2295 = vmul.f32 1.0, %v2294
    %2297 = vrot.lane.b32.xlu0 %v2286, 64
    %v2298 = vpop.permute.xlu0 %2297
    %v2300 = vmul.f32 %v2295, %v2298
    %2302 = vrot.lane.b32.xlu0 %v2300, 64
    %v2303 = vpop.permute.xlu0 %2302
    %v2305 = vadd.f32 %v2211, %v2303
    %v2306 = vtanh.pop %v2305
    %v2307 = vsub.f32 1.0, %v2295
    %2309 = vrot.lane.b32.xlu0 %v2306, 96
    %v2310 = vpop.permute.xlu0 %2309
    %v2312 = vmul.f32 %v2307, %v2310
    %v2313 = vmul.f32 %v2295, %v2143
    %v2314 = vadd.f32 %v2312, %v2313
    %2315 = vmatprep.subr.mxu0 0.0
    %2316 = vmatpush1.msra.mxu0 %v49
    %2317 = vmatprep.subr.mxu0 0.0
    %2318 = vmatpush1.msra.mxu0 %v50
    %2319 = vmatprep.subr.mxu0 0.0
    %2320 = vmatpush1.msra.mxu0 %v51
    %2321 = vmatprep.subr.mxu0 0.0
    %2322 = vmatpush1.msra.mxu0 %v52
    %2323 = vmatprep.subr.mxu0 0.0
    %2324 = vmatpush1.msra.mxu0 0.0
    %2325 = vmatprep.subr.mxu0 0.0
    %2326 = vmatpush1.msra.mxu0 0.0
    %2327 = vmatprep.subr.mxu0 0.0
    %2328 = vmatpush1.msra.mxu0 0.0
    %2329 = vmatprep.subr.mxu0 0.0
    %2330 = vmatpush1.msra.mxu0 0.0
    %2331 = vmatprep.subr.mxu0 0.0
    %2332 = vmatpush1.msra.mxu0 0.0
    %2333 = vmatprep.subr.mxu0 0.0
    %2334 = vmatpush1.msra.mxu0 0.0
    %2335 = vmatprep.subr.mxu0 0.0
    %2336 = vmatpush1.msra.mxu0 0.0
    %2337 = vmatprep.subr.mxu0 0.0
    %2338 = vmatpush1.msra.mxu0 0.0
    %2339 = vmatprep.subr.mxu0 0.0
    %2340 = vmatpush1.msra.mxu0 0.0
    %2341 = vmatprep.subr.mxu0 0.0
    %2342 = vmatpush1.msra.mxu0 0.0
    %2343 = vmatprep.subr.mxu0 0.0
    %2344 = vmatpush1.msra.mxu0 0.0
    %2345 = vmatprep.subr.mxu0 0.0
    %2346 = vmatpush1.msra.mxu0 0.0
    %2347 = vmatprep.subr.mxu0 0.0
    %2348 = vmatpush1.msra.mxu0 0.0
    %2349 = vmatprep.subr.mxu0 0.0
    %2350 = vmatpush1.msra.mxu0 0.0
    %2351 = vmatprep.subr.mxu0 0.0
    %2352 = vmatpush1.msra.mxu0 0.0
    %2353 = vmatprep.subr.mxu0 0.0
    %2354 = vmatpush1.msra.mxu0 0.0
    %2355 = vmatprep.subr.mxu0 0.0
    %2356 = vmatpush1.msra.mxu0 0.0
    %2357 = vmatprep.subr.mxu0 0.0
    %2358 = vmatpush1.msra.mxu0 0.0
    %2359 = vmatprep.subr.mxu0 0.0
    %2360 = vmatpush1.msra.mxu0 0.0
    %2361 = vmatprep.subr.mxu0 0.0
    %2362 = vmatpush1.msra.mxu0 0.0
    %2363 = vmatprep.subr.mxu0 0.0
    %2364 = vmatpush1.msra.mxu0 0.0
    %2365 = vmatprep.subr.mxu0 0.0
    %2366 = vmatpush1.msra.mxu0 0.0
    %2367 = vmatprep.subr.mxu0 0.0
    %2368 = vmatpush1.msra.mxu0 0.0
    %2369 = vmatprep.subr.mxu0 0.0
    %2370 = vmatpush1.msra.mxu0 0.0
    %2371 = vmatprep.subr.mxu0 0.0
    %2372 = vmatpush1.msra.mxu0 0.0
    %2373 = vmatprep.subr.mxu0 0.0
    %2374 = vmatpush1.msra.mxu0 0.0
    %2375 = vmatprep.subr.mxu0 0.0
    %2376 = vmatpush1.msra.mxu0 0.0
    %2377 = vmatprep.subr.mxu0 0.0
    %2378 = vmatpush1.msra.mxu0 0.0
    %2379 = vmatprep.mubr.f32.mxu0 0.0
    %2380 = vmatmul.mubr.f32.gmra.mrb[0].mxu0 %v414
    %v2381 = vpop.f32.mrb[0].mxu0
    %v2382 = vadd.f32 %v1460, %v2381
    %v2383 = vpop.f32.mrb[0].mxu0
    %2384 = vdwg.mxu0
    %2386 = vrot.lane.b32.xlu0 %v2314, 96
    %v2387 = vpop.permute.xlu0 %2386
    %v2388 = vsel %vm62, %v2387, 0
    %2390 = vmatprep.subr.mxu0 0.0
    %2391 = vmatpush1.msra.mxu0 %v53
    %2392 = vmatprep.subr.mxu0 0.0
    %2393 = vmatpush1.msra.mxu0 %v54
    %2394 = vmatprep.subr.mxu0 0.0
    %2395 = vmatpush1.msra.mxu0 %v55
    %2396 = vmatprep.subr.mxu0 0.0
    %2397 = vmatpush1.msra.mxu0 %v56
    %2398 = vmatprep.subr.mxu0 0.0
    %2399 = vmatpush1.msra.mxu0 0.0
    %2400 = vmatprep.subr.mxu0 0.0
    %2401 = vmatpush1.msra.mxu0 0.0
    %2402 = vmatprep.subr.mxu0 0.0
    %2403 = vmatpush1.msra.mxu0 0.0
    %2404 = vmatprep.subr.mxu0 0.0
    %2405 = vmatpush1.msra.mxu0 0.0
    %2406 = vmatprep.subr.mxu0 0.0
    %2407 = vmatpush1.msra.mxu0 0.0
    %2408 = vmatprep.subr.mxu0 0.0
    %2409 = vmatpush1.msra.mxu0 0.0
    %2410 = vmatprep.subr.mxu0 0.0
    %2411 = vmatpush1.msra.mxu0 0.0
    %2412 = vmatprep.subr.mxu0 0.0
    %2413 = vmatpush1.msra.mxu0 0.0
    %2414 = vmatprep.subr.mxu0 0.0
    %2415 = vmatpush1.msra.mxu0 0.0
    %2416 = vmatprep.subr.mxu0 0.0
    %2417 = vmatpush1.msra.mxu0 0.0
    %2418 = vmatprep.subr.mxu0 0.0
    %2419 = vmatpush1.msra.mxu0 0.0
    %2420 = vmatprep.subr.mxu0 0.0
    %2421 = vmatpush1.msra.mxu0 0.0
    %2422 = vmatprep.subr.mxu0 0.0
    %2423 = vmatpush1.msra.mxu0 0.0
    %2424 = vmatprep.subr.mxu0 0.0
    %2425 = vmatpush1.msra.mxu0 0.0
    %2426 = vmatprep.subr.mxu0 0.0
    %2427 = vmatpush1.msra.mxu0 0.0
    %2428 = vmatprep.subr.mxu0 0.0
    %2429 = vmatpush1.msra.mxu0 0.0
    %2430 = vmatprep.subr.mxu0 0.0
    %2431 = vmatpush1.msra.mxu0 0.0
    %2432 = vmatprep.subr.mxu0 0.0
    %2433 = vmatpush1.msra.mxu0 0.0
    %2434 = vmatprep.subr.mxu0 0.0
    %2435 = vmatpush1.msra.mxu0 0.0
    %2436 = vmatprep.subr.mxu0 0.0
    %2437 = vmatpush1.msra.mxu0 0.0
    %2438 = vmatprep.subr.mxu0 0.0
    %2439 = vmatpush1.msra.mxu0 0.0
    %2440 = vmatprep.subr.mxu0 0.0
    %2441 = vmatpush1.msra.mxu0 0.0
    %2442 = vmatprep.subr.mxu0 0.0
    %2443 = vmatpush1.msra.mxu0 0.0
    %2444 = vmatprep.subr.mxu0 0.0
    %2445 = vmatpush1.msra.mxu0 0.0
    %2446 = vmatprep.subr.mxu0 0.0
    %2447 = vmatpush1.msra.mxu0 0.0
    %2448 = vmatprep.subr.mxu0 0.0
    %2449 = vmatpush1.msra.mxu0 0.0
    %2450 = vmatprep.subr.mxu0 0.0
    %2451 = vmatpush1.msra.mxu0 0.0
    %2452 = vmatprep.subr.mxu0 0.0
    %2453 = vmatpush1.msra.mxu0 0.0
    %2454 = vmatprep.mubr.f32.mxu0 0.0
    %2455 = vmatmul.mubr.f32.gmra.mrb[0].mxu0 %v2388
    %v2456 = vpop.f32.mrb[0].mxu0
    %v2457 = vadd.f32 %v1534, %v2456
    %v2458 = vpop.f32.mrb[0].mxu0
    %2459 = vdwg.mxu0
    %v2460 = vadd.f32 %v2382, %v2457
    %v2461 = vxor.u32 %v2460, 2147483648
    %v2462 = vmul.f32 %v2461, 1.442695
    %v2463 = vpow.pop %v2462
    %v2464 = vadd.f32 %v2463, 1.0
    %v2465 = vrcp.pop %v2464
    %v2466 = vmul.f32 1.0, %v2465
    %2468 = vrot.lane.b32.xlu0 %v2457, 64
    %v2469 = vpop.permute.xlu0 %2468
    %v2471 = vmul.f32 %v2466, %v2469
    %2473 = vrot.lane.b32.xlu0 %v2471, 64
    %v2474 = vpop.permute.xlu0 %2473
    %v2476 = vadd.f32 %v2382, %v2474
    %v2477 = vtanh.pop %v2476
    %v2478 = vsub.f32 1.0, %v2466
    %2480 = vrot.lane.b32.xlu0 %v2477, 96
    %v2481 = vpop.permute.xlu0 %2480
    %v2483 = vmul.f32 %v2478, %v2481
    %v2484 = vmul.f32 %v2466, %v2314
    %v2485 = vadd.f32 %v2483, %v2484
    %2486 = vmatprep.subr.mxu0 0.0
    %2487 = vmatpush1.msra.mxu0 %v49
    %2488 = vmatprep.subr.mxu0 0.0
    %2489 = vmatpush1.msra.mxu0 %v50
    %2490 = vmatprep.subr.mxu0 0.0
    %2491 = vmatpush1.msra.mxu0 %v51
    %2492 = vmatprep.subr.mxu0 0.0
    %2493 = vmatpush1.msra.mxu0 %v52
    %2494 = vmatprep.subr.mxu0 0.0
    %2495 = vmatpush1.msra.mxu0 0.0
    %2496 = vmatprep.subr.mxu0 0.0
    %2497 = vmatpush1.msra.mxu0 0.0
    %2498 = vmatprep.subr.mxu0 0.0
    %2499 = vmatpush1.msra.mxu0 0.0
    %2500 = vmatprep.subr.mxu0 0.0
    %2501 = vmatpush1.msra.mxu0 0.0
    %2502 = vmatprep.subr.mxu0 0.0
    %2503 = vmatpush1.msra.mxu0 0.0
    %2504 = vmatprep.subr.mxu0 0.0
    %2505 = vmatpush1.msra.mxu0 0.0
    %2506 = vmatprep.subr.mxu0 0.0
    %2507 = vmatpush1.msra.mxu0 0.0
    %2508 = vmatprep.subr.mxu0 0.0
    %2509 = vmatpush1.msra.mxu0 0.0
    %2510 = vmatprep.subr.mxu0 0.0
    %2511 = vmatpush1.msra.mxu0 0.0
    %2512 = vmatprep.subr.mxu0 0.0
    %2513 = vmatpush1.msra.mxu0 0.0
    %2514 = vmatprep.subr.mxu0 0.0
    %2515 = vmatpush1.msra.mxu0 0.0
    %2516 = vmatprep.subr.mxu0 0.0
    %2517 = vmatpush1.msra.mxu0 0.0
    %2518 = vmatprep.subr.mxu0 0.0
    %2519 = vmatpush1.msra.mxu0 0.0
    %2520 = vmatprep.subr.mxu0 0.0
    %2521 = vmatpush1.msra.mxu0 0.0
    %2522 = vmatprep.subr.mxu0 0.0
    %2523 = vmatpush1.msra.mxu0 0.0
    %2524 = vmatprep.subr.mxu0 0.0
    %2525 = vmatpush1.msra.mxu0 0.0
    %2526 = vmatprep.subr.mxu0 0.0
    %2527 = vmatpush1.msra.mxu0 0.0
    %2528 = vmatprep.subr.mxu0 0.0
    %2529 = vmatpush1.msra.mxu0 0.0
    %2530 = vmatprep.subr.mxu0 0.0
    %2531 = vmatpush1.msra.mxu0 0.0
    %2532 = vmatprep.subr.mxu0 0.0
    %2533 = vmatpush1.msra.mxu0 0.0
    %2534 = vmatprep.subr.mxu0 0.0
    %2535 = vmatpush1.msra.mxu0 0.0
    %2536 = vmatprep.subr.mxu0 0.0
    %2537 = vmatpush1.msra.mxu0 0.0
    %2538 = vmatprep.subr.mxu0 0.0
    %2539 = vmatpush1.msra.mxu0 0.0
    %2540 = vmatprep.subr.mxu0 0.0
    %2541 = vmatpush1.msra.mxu0 0.0
    %2542 = vmatprep.subr.mxu0 0.0
    %2543 = vmatpush1.msra.mxu0 0.0
    %2544 = vmatprep.subr.mxu0 0.0
    %2545 = vmatpush1.msra.mxu0 0.0
    %2546 = vmatprep.subr.mxu0 0.0
    %2547 = vmatpush1.msra.mxu0 0.0
    %2548 = vmatprep.subr.mxu0 0.0
    %2549 = vmatpush1.msra.mxu0 0.0
    %2550 = vmatprep.mubr.f32.mxu0 0.0
    %2551 = vmatmul.mubr.f32.gmra.mrb[0].mxu0 %v240
    %v2552 = vpop.f32.mrb[0].mxu0
    %v2553 = vadd.f32 %v1460, %v2552
    %v2554 = vpop.f32.mrb[0].mxu0
    %2555 = vdwg.mxu0
    %2557 = vrot.lane.b32.xlu0 %v2485, 96
    %v2558 = vpop.permute.xlu0 %2557
    %v2559 = vsel %vm62, %v2558, 0
    %2561 = vmatprep.subr.mxu0 0.0
    %2562 = vmatpush1.msra.mxu0 %v53
    %2563 = vmatprep.subr.mxu0 0.0
    %2564 = vmatpush1.msra.mxu0 %v54
    %2565 = vmatprep.subr.mxu0 0.0
    %2566 = vmatpush1.msra.mxu0 %v55
    %2567 = vmatprep.subr.mxu0 0.0
    %2568 = vmatpush1.msra.mxu0 %v56
    %2569 = vmatprep.subr.mxu0 0.0
    %2570 = vmatpush1.msra.mxu0 0.0
    %2571 = vmatprep.subr.mxu0 0.0
    %2572 = vmatpush1.msra.mxu0 0.0
    %2573 = vmatprep.subr.mxu0 0.0
    %2574 = vmatpush1.msra.mxu0 0.0
    %2575 = vmatprep.subr.mxu0 0.0
    %2576 = vmatpush1.msra.mxu0 0.0
    %2577 = vmatprep.subr.mxu0 0.0
    %2578 = vmatpush1.msra.mxu0 0.0
    %2579 = vmatprep.subr.mxu0 0.0
    %2580 = vmatpush1.msra.mxu0 0.0
    %2581 = vmatprep.subr.mxu0 0.0
    %2582 = vmatpush1.msra.mxu0 0.0
    %2583 = vmatprep.subr.mxu0 0.0
    %2584 = vmatpush1.msra.mxu0 0.0
    %2585 = vmatprep.subr.mxu0 0.0
    %2586 = vmatpush1.msra.mxu0 0.0
    %2587 = vmatprep.subr.mxu0 0.0
    %2588 = vmatpush1.msra.mxu0 0.0
    %2589 = vmatprep.subr.mxu0 0.0
    %2590 = vmatpush1.msra.mxu0 0.0
    %2591 = vmatprep.subr.mxu0 0.0
    %2592 = vmatpush1.msra.mxu0 0.0
    %2593 = vmatprep.subr.mxu0 0.0
    %2594 = vmatpush1.msra.mxu0 0.0
    %2595 = vmatprep.subr.mxu0 0.0
    %2596 = vmatpush1.msra.mxu0 0.0
    %2597 = vmatprep.subr.mxu0 0.0
    %2598 = vmatpush1.msra.mxu0 0.0
    %2599 = vmatprep.subr.mxu0 0.0
    %2600 = vmatpush1.msra.mxu0 0.0
    %2601 = vmatprep.subr.mxu0 0.0
    %2602 = vmatpush1.msra.mxu0 0.0
    %2603 = vmatprep.subr.mxu0 0.0
    %2604 = vmatpush1.msra.mxu0 0.0
    %2605 = vmatprep.subr.mxu0 0.0
    %2606 = vmatpush1.msra.mxu0 0.0
    %2607 = vmatprep.subr.mxu0 0.0
    %2608 = vmatpush1.msra.mxu0 0.0
    %2609 = vmatprep.subr.mxu0 0.0
    %2610 = vmatpush1.msra.mxu0 0.0
    %2611 = vmatprep.subr.mxu0 0.0
    %2612 = vmatpush1.msra.mxu0 0.0
    %2613 = vmatprep.subr.mxu0 0.0
    %2614 = vmatpush1.msra.mxu0 0.0
    %2615 = vmatprep.subr.mxu0 0.0
    %2616 = vmatpush1.msra.mxu0 0.0
    %2617 = vmatprep.subr.mxu0 0.0
    %2618 = vmatpush1.msra.mxu0 0.0
    %2619 = vmatprep.subr.mxu0 0.0
    %2620 = vmatpush1.msra.mxu0 0.0
    %2621 = vmatprep.subr.mxu0 0.0
    %2622 = vmatpush1.msra.mxu0 0.0
    %2623 = vmatprep.subr.mxu0 0.0
    %2624 = vmatpush1.msra.mxu0 0.0
    %2625 = vmatprep.mubr.f32.mxu0 0.0
    %2626 = vmatmul.mubr.f32.gmra.mrb[0].mxu0 %v2559
    %v2627 = vpop.f32.mrb[0].mxu0
    %v2628 = vadd.f32 %v1534, %v2627
    %v2629 = vpop.f32.mrb[0].mxu0
    %2630 = vdwg.mxu0
    %v2631 = vadd.f32 %v2553, %v2628
    %v2632 = vxor.u32 %v2631, 2147483648
    %v2633 = vmul.f32 %v2632, 1.442695
    %v2634 = vpow.pop %v2633
    %v2635 = vadd.f32 %v2634, 1.0
    %v2636 = vrcp.pop %v2635
    %v2637 = vmul.f32 1.0, %v2636
    %2639 = vrot.lane.b32.xlu0 %v2628, 64
    %v2640 = vpop.permute.xlu0 %2639
    %v2642 = vmul.f32 %v2637, %v2640
    %2644 = vrot.lane.b32.xlu0 %v2642, 64
    %v2645 = vpop.permute.xlu0 %2644
    %v2647 = vadd.f32 %v2553, %v2645
    %v2648 = vtanh.pop %v2647
    %v2649 = vsub.f32 1.0, %v2637
    %2651 = vrot.lane.b32.xlu0 %v2648, 96
    %v2652 = vpop.permute.xlu0 %2651
    %v2654 = vmul.f32 %v2649, %v2652
    %v2655 = vmul.f32 %v2637, %v2485
    %v2656 = vadd.f32 %v2654, %v2655
    %2657 = vmatprep.subr.mxu0 0.0
    %2658 = vmatpush1.msra.mxu0 %v49
    %2659 = vmatprep.subr.mxu0 0.0
    %2660 = vmatpush1.msra.mxu0 %v50
    %2661 = vmatprep.subr.mxu0 0.0
    %2662 = vmatpush1.msra.mxu0 %v51
    %2663 = vmatprep.subr.mxu0 0.0
    %2664 = vmatpush1.msra.mxu0 %v52
    %2665 = vmatprep.subr.mxu0 0.0
    %2666 = vmatpush1.msra.mxu0 0.0
    %2667 = vmatprep.subr.mxu0 0.0
    %2668 = vmatpush1.msra.mxu0 0.0
    %2669 = vmatprep.subr.mxu0 0.0
    %2670 = vmatpush1.msra.mxu0 0.0
    %2671 = vmatprep.subr.mxu0 0.0
    %2672 = vmatpush1.msra.mxu0 0.0
    %2673 = vmatprep.subr.mxu0 0.0
    %2674 = vmatpush1.msra.mxu0 0.0
    %2675 = vmatprep.subr.mxu0 0.0
    %2676 = vmatpush1.msra.mxu0 0.0
    %2677 = vmatprep.subr.mxu0 0.0
    %2678 = vmatpush1.msra.mxu0 0.0
    %2679 = vmatprep.subr.mxu0 0.0
    %2680 = vmatpush1.msra.mxu0 0.0
    %2681 = vmatprep.subr.mxu0 0.0
    %2682 = vmatpush1.msra.mxu0 0.0
    %2683 = vmatprep.subr.mxu0 0.0
    %2684 = vmatpush1.msra.mxu0 0.0
    %2685 = vmatprep.subr.mxu0 0.0
    %2686 = vmatpush1.msra.mxu0 0.0
    %2687 = vmatprep.subr.mxu0 0.0
    %2688 = vmatpush1.msra.mxu0 0.0
    %2689 = vmatprep.subr.mxu0 0.0
    %2690 = vmatpush1.msra.mxu0 0.0
    %2691 = vmatprep.subr.mxu0 0.0
    %2692 = vmatpush1.msra.mxu0 0.0
    %2693 = vmatprep.subr.mxu0 0.0
    %2694 = vmatpush1.msra.mxu0 0.0
    %2695 = vmatprep.subr.mxu0 0.0
    %2696 = vmatpush1.msra.mxu0 0.0
    %2697 = vmatprep.subr.mxu0 0.0
    %2698 = vmatpush1.msra.mxu0 0.0
    %2699 = vmatprep.subr.mxu0 0.0
    %2700 = vmatpush1.msra.mxu0 0.0
    %2701 = vmatprep.subr.mxu0 0.0
    %2702 = vmatpush1.msra.mxu0 0.0
    %2703 = vmatprep.subr.mxu0 0.0
    %2704 = vmatpush1.msra.mxu0 0.0
    %2705 = vmatprep.subr.mxu0 0.0
    %2706 = vmatpush1.msra.mxu0 0.0
    %2707 = vmatprep.subr.mxu0 0.0
    %2708 = vmatpush1.msra.mxu0 0.0
    %2709 = vmatprep.subr.mxu0 0.0
    %2710 = vmatpush1.msra.mxu0 0.0
    %2711 = vmatprep.subr.mxu0 0.0
    %2712 = vmatpush1.msra.mxu0 0.0
    %2713 = vmatprep.subr.mxu0 0.0
    %2714 = vmatpush1.msra.mxu0 0.0
    %2715 = vmatprep.subr.mxu0 0.0
    %2716 = vmatpush1.msra.mxu0 0.0
    %2717 = vmatprep.subr.mxu0 0.0
    %2718 = vmatpush1.msra.mxu0 0.0
    %2719 = vmatprep.subr.mxu0 0.0
    %2720 = vmatpush1.msra.mxu0 0.0
    %2721 = vmatprep.mubr.f32.mxu0 0.0
    %2722 = vmatmul.mubr.f32.gmra.mrb[0].mxu0 %v64
    %v2723 = vpop.f32.mrb[0].mxu0
    %v2724 = vadd.f32 %v1460, %v2723
    %v2725 = vpop.f32.mrb[0].mxu0
    %2726 = vdwg.mxu0
    %2728 = vrot.lane.b32.xlu0 %v2656, 96
    %v2729 = vpop.permute.xlu0 %2728
    %v2730 = vsel %vm62, %v2729, 0
    %2732 = vmatprep.subr.mxu0 0.0
    %2733 = vmatpush1.msra.mxu0 %v53
    %2734 = vmatprep.subr.mxu0 0.0
    %2735 = vmatpush1.msra.mxu0 %v54
    %2736 = vmatprep.subr.mxu0 0.0
    %2737 = vmatpush1.msra.mxu0 %v55
    %2738 = vmatprep.subr.mxu0 0.0
    %2739 = vmatpush1.msra.mxu0 %v56
    %2740 = vmatprep.subr.mxu0 0.0
    %2741 = vmatpush1.msra.mxu0 0.0
    %2742 = vmatprep.subr.mxu0 0.0
    %2743 = vmatpush1.msra.mxu0 0.0
    %2744 = vmatprep.subr.mxu0 0.0
    %2745 = vmatpush1.msra.mxu0 0.0
    %2746 = vmatprep.subr.mxu0 0.0
    %2747 = vmatpush1.msra.mxu0 0.0
    %2748 = vmatprep.subr.mxu0 0.0
    %2749 = vmatpush1.msra.mxu0 0.0
    %2750 = vmatprep.subr.mxu0 0.0
    %2751 = vmatpush1.msra.mxu0 0.0
    %2752 = vmatprep.subr.mxu0 0.0
    %2753 = vmatpush1.msra.mxu0 0.0
    %2754 = vmatprep.subr.mxu0 0.0
    %2755 = vmatpush1.msra.mxu0 0.0
    %2756 = vmatprep.subr.mxu0 0.0
    %2757 = vmatpush1.msra.mxu0 0.0
    %2758 = vmatprep.subr.mxu0 0.0
    %2759 = vmatpush1.msra.mxu0 0.0
    %2760 = vmatprep.subr.mxu0 0.0
    %2761 = vmatpush1.msra.mxu0 0.0
    %2762 = vmatprep.subr.mxu0 0.0
    %2763 = vmatpush1.msra.mxu0 0.0
    %2764 = vmatprep.subr.mxu0 0.0
    %2765 = vmatpush1.msra.mxu0 0.0
    %2766 = vmatprep.subr.mxu0 0.0
    %2767 = vmatpush1.msra.mxu0 0.0
    %2768 = vmatprep.subr.mxu0 0.0
    %2769 = vmatpush1.msra.mxu0 0.0
    %2770 = vmatprep.subr.mxu0 0.0
    %2771 = vmatpush1.msra.mxu0 0.0
    %2772 = vmatprep.subr.mxu0 0.0
    %2773 = vmatpush1.msra.mxu0 0.0
    %2774 = vmatprep.subr.mxu0 0.0
    %2775 = vmatpush1.msra.mxu0 0.0
    %2776 = vmatprep.subr.mxu0 0.0
    %2777 = vmatpush1.msra.mxu0 0.0
    %2778 = vmatprep.subr.mxu0 0.0
    %2779 = vmatpush1.msra.mxu0 0.0
    %2780 = vmatprep.subr.mxu0 0.0
    %2781 = vmatpush1.msra.mxu0 0.0
    %2782 = vmatprep.subr.mxu0 0.0
    %2783 = vmatpush1.msra.mxu0 0.0
    %2784 = vmatprep.subr.mxu0 0.0
    %2785 = vmatpush1.msra.mxu0 0.0
    %2786 = vmatprep.subr.mxu0 0.0
    %2787 = vmatpush1.msra.mxu0 0.0
    %2788 = vmatprep.subr.mxu0 0.0
    %2789 = vmatpush1.msra.mxu0 0.0
    %2790 = vmatprep.subr.mxu0 0.0
    %2791 = vmatpush1.msra.mxu0 0.0
    %2792 = vmatprep.subr.mxu0 0.0
    %2793 = vmatpush1.msra.mxu0 0.0
    %2794 = vmatprep.subr.mxu0 0.0
    %2795 = vmatpush1.msra.mxu0 0.0
    %2796 = vmatprep.mubr.f32.mxu0 0.0
    %2797 = vmatmul.mubr.f32.gmra.mrb[0].mxu0 %v2730
    %v2798 = vpop.f32.mrb[0].mxu0
    %v2799 = vadd.f32 %v1534, %v2798
    %v2800 = vpop.f32.mrb[0].mxu0
    %2801 = vdwg.mxu0
    %v2802 = vadd.f32 %v2724, %v2799
    %v2803 = vxor.u32 %v2802, 2147483648
    %v2804 = vmul.f32 %v2803, 1.442695
    %v2805 = vpow.pop %v2804
    %v2806 = vadd.f32 %v2805, 1.0
    %v2807 = vrcp.pop %v2806
    %v2808 = vmul.f32 1.0, %v2807
    %2810 = vrot.lane.b32.xlu0 %v2799, 64
    %v2811 = vpop.permute.xlu0 %2810
    %v2813 = vmul.f32 %v2808, %v2811
    %2815 = vrot.lane.b32.xlu0 %v2813, 64
    %v2816 = vpop.permute.xlu0 %2815
    %v2818 = vadd.f32 %v2724, %v2816
    %v2819 = vtanh.pop %v2818
    %v2820 = vsub.f32 1.0, %v2808
    %2822 = vrot.lane.b32.xlu0 %v2819, 96
    %v2823 = vpop.permute.xlu0 %2822
    %v2825 = vmul.f32 %v2820, %v2823
    %v2826 = vmul.f32 %v2808, %v2656
    %v2827 = vadd.f32 %v2825, %v2826
    %2829 = vrot.lane.b32.xlu0 %v1456, 96
    %v2830 = vpop.permute.xlu0 %2829
    %v2839 = vsel %vm62, %v314, %v2827
    %v2840 = vsel %vm62, %v488, %v2656
    %v2841 = vsel %vm62, %v662, %v2485
    %v2842 = vsel %vm62, %v836, %v2314
    %v2843 = vsel %vm62, %v1010, %v2143
    %v2844 = vsel %vm62, %v1184, %v1972
    %v2845 = vsel %vm62, %v1358, %v1801
    %v2846 = vsel %vm62, %v2830, %v1630
    %vm2847 = vcmask 517120
    %2848 = vst.msk [vmem:[#allocation2] sm:$0x3] %vm2847, %v2839
    %2849 = vst.msk [vmem:[#allocation2 + $0x2] sm:$0x3] %vm2847, %v2840
    %2850 = vst.msk [vmem:[#allocation2 + $0x4] sm:$0x3] %vm2847, %v2841
    %2851 = vst.msk [vmem:[#allocation2 + $0x6] sm:$0x3] %vm2847, %v2842
    %2852 = vst.msk [vmem:[#allocation2 + $0x8] sm:$0x3] %vm2847, %v2843
    %2853 = vst.msk [vmem:[#allocation2 + $0xa] sm:$0x3] %vm2847, %v2844
    %2854 = vst.msk [vmem:[#allocation2 + $0xc] sm:$0x3] %vm2847, %v2845
    %2855 = vst.msk [vmem:[#allocation2 + $0xe] sm:$0x3] %vm2847, %v2846
    %v2856 = vsel %vm62, %v2830, %v2827
    %v2857 = vld [vmem:[%s6] sm:$0xff]
    %v2858 = vld [vmem:[%s6 + $0x8] sm:$0xff]
    %v2859 = vld [vmem:[%s6 + $0x10] sm:$0xff]
    %v2860 = vld [vmem:[%s6 + $0x18] sm:$0xff]
    %v2861 = vld [vmem:[%s6 + $0x20] sm:$0xff]
    %v2862 = vld [vmem:[%s6 + $0x28] sm:$0xff]
    %v2863 = vld [vmem:[%s6 + $0x30] sm:$0xff]
    %v2864 = vld [vmem:[%s6 + $0x38] sm:$0xff]
    %v2865 = vld [vmem:[%s7] sm:$0x1]
    %v2867 = vlaneseq
    %v2868 = vshrl.u32 %v2867, 7
    %v2869 = vsub.s32 0, %v2868
    %v2870 = vrot.slane %v2865, %v2869
    %vm2872 = vcmask 523264
    %v2874 = vsel %vm2872, %v2856, 0
    %2876 = vmatprep.subr.mxu0 0.0
    %2877 = vmatpush1.msra.mxu0 %v2857
    %2878 = vmatprep.subr.mxu0 0.0
    %2879 = vmatpush1.msra.mxu0 %v2858
    %2880 = vmatprep.subr.mxu0 0.0
    %2881 = vmatpush1.msra.mxu0 %v2859
    %2882 = vmatprep.subr.mxu0 0.0
    %2883 = vmatpush1.msra.mxu0 %v2860
    %2884 = vmatprep.subr.mxu0 0.0
    %2885 = vmatpush1.msra.mxu0 %v2861
    %2886 = vmatprep.subr.mxu0 0.0
    %2887 = vmatpush1.msra.mxu0 %v2862
    %2888 = vmatprep.subr.mxu0 0.0
    %2889 = vmatpush1.msra.mxu0 %v2863
    %2890 = vmatprep.subr.mxu0 0.0
    %2891 = vmatpush1.msra.mxu0 %v2864
    %2892 = vmatprep.subr.mxu0 0.0
    %2893 = vmatpush1.msra.mxu0 0.0
    %2894 = vmatprep.subr.mxu0 0.0
    %2895 = vmatpush1.msra.mxu0 0.0
    %2896 = vmatprep.subr.mxu0 0.0
    %2897 = vmatpush1.msra.mxu0 0.0
    %2898 = vmatprep.subr.mxu0 0.0
    %2899 = vmatpush1.msra.mxu0 0.0
    %2900 = vmatprep.subr.mxu0 0.0
    %2901 = vmatpush1.msra.mxu0 0.0
    %2902 = vmatprep.subr.mxu0 0.0
    %2903 = vmatpush1.msra.mxu0 0.0
    %2904 = vmatprep.subr.mxu0 0.0
    %2905 = vmatpush1.msra.mxu0 0.0
    %2906 = vmatprep.subr.mxu0 0.0
    %2907 = vmatpush1.msra.mxu0 0.0
    %2908 = vmatprep.subr.mxu0 0.0
    %2909 = vmatpush1.msra.mxu0 0.0
    %2910 = vmatprep.subr.mxu0 0.0
    %2911 = vmatpush1.msra.mxu0 0.0
    %2912 = vmatprep.subr.mxu0 0.0
    %2913 = vmatpush1.msra.mxu0 0.0
    %2914 = vmatprep.subr.mxu0 0.0
    %2915 = vmatpush1.msra.mxu0 0.0
    %2916 = vmatprep.subr.mxu0 0.0
    %2917 = vmatpush1.msra.mxu0 0.0
    %2918 = vmatprep.subr.mxu0 0.0
    %2919 = vmatpush1.msra.mxu0 0.0
    %2920 = vmatprep.subr.mxu0 0.0
    %2921 = vmatpush1.msra.mxu0 0.0
    %2922 = vmatprep.subr.mxu0 0.0
    %2923 = vmatpush1.msra.mxu0 0.0
    %2924 = vmatprep.subr.mxu0 0.0
    %2925 = vmatpush1.msra.mxu0 0.0
    %2926 = vmatprep.subr.mxu0 0.0
    %2927 = vmatpush1.msra.mxu0 0.0
    %2928 = vmatprep.subr.mxu0 0.0
    %2929 = vmatpush1.msra.mxu0 0.0
    %2930 = vmatprep.subr.mxu0 0.0
    %2931 = vmatpush1.msra.mxu0 0.0
    %2932 = vmatprep.subr.mxu0 0.0
    %2933 = vmatpush1.msra.mxu0 0.0
    %2934 = vmatprep.subr.mxu0 0.0
    %2935 = vmatpush1.msra.mxu0 0.0
    %2936 = vmatprep.subr.mxu0 0.0
    %2937 = vmatpush1.msra.mxu0 0.0
    %2938 = vmatprep.subr.mxu0 0.0
    %2939 = vmatpush1.msra.mxu0 0.0
    %2940 = vmatprep.mubr.f32.mxu0 0.0
    %2941 = vmatmul.mubr.f32.gmra.mrb[0].mxu0 %v2874
    %v2942 = vpop.f32.mrb[0].mxu0
    %v2943 = vadd.f32 %v2870, %v2942
    %v2944 = vpop.f32.mrb[0].mxu0
    %2945 = vdwg.mxu0
    %v2946 = vtanh.pop %v2943
    %vm2947 = vcmask 254976
    %2948 = vst.msk [vmem:[#allocation4] sm:$0x3] %vm2947, %v2946
    // Predicated region
    $region34: #{encoder_forward.1} parent=1 // pred_check
      _
    $region35: #{encoder_forward.1} parent=1 // pred_check_branch
      %2950 = sbr.rel (0) target = $region37
    $region36: #{encoder_forward.1} parent=1 // pred_region
      %s2952 = ssub.s32 256, 256
      %2953 = vsyncadd [#allocation3], %s2952
      %s2954 = sshll.u32 [#allocation2], 4
      %s2955 = int_to_ptr.vmem [resolvable:$true] %s2954
      %2960 = dma.vmem_to_hbm [thread:$0]  %s2955, 256, %s8, [#allocation3], 32, 32, 2
    $region37: #{encoder_forward.1} parent=1 // pred_fallthru
      _
    // Predicated region
    $region38: #{encoder_forward.1} parent=1 // pred_check
      _
    $region39: #{encoder_forward.1} parent=1 // pred_check_branch
      %2962 = sbr.rel (0) target = $region41
    $region40: #{encoder_forward.1} parent=1 // pred_region
      %s2964 = ssub.s32 32, 32
      %2965 = vsyncadd [#allocation5], %s2964
      %s2967 = sshll.u32 [#allocation4], 4
      %s2968 = int_to_ptr.vmem [resolvable:$true] %s2967
      %2970 = dma.vmem_to_hbm [thread:$0]  %s2968, 32, %s9, [#allocation5]
    $region41: #{encoder_forward.1} parent=1 // pred_fallthru
      _
    // Predicated region
    $region42: #{encoder_forward.1} parent=1 // pred_check
      _
    $region43: #{encoder_forward.1} parent=1 // pred_check_branch
      %2972 = sbr.rel (0) target = $region45
    $region44: #{encoder_forward.1} parent=1 // pred_region
      %2973 = dma.done [#allocation3], 256
    $region45: #{encoder_forward.1} parent=1 // pred_fallthru
      _
    // Predicated region
    $region46: #{encoder_forward.1} parent=1 // pred_check
      _
    $region47: #{encoder_forward.1} parent=1 // pred_check_branch
      %2975 = sbr.rel (0) target = $region49
    $region48: #{encoder_forward.1} parent=1 // pred_region
      %2976 = dma.done [#allocation5], 32
    $region49: #{encoder_forward.1} parent=1 // pred_fallthru
      _
    %2977 = vsyncpa [#allocation3], 1
    %2978 = vsyncpa [#allocation5], 1

</llo_original>
